<compile_context>
chip_gen: v7x
topology: tpu7x:2x2x1
jax: 0.10.0
libtpu: 0.0.40
codegen_flags: <defaults>
</compile_context>

<pallas_src>
import functools

import jax
import jax.numpy as jnp
from jax import lax
from jax.experimental import pallas as pl
from jax.experimental.pallas import tpu as pltpu

_WIDTH = 1024            # lane-dense slab width (multiple of 128)
_MAX_BLOCK_ROWS = 512    # 512 x 1024 f32 = 2 MiB per block (safe on v5e/v6e/v7x)
_MIN_BLOCK_ROWS = 32     # covers native sublane tiling down to int8/fp8


def _round_up(n, m):
    return ((n + m - 1) // m) * m


def _mix32(v):
    # lowbias32-style avalanche mixer on uint32 (pure VPU bit ops).
    v = v ^ (v >> 16)
    v = v * jnp.uint32(0x7FEB352D)
    v = v ^ (v >> 15)
    v = v * jnp.uint32(0x846CA68B)
    v = v ^ (v >> 16)
    return v


def _uniform_from_bits(bits):
    # Mantissa trick: [1, 2) bit pattern -> subtract 1 -> [0, 1).
    m = (bits >> 9) | jnp.uint32(0x3F800000)
    return lax.bitcast_convert_type(m, jnp.float32) - jnp.float32(1.0)


def _gaussian_noise_kernel(seed_ref, x_ref, o_ref, *, mean, std, block_rows, width):
    half = width // 2
    pid = pl.program_id(0).astype(jnp.uint32)
    seed = seed_ref[0].astype(jnp.uint32)

    # Unique counter per (z1, z2) pair over the half-width domain of this tile.
    row = lax.broadcasted_iota(jnp.uint32, (block_rows, half), 0)
    col = lax.broadcasted_iota(jnp.uint32, (block_rows, half), 1)
    base = pid * jnp.uint32(block_rows * half)
    ctr = base + row * jnp.uint32(half) + col

    # Two decorrelated 32-bit streams from (counter, seed).
    s = ctr * jnp.uint32(0x9E3779B9) + seed
    bits1 = _mix32(s ^ jnp.uint32(0x85EBCA6B))
    bits2 = _mix32(s ^ jnp.uint32(0xC2B2AE35))

    u1 = jnp.float32(1.0) - _uniform_from_bits(bits1)   # (0, 1]  -> log-safe
    u2 = _uniform_from_bits(bits2)                       # [0, 1)

    # Box-Muller, using BOTH outputs (cos branch -> left half, sin branch -> right).
    r = jnp.sqrt(jnp.float32(-2.0) * jnp.log(u1))
    theta = jnp.float32(2.0 * 3.14159265358979) * u2
    z1 = r * jnp.cos(theta)
    z2 = r * jnp.sin(theta)

    xf = x_ref[...].astype(jnp.float32)
    mean_f = jnp.float32(mean)
    std_f = jnp.float32(std)
    o_ref[:, :half] = (xf[:, :half] + mean_f + std_f * z1).astype(o_ref.dtype)
    o_ref[:, half:] = (xf[:, half:] + mean_f + std_f * z2).astype(o_ref.dtype)


def gaussian_noise_variant(x, seed, *, std, mean=0.0, training=True):
    """JAX/Pallas equivalent of GaussianNoiseVariant.forward."""
    if not training:
        return x  # eval path: identity, matches the PyTorch module

    orig_shape = x.shape
    orig_dtype = x.dtype
    total = x.size

    width = _WIDTH
    rows = -(-total // width)
    block_rows = min(_MAX_BLOCK_ROWS, _round_up(rows, _MIN_BLOCK_ROWS))
    padded_rows = _round_up(rows, block_rows)
    padded_total = padded_rows * width
    pad = padded_total - total

    xf = jnp.ravel(x)
    if pad:
        xf = jnp.concatenate([xf, jnp.zeros((pad,), dtype=orig_dtype)])
    x2 = xf.reshape(padded_rows, width)

    seed_arr = jnp.asarray([seed], dtype=jnp.int32)
    grid = (padded_rows // block_rows,)

    itemsize = jnp.dtype(orig_dtype).itemsize
    cost = pl.CostEstimate(
        flops=30 * padded_total,
        transcendentals=2 * padded_total,
        bytes_accessed=2 * itemsize * padded_total,
    )

    out2 = pl.pallas_call(
        functools.partial(
            _gaussian_noise_kernel,
            mean=float(mean),
            std=float(std),
            block_rows=block_rows,
            width=width,
        ),
        out_shape=jax.ShapeDtypeStruct((padded_rows, width), orig_dtype),
        grid_spec=pltpu.PrefetchScalarGridSpec(
            num_scalar_prefetch=1,
            grid=grid,
            in_specs=[pl.BlockSpec((block_rows, width), lambda i, seed: (i, 0))],
            out_specs=pl.BlockSpec((block_rows, width), lambda i, seed: (i, 0)),
        ),
        compiler_params=pltpu.CompilerParams(
            dimension_semantics=("parallel",)),
        cost_estimate=cost,
    )(seed_arr, x2)

    if pad:
        return out2.reshape(-1)[:total].reshape(orig_shape)
    return out2.reshape(orig_shape)


if __name__ == "__main__":
    key = jax.random.PRNGKey(0)
    # Small NCHW input consistent with the module's expected usage.
    x = jax.random.normal(key, (2, 4, 16, 16), dtype=jnp.float32)

    std = 0.1
    mean = 0.0

    # Training mode: x + Gaussian noise.
    y_train = gaussian_noise_variant(x, seed=1234, std=std, mean=mean,
                                     training=True)
    y_train = jax.block_until_ready(y_train)

    # Eval mode: identity.
    y_eval = gaussian_noise_variant(x, seed=1234, std=std, mean=mean,
                                    training=False)
    y_eval = jax.block_until_ready(y_eval)

    assert y_train.shape == x.shape and y_train.dtype == x.dtype
    assert jnp.array_equal(y_eval, x)

    # Sanity-check the noise statistics (mean ~ 0, std ~ 0.1).
    noise = y_train - x
    nm = float(jnp.mean(noise))
    ns = float(jnp.std(noise))
    assert abs(nm - mean) < 0.02, f"noise mean off: {nm}"
    assert abs(ns - std) < 0.02, f"noise std off: {ns}"

    print("KERNEL_OK")
</pallas_src>

<mosaic_0001>
module attributes {stable_mosaic.version = 11 : i64} {
  func.func @_gaussian_noise_kernel(%arg0: i32, %arg1: memref<1xi32, #tpu.memory_space<smem>>, %arg2: memref<32x1024xf32, #tpu.memory_space<vmem>>, %arg3: memref<32x1024xf32, #tpu.memory_space<vmem>>) attributes {dimension_semantics = [#tpu.dimension_semantics<parallel>], iteration_bounds = array<i64: 1>, scalar_prefetch = 1 : i64, scratch_operands = 0 : i64, tpu.core_type = #tpu.core_type<tc>, window_params = [{transform_indices = @transform_0, window_bounds = array<i64: 32, 1024>}, {transform_indices = @transform_1, window_bounds = array<i64: 32, 1024>}]} {
    %c0 = arith.constant 0 : index
    %0 = memref.load %arg1[%c0] : memref<1xi32, #tpu.memory_space<smem>>
    %1 = tpu.iota {dimensions = array<i32: 0>} : vector<32x512xi32>
    %2 = tpu.iota {dimensions = array<i32: 1>} : vector<32x512xi32>
    %c16384_i32 = arith.constant 16384 : i32
    %3 = arith.muli %arg0, %c16384_i32 : i32
    %c512_i32 = arith.constant 512 : i32
    %4 = vector.broadcast %c512_i32 : i32 to vector<32x512xi32>
    %5 = arith.muli %1, %4 : vector<32x512xi32>
    %6 = vector.broadcast %3 : i32 to vector<32x512xi32>
    %7 = arith.addi %6, %5 : vector<32x512xi32>
    %8 = arith.addi %7, %2 : vector<32x512xi32>
    %c-1640531527_i32 = arith.constant -1640531527 : i32
    %9 = vector.broadcast %c-1640531527_i32 : i32 to vector<32x512xi32>
    %10 = arith.muli %8, %9 : vector<32x512xi32>
    %11 = vector.broadcast %0 : i32 to vector<32x512xi32>
    %12 = arith.addi %10, %11 : vector<32x512xi32>
    %c-2048144789_i32 = arith.constant -2048144789 : i32
    %13 = vector.broadcast %c-2048144789_i32 : i32 to vector<32x512xi32>
    %14 = arith.xori %12, %13 : vector<32x512xi32>
    %c16_i32 = arith.constant 16 : i32
    %15 = vector.broadcast %c16_i32 : i32 to vector<32x512xi32>
    %16 = arith.shrui %14, %15 : vector<32x512xi32>
    %17 = arith.xori %14, %16 : vector<32x512xi32>
    %c2146121005_i32 = arith.constant 2146121005 : i32
    %18 = vector.broadcast %c2146121005_i32 : i32 to vector<32x512xi32>
    %19 = arith.muli %17, %18 : vector<32x512xi32>
    %c15_i32 = arith.constant 15 : i32
    %20 = vector.broadcast %c15_i32 : i32 to vector<32x512xi32>
    %21 = arith.shrui %19, %20 : vector<32x512xi32>
    %22 = arith.xori %19, %21 : vector<32x512xi32>
    %c-2073254261_i32 = arith.constant -2073254261 : i32
    %23 = vector.broadcast %c-2073254261_i32 : i32 to vector<32x512xi32>
    %24 = arith.muli %22, %23 : vector<32x512xi32>
    %c16_i32_0 = arith.constant 16 : i32
    %25 = vector.broadcast %c16_i32_0 : i32 to vector<32x512xi32>
    %26 = arith.shrui %24, %25 : vector<32x512xi32>
    %27 = arith.xori %24, %26 : vector<32x512xi32>
    %c-1028477387_i32 = arith.constant -1028477387 : i32
    %28 = vector.broadcast %c-1028477387_i32 : i32 to vector<32x512xi32>
    %29 = arith.xori %12, %28 : vector<32x512xi32>
    %c16_i32_1 = arith.constant 16 : i32
    %30 = vector.broadcast %c16_i32_1 : i32 to vector<32x512xi32>
    %31 = arith.shrui %29, %30 : vector<32x512xi32>
    %32 = arith.xori %29, %31 : vector<32x512xi32>
    %c2146121005_i32_2 = arith.constant 2146121005 : i32
    %33 = vector.broadcast %c2146121005_i32_2 : i32 to vector<32x512xi32>
    %34 = arith.muli %32, %33 : vector<32x512xi32>
    %c15_i32_3 = arith.constant 15 : i32
    %35 = vector.broadcast %c15_i32_3 : i32 to vector<32x512xi32>
    %36 = arith.shrui %34, %35 : vector<32x512xi32>
    %37 = arith.xori %34, %36 : vector<32x512xi32>
    %c-2073254261_i32_4 = arith.constant -2073254261 : i32
    %38 = vector.broadcast %c-2073254261_i32_4 : i32 to vector<32x512xi32>
    %39 = arith.muli %37, %38 : vector<32x512xi32>
    %c16_i32_5 = arith.constant 16 : i32
    %40 = vector.broadcast %c16_i32_5 : i32 to vector<32x512xi32>
    %41 = arith.shrui %39, %40 : vector<32x512xi32>
    %42 = arith.xori %39, %41 : vector<32x512xi32>
    %c9_i32 = arith.constant 9 : i32
    %43 = vector.broadcast %c9_i32 : i32 to vector<32x512xi32>
    %44 = arith.shrui %27, %43 : vector<32x512xi32>
    %c1065353216_i32 = arith.constant 1065353216 : i32
    %45 = vector.broadcast %c1065353216_i32 : i32 to vector<32x512xi32>
    %46 = arith.ori %44, %45 : vector<32x512xi32>
    %47 = tpu.bitcast %46 : vector<32x512xi32> -> vector<32x512xf32>
    %cst = arith.constant 1.000000e+00 : f32
    %48 = vector.broadcast %cst : f32 to vector<32x512xf32>
    %49 = arith.subf %47, %48 : vector<32x512xf32>
    %cst_6 = arith.constant 1.000000e+00 : f32
    %50 = vector.broadcast %cst_6 : f32 to vector<32x512xf32>
    %51 = arith.subf %50, %49 : vector<32x512xf32>
    %c9_i32_7 = arith.constant 9 : i32
    %52 = vector.broadcast %c9_i32_7 : i32 to vector<32x512xi32>
    %53 = arith.shrui %42, %52 : vector<32x512xi32>
    %c1065353216_i32_8 = arith.constant 1065353216 : i32
    %54 = vector.broadcast %c1065353216_i32_8 : i32 to vector<32x512xi32>
    %55 = arith.ori %53, %54 : vector<32x512xi32>
    %56 = tpu.bitcast %55 : vector<32x512xi32> -> vector<32x512xf32>
    %cst_9 = arith.constant 1.000000e+00 : f32
    %57 = vector.broadcast %cst_9 : f32 to vector<32x512xf32>
    %58 = arith.subf %56, %57 : vector<32x512xf32>
    %59 = math.log %51 : vector<32x512xf32>
    %cst_10 = arith.constant -2.000000e+00 : f32
    %60 = vector.broadcast %cst_10 : f32 to vector<32x512xf32>
    %61 = arith.mulf %60, %59 : vector<32x512xf32>
    %62 = math.sqrt %61 : vector<32x512xf32>
    %cst_11 = arith.constant 6.28318548 : f32
    %63 = vector.broadcast %cst_11 : f32 to vector<32x512xf32>
    %64 = arith.mulf %63, %58 : vector<32x512xf32>
    %65 = math.cos %64 : vector<32x512xf32>
    %66 = arith.mulf %62, %65 : vector<32x512xf32>
    %67 = math.sin %64 : vector<32x512xf32>
    %68 = arith.mulf %62, %67 : vector<32x512xf32>
    %c0_12 = arith.constant 0 : index
    %c0_13 = arith.constant 0 : index
    %69 = vector.load %arg2[%c0_12, %c0_13] : memref<32x1024xf32, #tpu.memory_space<vmem>>, vector<32x1024xf32>
    %70 = vector.extract_strided_slice %69 {offsets = [0, 0], sizes = [32, 512], strides = [1, 1]} : vector<32x1024xf32> to vector<32x512xf32>
    %cst_14 = arith.constant 0.000000e+00 : f32
    %71 = vector.broadcast %cst_14 : f32 to vector<32x512xf32>
    %72 = arith.addf %70, %71 : vector<32x512xf32>
    %cst_15 = arith.constant 1.000000e-01 : f32
    %73 = vector.broadcast %cst_15 : f32 to vector<32x512xf32>
    %74 = arith.mulf %73, %66 : vector<32x512xf32>
    %75 = arith.addf %72, %74 : vector<32x512xf32>
    %c0_16 = arith.constant 0 : index
    %c0_17 = arith.constant 0 : index
    %76 = vector.load %arg3[%c0_16, %c0_17] : memref<32x1024xf32, #tpu.memory_space<vmem>>, vector<32x512xf32>
    tpu.vector_store %arg3[%c0_16, %c0_17], %75 {strides = array<i32>} : memref<32x1024xf32, #tpu.memory_space<vmem>>, vector<32x512xf32>,
    %77 = vector.extract_strided_slice %69 {offsets = [0, 512], sizes = [32, 512], strides = [1, 1]} : vector<32x1024xf32> to vector<32x512xf32>
    %cst_18 = arith.constant 0.000000e+00 : f32
    %78 = vector.broadcast %cst_18 : f32 to vector<32x512xf32>
    %79 = arith.addf %77, %78 : vector<32x512xf32>
    %cst_19 = arith.constant 1.000000e-01 : f32
    %80 = vector.broadcast %cst_19 : f32 to vector<32x512xf32>
    %81 = arith.mulf %80, %68 : vector<32x512xf32>
    %82 = arith.addf %79, %81 : vector<32x512xf32>
    %c0_20 = arith.constant 0 : index
    %c512 = arith.constant 512 : index
    %83 = vector.load %arg3[%c0_20, %c512] : memref<32x1024xf32, #tpu.memory_space<vmem>>, vector<32x512xf32>
    tpu.vector_store %arg3[%c0_20, %c512], %82 {strides = array<i32>} : memref<32x1024xf32, #tpu.memory_space<vmem>>, vector<32x512xf32>,
    return
  }
  func.func @transform_0(%arg0: i32, %arg1: memref<1xi32, #tpu.memory_space<smem>>) -> (i32, i32) {
    %c0_i32 = arith.constant 0 : i32
    %c0_i32_0 = arith.constant 0 : i32
    return %arg0, %c0_i32 : i32, i32
  }
  func.func @transform_1(%arg0: i32, %arg1: memref<1xi32, #tpu.memory_space<smem>>) -> (i32, i32) {
    %c0_i32 = arith.constant 0 : i32
    %c0_i32_0 = arith.constant 0 : i32
    return %arg0, %c0_i32 : i32, i32
  }
}

</mosaic_0001>

<llo_original>
// kernel: tpu_custom_call.1
$region0: #{tpu_custom_call.1}
  #allocation0 [shape = 'u32[]', space=smem, size = 0x4, offset = 0x4, fixed_abs, tag = 'smem constant byte address 0x4 - core index']
  #allocation1 [shape = 'u32[144,128]{1,0:T(1,128)}', space=vmem, size = 0x12000, scoped, tag = 'internal scratch']
  #allocation2 [shape = 's32[1]{0}', space=sflag, size = 0x4, scoped, tag = 'scoped memory for tpu_custom_call.1']
  #allocation3 [shape = 's32[1]{0:T(128)S(6)}', space=smem, size = 0x200, scoped, tag = 'prefetched SMEM operand 0']
  %s0 = inlined_call_operand.<no memory space> [shape: s32[1], index: 0, kind: input, shape index: {}]
  %s1 = inlined_call_operand.hbm [shape: f32[32,1024], index: 1, kind: input, shape index: {}]
  %s2 = inlined_call_operand.hbm [shape: f32[32,1024], index: 2, kind: output, shape index: {}]
  %s3 = sld [smem:[#allocation0]]
  $region18: #{tpu_custom_call.1} parent=0
    _
  %s5 = ssub.s32 1, %s3
  %s6 = scalar_select 0, %s5, %s3
  %7 = sst [smem:[#allocation3]] %s0
  $region1: #{tpu_custom_call.1} parent=0
    #allocation4 [shape = 'u8[131072]{0}', space=vmem, size = 0x20000, scoped, tag = 'input window, operand 1, single buffered']
    #allocation5 [shape = 's32[1]{0}', space=sflag, size = 0x4, scoped, tag = 'scoped memory for tpu_custom_call.1']
    #allocation6 [shape = 's32[1]{0}', space=sflag, size = 0x4, scoped, tag = 'scoped memory for tpu_custom_call.1']
    #allocation7 [shape = 'u8[131072]{0}', space=vmem, size = 0x20000, scoped, tag = 'output window, operand 0, single buffered']
    %8 = vsyncpa [#allocation5], 0
    %9 = vsyncpa [#allocation6], 0
    // Predicated region
    $region2: #{tpu_custom_call.1} parent=1 // pred_check
      _
    $region3: #{tpu_custom_call.1} parent=1 // pred_check_branch
      %11 = sbr.rel (0) target = $region5
    $region4: #{tpu_custom_call.1} parent=1 // pred_region
      %s13 = ssub.s32 4096, 4096
      %14 = vsyncadd [#allocation5], %s13
      %s15 = sshll.u32 [#allocation4], 4
      %s16 = int_to_ptr.vmem [resolvable:$true] %s15
      %21 = dma.hbm_to_vmem [thread:$0]  %s1, 4096, %s16, [#allocation5], 1024, 1024, 64
    $region5: #{tpu_custom_call.1} parent=1 // pred_fallthru
      _
    // Predicated region
    $region6: #{tpu_custom_call.1} parent=1 // pred_check
      _
    $region7: #{tpu_custom_call.1} parent=1 // pred_check_branch
      %23 = sbr.rel (0) target = $region9
    $region8: #{tpu_custom_call.1} parent=1 // pred_region
      %24 = dma.done [#allocation5], 4096
    $region9: #{tpu_custom_call.1} parent=1 // pred_fallthru
      _
    %s25 = sld [smem:[#allocation3]]
    %v26 = vlaneseq
    %v27 = vshrl.u32 %v26, 7
    %v28 = vadd.s32 %v27, 8
    %v29 = vadd.s32 %v27, 16
    %v30 = vadd.s32 %v27, 24
    %v31 = vlaneseq
    %v32 = vand.u32 %v31, 127
    %v33 = vadd.s32 %v32, 128
    %v34 = vadd.s32 %v32, 256
    %v35 = vadd.s32 %v32, 384
    %s36 = smul.u32 0, 16384
    %v37 = vmul.u32 %v27, 512
    %v38 = vmul.u32 %v28, 512
    %v39 = vmul.u32 %v29, 512
    %v40 = vmul.u32 %v30, 512
    %v41 = vstv %s36
    %v42 = vadd.s32 %v41, %v37
    %v43 = vadd.s32 %v41, %v38
    %v44 = vadd.s32 %v41, %v39
    %v45 = vadd.s32 %v41, %v40
    %v46 = vadd.s32 %v42, %v32
    %v47 = vadd.s32 %v42, %v33
    %v48 = vadd.s32 %v42, %v34
    %v49 = vadd.s32 %v42, %v35
    %v50 = vadd.s32 %v43, %v32
    %v51 = vadd.s32 %v43, %v33
    %v52 = vadd.s32 %v43, %v34
    %v53 = vadd.s32 %v43, %v35
    %v54 = vadd.s32 %v44, %v32
    %v55 = vadd.s32 %v44, %v33
    %v56 = vadd.s32 %v44, %v34
    %v57 = vadd.s32 %v44, %v35
    %v58 = vadd.s32 %v45, %v32
    %v59 = vadd.s32 %v45, %v33
    %v60 = vadd.s32 %v45, %v34
    %v61 = vadd.s32 %v45, %v35
    %v62 = vmul.u32 %v46, 2654435769
    %v63 = vmul.u32 %v47, 2654435769
    %v64 = vmul.u32 %v48, 2654435769
    %v65 = vmul.u32 %v49, 2654435769
    %v66 = vmul.u32 %v50, 2654435769
    %v67 = vmul.u32 %v51, 2654435769
    %v68 = vmul.u32 %v52, 2654435769
    %v69 = vmul.u32 %v53, 2654435769
    %v70 = vmul.u32 %v54, 2654435769
    %v71 = vmul.u32 %v55, 2654435769
    %v72 = vmul.u32 %v56, 2654435769
    %v73 = vmul.u32 %v57, 2654435769
    %v74 = vmul.u32 %v58, 2654435769
    %v75 = vmul.u32 %v59, 2654435769
    %v76 = vmul.u32 %v60, 2654435769
    %v77 = vmul.u32 %v61, 2654435769
    %v78 = vstv %s25
    %v79 = vadd.s32 %v62, %v78
    %v80 = vadd.s32 %v63, %v78
    %v81 = vadd.s32 %v64, %v78
    %v82 = vadd.s32 %v65, %v78
    %v83 = vadd.s32 %v66, %v78
    %v84 = vadd.s32 %v67, %v78
    %v85 = vadd.s32 %v68, %v78
    %v86 = vadd.s32 %v69, %v78
    %v87 = vadd.s32 %v70, %v78
    %v88 = vadd.s32 %v71, %v78
    %v89 = vadd.s32 %v72, %v78
    %v90 = vadd.s32 %v73, %v78
    %v91 = vadd.s32 %v74, %v78
    %v92 = vadd.s32 %v75, %v78
    %v93 = vadd.s32 %v76, %v78
    %v94 = vadd.s32 %v77, %v78
    %v95 = vxor.u32 %v79, 2246822507
    %v96 = vxor.u32 %v80, 2246822507
    %v97 = vxor.u32 %v81, 2246822507
    %v98 = vxor.u32 %v82, 2246822507
    %v99 = vxor.u32 %v83, 2246822507
    %v100 = vxor.u32 %v84, 2246822507
    %v101 = vxor.u32 %v85, 2246822507
    %v102 = vxor.u32 %v86, 2246822507
    %v103 = vxor.u32 %v87, 2246822507
    %v104 = vxor.u32 %v88, 2246822507
    %v105 = vxor.u32 %v89, 2246822507
    %v106 = vxor.u32 %v90, 2246822507
    %v107 = vxor.u32 %v91, 2246822507
    %v108 = vxor.u32 %v92, 2246822507
    %v109 = vxor.u32 %v93, 2246822507
    %v110 = vxor.u32 %v94, 2246822507
    %v111 = vshrl.u32 %v95, 16
    %v112 = vshrl.u32 %v96, 16
    %v113 = vshrl.u32 %v97, 16
    %v114 = vshrl.u32 %v98, 16
    %v115 = vshrl.u32 %v99, 16
    %v116 = vshrl.u32 %v100, 16
    %v117 = vshrl.u32 %v101, 16
    %v118 = vshrl.u32 %v102, 16
    %v119 = vshrl.u32 %v103, 16
    %v120 = vshrl.u32 %v104, 16
    %v121 = vshrl.u32 %v105, 16
    %v122 = vshrl.u32 %v106, 16
    %v123 = vshrl.u32 %v107, 16
    %v124 = vshrl.u32 %v108, 16
    %v125 = vshrl.u32 %v109, 16
    %v126 = vshrl.u32 %v110, 16
    %v127 = vxor.u32 %v95, %v111
    %v128 = vxor.u32 %v96, %v112
    %v129 = vxor.u32 %v97, %v113
    %v130 = vxor.u32 %v98, %v114
    %v131 = vxor.u32 %v99, %v115
    %v132 = vxor.u32 %v100, %v116
    %v133 = vxor.u32 %v101, %v117
    %v134 = vxor.u32 %v102, %v118
    %v135 = vxor.u32 %v103, %v119
    %v136 = vxor.u32 %v104, %v120
    %v137 = vxor.u32 %v105, %v121
    %v138 = vxor.u32 %v106, %v122
    %v139 = vxor.u32 %v107, %v123
    %v140 = vxor.u32 %v108, %v124
    %v141 = vxor.u32 %v109, %v125
    %v142 = vxor.u32 %v110, %v126
    %v143 = vmul.u32 %v127, 2146121005
    %v144 = vmul.u32 %v128, 2146121005
    %v145 = vmul.u32 %v129, 2146121005
    %v146 = vmul.u32 %v130, 2146121005
    %v147 = vmul.u32 %v131, 2146121005
    %v148 = vmul.u32 %v132, 2146121005
    %v149 = vmul.u32 %v133, 2146121005
    %v150 = vmul.u32 %v134, 2146121005
    %v151 = vmul.u32 %v135, 2146121005
    %v152 = vmul.u32 %v136, 2146121005
    %v153 = vmul.u32 %v137, 2146121005
    %v154 = vmul.u32 %v138, 2146121005
    %v155 = vmul.u32 %v139, 2146121005
    %v156 = vmul.u32 %v140, 2146121005
    %v157 = vmul.u32 %v141, 2146121005
    %v158 = vmul.u32 %v142, 2146121005
    %v159 = vshrl.u32 %v143, 15
    %v160 = vshrl.u32 %v144, 15
    %v161 = vshrl.u32 %v145, 15
    %v162 = vshrl.u32 %v146, 15
    %v163 = vshrl.u32 %v147, 15
    %v164 = vshrl.u32 %v148, 15
    %v165 = vshrl.u32 %v149, 15
    %v166 = vshrl.u32 %v150, 15
    %v167 = vshrl.u32 %v151, 15
    %v168 = vshrl.u32 %v152, 15
    %v169 = vshrl.u32 %v153, 15
    %v170 = vshrl.u32 %v154, 15
    %v171 = vshrl.u32 %v155, 15
    %v172 = vshrl.u32 %v156, 15
    %v173 = vshrl.u32 %v157, 15
    %v174 = vshrl.u32 %v158, 15
    %v175 = vxor.u32 %v143, %v159
    %v176 = vxor.u32 %v144, %v160
    %v177 = vxor.u32 %v145, %v161
    %v178 = vxor.u32 %v146, %v162
    %v179 = vxor.u32 %v147, %v163
    %v180 = vxor.u32 %v148, %v164
    %v181 = vxor.u32 %v149, %v165
    %v182 = vxor.u32 %v150, %v166
    %v183 = vxor.u32 %v151, %v167
    %v184 = vxor.u32 %v152, %v168
    %v185 = vxor.u32 %v153, %v169
    %v186 = vxor.u32 %v154, %v170
    %v187 = vxor.u32 %v155, %v171
    %v188 = vxor.u32 %v156, %v172
    %v189 = vxor.u32 %v157, %v173
    %v190 = vxor.u32 %v158, %v174
    %v191 = vmul.u32 %v175, 2221713035
    %v192 = vmul.u32 %v176, 2221713035
    %v193 = vmul.u32 %v177, 2221713035
    %v194 = vmul.u32 %v178, 2221713035
    %v195 = vmul.u32 %v179, 2221713035
    %v196 = vmul.u32 %v180, 2221713035
    %v197 = vmul.u32 %v181, 2221713035
    %v198 = vmul.u32 %v182, 2221713035
    %v199 = vmul.u32 %v183, 2221713035
    %v200 = vmul.u32 %v184, 2221713035
    %v201 = vmul.u32 %v185, 2221713035
    %v202 = vmul.u32 %v186, 2221713035
    %v203 = vmul.u32 %v187, 2221713035
    %v204 = vmul.u32 %v188, 2221713035
    %v205 = vmul.u32 %v189, 2221713035
    %v206 = vmul.u32 %v190, 2221713035
    %v207 = vshrl.u32 %v191, 16
    %v208 = vshrl.u32 %v192, 16
    %v209 = vshrl.u32 %v193, 16
    %v210 = vshrl.u32 %v194, 16
    %v211 = vshrl.u32 %v195, 16
    %v212 = vshrl.u32 %v196, 16
    %v213 = vshrl.u32 %v197, 16
    %v214 = vshrl.u32 %v198, 16
    %v215 = vshrl.u32 %v199, 16
    %v216 = vshrl.u32 %v200, 16
    %v217 = vshrl.u32 %v201, 16
    %v218 = vshrl.u32 %v202, 16
    %v219 = vshrl.u32 %v203, 16
    %v220 = vshrl.u32 %v204, 16
    %v221 = vshrl.u32 %v205, 16
    %v222 = vshrl.u32 %v206, 16
    %v223 = vxor.u32 %v191, %v207
    %v224 = vxor.u32 %v192, %v208
    %v225 = vxor.u32 %v193, %v209
    %v226 = vxor.u32 %v194, %v210
    %v227 = vxor.u32 %v195, %v211
    %v228 = vxor.u32 %v196, %v212
    %v229 = vxor.u32 %v197, %v213
    %v230 = vxor.u32 %v198, %v214
    %v231 = vxor.u32 %v199, %v215
    %v232 = vxor.u32 %v200, %v216
    %v233 = vxor.u32 %v201, %v217
    %v234 = vxor.u32 %v202, %v218
    %v235 = vxor.u32 %v203, %v219
    %v236 = vxor.u32 %v204, %v220
    %v237 = vxor.u32 %v205, %v221
    %v238 = vxor.u32 %v206, %v222
    %v239 = vxor.u32 %v79, 3266489909
    %v240 = vxor.u32 %v80, 3266489909
    %v241 = vxor.u32 %v81, 3266489909
    %v242 = vxor.u32 %v82, 3266489909
    %v243 = vxor.u32 %v83, 3266489909
    %v244 = vxor.u32 %v84, 3266489909
    %v245 = vxor.u32 %v85, 3266489909
    %v246 = vxor.u32 %v86, 3266489909
    %v247 = vxor.u32 %v87, 3266489909
    %v248 = vxor.u32 %v88, 3266489909
    %v249 = vxor.u32 %v89, 3266489909
    %v250 = vxor.u32 %v90, 3266489909
    %v251 = vxor.u32 %v91, 3266489909
    %v252 = vxor.u32 %v92, 3266489909
    %v253 = vxor.u32 %v93, 3266489909
    %v254 = vxor.u32 %v94, 3266489909
    %v255 = vshrl.u32 %v239, 16
    %v256 = vshrl.u32 %v240, 16
    %v257 = vshrl.u32 %v241, 16
    %v258 = vshrl.u32 %v242, 16
    %v259 = vshrl.u32 %v243, 16
    %v260 = vshrl.u32 %v244, 16
    %v261 = vshrl.u32 %v245, 16
    %v262 = vshrl.u32 %v246, 16
    %v263 = vshrl.u32 %v247, 16
    %v264 = vshrl.u32 %v248, 16
    %v265 = vshrl.u32 %v249, 16
    %v266 = vshrl.u32 %v250, 16
    %v267 = vshrl.u32 %v251, 16
    %v268 = vshrl.u32 %v252, 16
    %v269 = vshrl.u32 %v253, 16
    %v270 = vshrl.u32 %v254, 16
    %v271 = vxor.u32 %v239, %v255
    %v272 = vxor.u32 %v240, %v256
    %v273 = vxor.u32 %v241, %v257
    %v274 = vxor.u32 %v242, %v258
    %v275 = vxor.u32 %v243, %v259
    %v276 = vxor.u32 %v244, %v260
    %v277 = vxor.u32 %v245, %v261
    %v278 = vxor.u32 %v246, %v262
    %v279 = vxor.u32 %v247, %v263
    %v280 = vxor.u32 %v248, %v264
    %v281 = vxor.u32 %v249, %v265
    %v282 = vxor.u32 %v250, %v266
    %v283 = vxor.u32 %v251, %v267
    %v284 = vxor.u32 %v252, %v268
    %v285 = vxor.u32 %v253, %v269
    %v286 = vxor.u32 %v254, %v270
    %v287 = vmul.u32 %v271, 2146121005
    %v288 = vmul.u32 %v272, 2146121005
    %v289 = vmul.u32 %v273, 2146121005
    %v290 = vmul.u32 %v274, 2146121005
    %v291 = vmul.u32 %v275, 2146121005
    %v292 = vmul.u32 %v276, 2146121005
    %v293 = vmul.u32 %v277, 2146121005
    %v294 = vmul.u32 %v278, 2146121005
    %v295 = vmul.u32 %v279, 2146121005
    %v296 = vmul.u32 %v280, 2146121005
    %v297 = vmul.u32 %v281, 2146121005
    %v298 = vmul.u32 %v282, 2146121005
    %v299 = vmul.u32 %v283, 2146121005
    %v300 = vmul.u32 %v284, 2146121005
    %v301 = vmul.u32 %v285, 2146121005
    %v302 = vmul.u32 %v286, 2146121005
    %v303 = vshrl.u32 %v287, 15
    %v304 = vshrl.u32 %v288, 15
    %v305 = vshrl.u32 %v289, 15
    %v306 = vshrl.u32 %v290, 15
    %v307 = vshrl.u32 %v291, 15
    %v308 = vshrl.u32 %v292, 15
    %v309 = vshrl.u32 %v293, 15
    %v310 = vshrl.u32 %v294, 15
    %v311 = vshrl.u32 %v295, 15
    %v312 = vshrl.u32 %v296, 15
    %v313 = vshrl.u32 %v297, 15
    %v314 = vshrl.u32 %v298, 15
    %v315 = vshrl.u32 %v299, 15
    %v316 = vshrl.u32 %v300, 15
    %v317 = vshrl.u32 %v301, 15
    %v318 = vshrl.u32 %v302, 15
    %v319 = vxor.u32 %v287, %v303
    %v320 = vxor.u32 %v288, %v304
    %v321 = vxor.u32 %v289, %v305
    %v322 = vxor.u32 %v290, %v306
    %v323 = vxor.u32 %v291, %v307
    %v324 = vxor.u32 %v292, %v308
    %v325 = vxor.u32 %v293, %v309
    %v326 = vxor.u32 %v294, %v310
    %v327 = vxor.u32 %v295, %v311
    %v328 = vxor.u32 %v296, %v312
    %v329 = vxor.u32 %v297, %v313
    %v330 = vxor.u32 %v298, %v314
    %v331 = vxor.u32 %v299, %v315
    %v332 = vxor.u32 %v300, %v316
    %v333 = vxor.u32 %v301, %v317
    %v334 = vxor.u32 %v302, %v318
    %v335 = vmul.u32 %v319, 2221713035
    %v336 = vmul.u32 %v320, 2221713035
    %v337 = vmul.u32 %v321, 2221713035
    %v338 = vmul.u32 %v322, 2221713035
    %v339 = vmul.u32 %v323, 2221713035
    %v340 = vmul.u32 %v324, 2221713035
    %v341 = vmul.u32 %v325, 2221713035
    %v342 = vmul.u32 %v326, 2221713035
    %v343 = vmul.u32 %v327, 2221713035
    %v344 = vmul.u32 %v328, 2221713035
    %v345 = vmul.u32 %v329, 2221713035
    %v346 = vmul.u32 %v330, 2221713035
    %v347 = vmul.u32 %v331, 2221713035
    %v348 = vmul.u32 %v332, 2221713035
    %v349 = vmul.u32 %v333, 2221713035
    %v350 = vmul.u32 %v334, 2221713035
    %v351 = vshrl.u32 %v335, 16
    %v352 = vshrl.u32 %v336, 16
    %v353 = vshrl.u32 %v337, 16
    %v354 = vshrl.u32 %v338, 16
    %v355 = vshrl.u32 %v339, 16
    %v356 = vshrl.u32 %v340, 16
    %v357 = vshrl.u32 %v341, 16
    %v358 = vshrl.u32 %v342, 16
    %v359 = vshrl.u32 %v343, 16
    %v360 = vshrl.u32 %v344, 16
    %v361 = vshrl.u32 %v345, 16
    %v362 = vshrl.u32 %v346, 16
    %v363 = vshrl.u32 %v347, 16
    %v364 = vshrl.u32 %v348, 16
    %v365 = vshrl.u32 %v349, 16
    %v366 = vshrl.u32 %v350, 16
    %v367 = vxor.u32 %v335, %v351
    %v368 = vxor.u32 %v336, %v352
    %v369 = vxor.u32 %v337, %v353
    %v370 = vxor.u32 %v338, %v354
    %v371 = vxor.u32 %v339, %v355
    %v372 = vxor.u32 %v340, %v356
    %v373 = vxor.u32 %v341, %v357
    %v374 = vxor.u32 %v342, %v358
    %v375 = vxor.u32 %v343, %v359
    %v376 = vxor.u32 %v344, %v360
    %v377 = vxor.u32 %v345, %v361
    %v378 = vxor.u32 %v346, %v362
    %v379 = vxor.u32 %v347, %v363
    %v380 = vxor.u32 %v348, %v364
    %v381 = vxor.u32 %v349, %v365
    %v382 = vxor.u32 %v350, %v366
    %v383 = vshrl.u32 %v223, 9
    %v384 = vshrl.u32 %v224, 9
    %v385 = vshrl.u32 %v225, 9
    %v386 = vshrl.u32 %v226, 9
    %v387 = vshrl.u32 %v227, 9
    %v388 = vshrl.u32 %v228, 9
    %v389 = vshrl.u32 %v229, 9
    %v390 = vshrl.u32 %v230, 9
    %v391 = vshrl.u32 %v231, 9
    %v392 = vshrl.u32 %v232, 9
    %v393 = vshrl.u32 %v233, 9
    %v394 = vshrl.u32 %v234, 9
    %v395 = vshrl.u32 %v235, 9
    %v396 = vshrl.u32 %v236, 9
    %v397 = vshrl.u32 %v237, 9
    %v398 = vshrl.u32 %v238, 9
    %v399 = vor.u32 %v383, 1065353216
    %v400 = vor.u32 %v384, 1065353216
    %v401 = vor.u32 %v385, 1065353216
    %v402 = vor.u32 %v386, 1065353216
    %v403 = vor.u32 %v387, 1065353216
    %v404 = vor.u32 %v388, 1065353216
    %v405 = vor.u32 %v389, 1065353216
    %v406 = vor.u32 %v390, 1065353216
    %v407 = vor.u32 %v391, 1065353216
    %v408 = vor.u32 %v392, 1065353216
    %v409 = vor.u32 %v393, 1065353216
    %v410 = vor.u32 %v394, 1065353216
    %v411 = vor.u32 %v395, 1065353216
    %v412 = vor.u32 %v396, 1065353216
    %v413 = vor.u32 %v397, 1065353216
    %v414 = vor.u32 %v398, 1065353216
    %v431 = vsub.f32 %v399, 1.0
    %v432 = vsub.f32 %v400, 1.0
    %v433 = vsub.f32 %v401, 1.0
    %v434 = vsub.f32 %v402, 1.0
    %v435 = vsub.f32 %v403, 1.0
    %v436 = vsub.f32 %v404, 1.0
    %v437 = vsub.f32 %v405, 1.0
    %v438 = vsub.f32 %v406, 1.0
    %v439 = vsub.f32 %v407, 1.0
    %v440 = vsub.f32 %v408, 1.0
    %v441 = vsub.f32 %v409, 1.0
    %v442 = vsub.f32 %v410, 1.0
    %v443 = vsub.f32 %v411, 1.0
    %v444 = vsub.f32 %v412, 1.0
    %v445 = vsub.f32 %v413, 1.0
    %v446 = vsub.f32 %v414, 1.0
    %v447 = vsub.f32 1.0, %v431
    %v448 = vsub.f32 1.0, %v432
    %v449 = vsub.f32 1.0, %v433
    %v450 = vsub.f32 1.0, %v434
    %v451 = vsub.f32 1.0, %v435
    %v452 = vsub.f32 1.0, %v436
    %v453 = vsub.f32 1.0, %v437
    %v454 = vsub.f32 1.0, %v438
    %v455 = vsub.f32 1.0, %v439
    %v456 = vsub.f32 1.0, %v440
    %v457 = vsub.f32 1.0, %v441
    %v458 = vsub.f32 1.0, %v442
    %v459 = vsub.f32 1.0, %v443
    %v460 = vsub.f32 1.0, %v444
    %v461 = vsub.f32 1.0, %v445
    %v462 = vsub.f32 1.0, %v446
    %v463 = vshrl.u32 %v367, 9
    %v464 = vshrl.u32 %v368, 9
    %v465 = vshrl.u32 %v369, 9
    %v466 = vshrl.u32 %v370, 9
    %v467 = vshrl.u32 %v371, 9
    %v468 = vshrl.u32 %v372, 9
    %v469 = vshrl.u32 %v373, 9
    %v470 = vshrl.u32 %v374, 9
    %v471 = vshrl.u32 %v375, 9
    %v472 = vshrl.u32 %v376, 9
    %v473 = vshrl.u32 %v377, 9
    %v474 = vshrl.u32 %v378, 9
    %v475 = vshrl.u32 %v379, 9
    %v476 = vshrl.u32 %v380, 9
    %v477 = vshrl.u32 %v381, 9
    %v478 = vshrl.u32 %v382, 9
    %v479 = vor.u32 %v463, 1065353216
    %v480 = vor.u32 %v464, 1065353216
    %v481 = vor.u32 %v465, 1065353216
    %v482 = vor.u32 %v466, 1065353216
    %v483 = vor.u32 %v467, 1065353216
    %v484 = vor.u32 %v468, 1065353216
    %v485 = vor.u32 %v469, 1065353216
    %v486 = vor.u32 %v470, 1065353216
    %v487 = vor.u32 %v471, 1065353216
    %v488 = vor.u32 %v472, 1065353216
    %v489 = vor.u32 %v473, 1065353216
    %v490 = vor.u32 %v474, 1065353216
    %v491 = vor.u32 %v475, 1065353216
    %v492 = vor.u32 %v476, 1065353216
    %v493 = vor.u32 %v477, 1065353216
    %v494 = vor.u32 %v478, 1065353216
    %v511 = vsub.f32 %v479, 1.0
    %v512 = vsub.f32 %v480, 1.0
    %v513 = vsub.f32 %v481, 1.0
    %v514 = vsub.f32 %v482, 1.0
    %v515 = vsub.f32 %v483, 1.0
    %v516 = vsub.f32 %v484, 1.0
    %v517 = vsub.f32 %v485, 1.0
    %v518 = vsub.f32 %v486, 1.0
    %v519 = vsub.f32 %v487, 1.0
    %v520 = vsub.f32 %v488, 1.0
    %v521 = vsub.f32 %v489, 1.0
    %v522 = vsub.f32 %v490, 1.0
    %v523 = vsub.f32 %v491, 1.0
    %v524 = vsub.f32 %v492, 1.0
    %v525 = vsub.f32 %v493, 1.0
    %v526 = vsub.f32 %v494, 1.0
    %v527 = vlog2.pop %v447
    %v528 = vmul.f32 %v527, 0.6931472
    %v529 = vlog2.pop %v448
    %v530 = vmul.f32 %v529, 0.6931472
    %v531 = vlog2.pop %v449
    %v532 = vmul.f32 %v531, 0.6931472
    %v533 = vlog2.pop %v450
    %v534 = vmul.f32 %v533, 0.6931472
    %v535 = vlog2.pop %v451
    %v536 = vmul.f32 %v535, 0.6931472
    %v537 = vlog2.pop %v452
    %v538 = vmul.f32 %v537, 0.6931472
    %v539 = vlog2.pop %v453
    %v540 = vmul.f32 %v539, 0.6931472
    %v541 = vlog2.pop %v454
    %v542 = vmul.f32 %v541, 0.6931472
    %v543 = vlog2.pop %v455
    %v544 = vmul.f32 %v543, 0.6931472
    %v545 = vlog2.pop %v456
    %v546 = vmul.f32 %v545, 0.6931472
    %v547 = vlog2.pop %v457
    %v548 = vmul.f32 %v547, 0.6931472
    %v549 = vlog2.pop %v458
    %v550 = vmul.f32 %v549, 0.6931472
    %v551 = vlog2.pop %v459
    %v552 = vmul.f32 %v551, 0.6931472
    %v553 = vlog2.pop %v460
    %v554 = vmul.f32 %v553, 0.6931472
    %v555 = vlog2.pop %v461
    %v556 = vmul.f32 %v555, 0.6931472
    %v557 = vlog2.pop %v462
    %v558 = vmul.f32 %v557, 0.6931472
    %v559 = vmul.f32 %v528, -2.0
    %v560 = vmul.f32 %v530, -2.0
    %v561 = vmul.f32 %v532, -2.0
    %v562 = vmul.f32 %v534, -2.0
    %v563 = vmul.f32 %v536, -2.0
    %v564 = vmul.f32 %v538, -2.0
    %v565 = vmul.f32 %v540, -2.0
    %v566 = vmul.f32 %v542, -2.0
    %v567 = vmul.f32 %v544, -2.0
    %v568 = vmul.f32 %v546, -2.0
    %v569 = vmul.f32 %v548, -2.0
    %v570 = vmul.f32 %v550, -2.0
    %v571 = vmul.f32 %v552, -2.0
    %v572 = vmul.f32 %v554, -2.0
    %v573 = vmul.f32 %v556, -2.0
    %v574 = vmul.f32 %v558, -2.0
    %v575 = vrsqrt.pop %v559
    %v576 = vmul.f32 %v559, %v575
    %vm577 = vcmp.eq.f32.partialorder %v559, inf
    %v578 = vsel %vm577, %v559, %v576
    %vm579 = vcmp.eq.f32.partialorder %v559, 0.0
    %v580 = vand.u32 %v559, 2147483648
    %v581 = vsel %vm579, %v580, %v578
    %v582 = vrsqrt.pop %v560
    %v583 = vmul.f32 %v560, %v582
    %vm584 = vcmp.eq.f32.partialorder %v560, inf
    %v585 = vsel %vm584, %v560, %v583
    %vm586 = vcmp.eq.f32.partialorder %v560, 0.0
    %v587 = vand.u32 %v560, 2147483648
    %v588 = vsel %vm586, %v587, %v585
    %v589 = vrsqrt.pop %v561
    %v590 = vmul.f32 %v561, %v589
    %vm591 = vcmp.eq.f32.partialorder %v561, inf
    %v592 = vsel %vm591, %v561, %v590
    %vm593 = vcmp.eq.f32.partialorder %v561, 0.0
    %v594 = vand.u32 %v561, 2147483648
    %v595 = vsel %vm593, %v594, %v592
    %v596 = vrsqrt.pop %v562
    %v597 = vmul.f32 %v562, %v596
    %vm598 = vcmp.eq.f32.partialorder %v562, inf
    %v599 = vsel %vm598, %v562, %v597
    %vm600 = vcmp.eq.f32.partialorder %v562, 0.0
    %v601 = vand.u32 %v562, 2147483648
    %v602 = vsel %vm600, %v601, %v599
    %v603 = vrsqrt.pop %v563
    %v604 = vmul.f32 %v563, %v603
    %vm605 = vcmp.eq.f32.partialorder %v563, inf
    %v606 = vsel %vm605, %v563, %v604
    %vm607 = vcmp.eq.f32.partialorder %v563, 0.0
    %v608 = vand.u32 %v563, 2147483648
    %v609 = vsel %vm607, %v608, %v606
    %v610 = vrsqrt.pop %v564
    %v611 = vmul.f32 %v564, %v610
    %vm612 = vcmp.eq.f32.partialorder %v564, inf
    %v613 = vsel %vm612, %v564, %v611
    %vm614 = vcmp.eq.f32.partialorder %v564, 0.0
    %v615 = vand.u32 %v564, 2147483648
    %v616 = vsel %vm614, %v615, %v613
    %v617 = vrsqrt.pop %v565
    %v618 = vmul.f32 %v565, %v617
    %vm619 = vcmp.eq.f32.partialorder %v565, inf
    %v620 = vsel %vm619, %v565, %v618
    %vm621 = vcmp.eq.f32.partialorder %v565, 0.0
    %v622 = vand.u32 %v565, 2147483648
    %v623 = vsel %vm621, %v622, %v620
    %v624 = vrsqrt.pop %v566
    %v625 = vmul.f32 %v566, %v624
    %vm626 = vcmp.eq.f32.partialorder %v566, inf
    %v627 = vsel %vm626, %v566, %v625
    %vm628 = vcmp.eq.f32.partialorder %v566, 0.0
    %v629 = vand.u32 %v566, 2147483648
    %v630 = vsel %vm628, %v629, %v627
    %v631 = vrsqrt.pop %v567
    %v632 = vmul.f32 %v567, %v631
    %vm633 = vcmp.eq.f32.partialorder %v567, inf
    %v634 = vsel %vm633, %v567, %v632
    %vm635 = vcmp.eq.f32.partialorder %v567, 0.0
    %v636 = vand.u32 %v567, 2147483648
    %v637 = vsel %vm635, %v636, %v634
    %v638 = vrsqrt.pop %v568
    %v639 = vmul.f32 %v568, %v638
    %vm640 = vcmp.eq.f32.partialorder %v568, inf
    %v641 = vsel %vm640, %v568, %v639
    %vm642 = vcmp.eq.f32.partialorder %v568, 0.0
    %v643 = vand.u32 %v568, 2147483648
    %v644 = vsel %vm642, %v643, %v641
    %v645 = vrsqrt.pop %v569
    %v646 = vmul.f32 %v569, %v645
    %vm647 = vcmp.eq.f32.partialorder %v569, inf
    %v648 = vsel %vm647, %v569, %v646
    %vm649 = vcmp.eq.f32.partialorder %v569, 0.0
    %v650 = vand.u32 %v569, 2147483648
    %v651 = vsel %vm649, %v650, %v648
    %v652 = vrsqrt.pop %v570
    %v653 = vmul.f32 %v570, %v652
    %vm654 = vcmp.eq.f32.partialorder %v570, inf
    %v655 = vsel %vm654, %v570, %v653
    %vm656 = vcmp.eq.f32.partialorder %v570, 0.0
    %v657 = vand.u32 %v570, 2147483648
    %v658 = vsel %vm656, %v657, %v655
    %v659 = vrsqrt.pop %v571
    %v660 = vmul.f32 %v571, %v659
    %vm661 = vcmp.eq.f32.partialorder %v571, inf
    %v662 = vsel %vm661, %v571, %v660
    %vm663 = vcmp.eq.f32.partialorder %v571, 0.0
    %v664 = vand.u32 %v571, 2147483648
    %v665 = vsel %vm663, %v664, %v662
    %v666 = vrsqrt.pop %v572
    %v667 = vmul.f32 %v572, %v666
    %vm668 = vcmp.eq.f32.partialorder %v572, inf
    %v669 = vsel %vm668, %v572, %v667
    %vm670 = vcmp.eq.f32.partialorder %v572, 0.0
    %v671 = vand.u32 %v572, 2147483648
    %v672 = vsel %vm670, %v671, %v669
    %v673 = vrsqrt.pop %v573
    %v674 = vmul.f32 %v573, %v673
    %vm675 = vcmp.eq.f32.partialorder %v573, inf
    %v676 = vsel %vm675, %v573, %v674
    %vm677 = vcmp.eq.f32.partialorder %v573, 0.0
    %v678 = vand.u32 %v573, 2147483648
    %v679 = vsel %vm677, %v678, %v676
    %v680 = vrsqrt.pop %v574
    %v681 = vmul.f32 %v574, %v680
    %vm682 = vcmp.eq.f32.partialorder %v574, inf
    %v683 = vsel %vm682, %v574, %v681
    %vm684 = vcmp.eq.f32.partialorder %v574, 0.0
    %v685 = vand.u32 %v574, 2147483648
    %v686 = vsel %vm684, %v685, %v683
    %v687 = vmul.f32 %v511, 6.2831855
    %v688 = vmul.f32 %v512, 6.2831855
    %v689 = vmul.f32 %v513, 6.2831855
    %v690 = vmul.f32 %v514, 6.2831855
    %v691 = vmul.f32 %v515, 6.2831855
    %v692 = vmul.f32 %v516, 6.2831855
    %v693 = vmul.f32 %v517, 6.2831855
    %v694 = vmul.f32 %v518, 6.2831855
    %v695 = vmul.f32 %v519, 6.2831855
    %v696 = vmul.f32 %v520, 6.2831855
    %v697 = vmul.f32 %v521, 6.2831855
    %v698 = vmul.f32 %v522, 6.2831855
    %v699 = vmul.f32 %v523, 6.2831855
    %v700 = vmul.f32 %v524, 6.2831855
    %v701 = vmul.f32 %v525, 6.2831855
    %v702 = vmul.f32 %v526, 6.2831855
    %v703 = vand.u32 2147483647, %v687
    %vm704 = vcmp.le.f32.partialorder %v703, 0.7853982
    %vm705 = vcmp.lt.s32.totalorder %v687, 0
    %v706 = vand.u32 %v687, 2139095040
    %v707 = vshrl.u32 %v706, 23
    %v708 = vsub.s32 %v707, 127
    %v709 = vand.u32 2147483647, %v687
    %v710 = vand.u32 %v709, 8388607
    %v711 = vor.u32 %v710, 8388608
    %v712 = vsub.s32 0, %v711
    %v713 = vadd.s32 %v708, 1
    %vm714 = vcmp.gt.s32.totalorder %v713, 0
    %v715 = vsel %vm714, %v713, 0
    %v716 = vshrl.u32 %v715, 5
    %v717 = vand.u32 %v715, 31
    %v718 = vsub.s32 32, %v717
    %v719 = vshrl.u32 683565275, %v718
    %v720 = vshll.u32 683565275, %v717
    %v721 = vshrl.u32 2475754826, %v718
    %v722 = vor.u32 %v720, %v721
    %v723 = vshll.u32 2475754826, %v717
    %v724 = vshrl.u32 2131351028, %v718
    %v725 = vor.u32 %v723, %v724
    %v726 = vshll.u32 2131351028, %v717
    %v727 = vshrl.u32 2102212464, %v718
    %v728 = vor.u32 %v726, %v727
    %v729 = vshll.u32 2102212464, %v717
    %v730 = vshrl.u32 920167782, %v718
    %v731 = vor.u32 %v729, %v730
    %v732 = vshll.u32 920167782, %v717
    %v733 = vshrl.u32 1326507024, %v718
    %v734 = vor.u32 %v732, %v733
    %vm735 = vcmp.lt.s32.totalorder %v716, 1
    %vm736 = vcmp.lt.s32.totalorder %v716, 2
    %vm737 = vcmp.lt.s32.totalorder %v716, 3
    %vm738 = vcmp.lt.s32.totalorder %v716, 4
    %v739 = vsel %vm735, %v719, %v722
    %v740 = vsel %vm738, %v728, 2102212464
    %v741 = vsel %vm737, %v725, %v740
    %v742 = vsel %vm736, %v739, %v741
    %v743 = vsel %vm735, %v722, %v725
    %v744 = vsel %vm738, %v731, 920167782
    %v745 = vsel %vm737, %v728, %v744
    %v746 = vsel %vm736, %v743, %v745
    %v747 = vsel %vm735, %v725, %v728
    %v748 = vsel %vm738, %v734, 1326507024
    %v749 = vsel %vm737, %v731, %v748
    %v750 = vsel %vm736, %v747, %v749
    %v751 = vshll.u32 %v711, 8
    %v752 = vmul.u32.u64.compose %v751, %v750
    %v753 = vextract.low.u32 %v752
    %v754 = vextract.high.u32 %v752
    %v755 = vmul.u32.u64.compose %v751, %v746
    %v756 = vextract.low.u32 %v755
    %v757 = vextract.high.u32 %v755
    %v758 = vmul.u32 %v751, %v742
    %v759 = vadd.s32 %v754, %v756
    %vm760 = vc.u32 %v754, %v756
    %v761 = vadd.s32 %v757, 1
    %v762 = vsel %vm760, %v761, %v757
    %v763 = vadd.s32 %v758, %v762
    %v764 = vadd.s32 %v763, 536870912
    %v765 = vshrl.u32 %v764, 30
    %v766 = vshll.u32 %v765, 30
    %v767 = vsub.s32 %v763, %v766
    %vm768 = vcmp.lt.s32.totalorder %v767, 0
    %v769 = vsub.s32 0, %v767
    %v770 = vsel %vm768, %v769, %v767
    %v771 = vclz %v770
    %v772 = vsub.s32 %v771, 2
    %vm773 = vcmp.gt.s32.totalorder 0, %v772
    %v774 = vsel %vm773, 0, %v772
    %v775 = vsub.s32 32, %v774
    %v776 = vshll.u32 %v767, %v774
    %v777 = vshrl.u32 %v759, %v775
    %v778 = vor.u32 %v776, %v777
    %v779 = vsub.s32 4294967266, %v774
    %v780 = vadd.s32 %v779, 127
    %v781 = vshll.u32 %v780, 23
    %v782 = vor.u32 4788187, %v781
    %v783 = vand.u32 2147483647, %v782
    %v785 = vcvt.s32.f32 %v778
    %v786 = vmul.f32 %v785, %v783
    %v787 = vxor.u32 %v786, 2147483648
    %v788 = vsel %vm705, %v787, %v786
    %v789 = vsub.s32 4, %v765
    %v790 = vsel %vm705, %v789, %v765
    %v791 = vsel %vm704, %v687, %v788
    %v792 = vsel %vm704, 0, %v790
    %v793 = vcosq.f32.pop %v791
    %v794 = vsinq.f32.pop %v791
    %vm795 = vweird.f32 %v687
    %v796 = vand.u32 %v792, 3
    %vm797 = vcmp.lt.s32.totalorder %v796, 2
    %vm798 = vcmp.eq.s32.totalorder %v796, 0
    %v799 = vxor.u32 %v794, 2147483648
    %v800 = vsel %vm798, %v793, %v799
    %vm801 = vcmp.eq.s32.totalorder %v796, 2
    %v802 = vxor.u32 %v793, 2147483648
    %v803 = vsel %vm801, %v802, %v794
    %v804 = vsel %vm797, %v800, %v803
    %v805 = vsel %vm795, nan, %v804
    %v806 = vand.u32 2147483647, %v688
    %vm807 = vcmp.le.f32.partialorder %v806, 0.7853982
    %vm808 = vcmp.lt.s32.totalorder %v688, 0
    %v809 = vand.u32 %v688, 2139095040
    %v810 = vshrl.u32 %v809, 23
    %v811 = vsub.s32 %v810, 127
    %v812 = vand.u32 2147483647, %v688
    %v813 = vand.u32 %v812, 8388607
    %v814 = vor.u32 %v813, 8388608
    %v815 = vsub.s32 0, %v814
    %v816 = vadd.s32 %v811, 1
    %vm817 = vcmp.gt.s32.totalorder %v816, 0
    %v818 = vsel %vm817, %v816, 0
    %v819 = vshrl.u32 %v818, 5
    %v820 = vand.u32 %v818, 31
    %v821 = vsub.s32 32, %v820
    %v822 = vshrl.u32 683565275, %v821
    %v823 = vshll.u32 683565275, %v820
    %v824 = vshrl.u32 2475754826, %v821
    %v825 = vor.u32 %v823, %v824
    %v826 = vshll.u32 2475754826, %v820
    %v827 = vshrl.u32 2131351028, %v821
    %v828 = vor.u32 %v826, %v827
    %v829 = vshll.u32 2131351028, %v820
    %v830 = vshrl.u32 2102212464, %v821
    %v831 = vor.u32 %v829, %v830
    %v832 = vshll.u32 2102212464, %v820
    %v833 = vshrl.u32 920167782, %v821
    %v834 = vor.u32 %v832, %v833
    %v835 = vshll.u32 920167782, %v820
    %v836 = vshrl.u32 1326507024, %v821
    %v837 = vor.u32 %v835, %v836
    %vm838 = vcmp.lt.s32.totalorder %v819, 1
    %vm839 = vcmp.lt.s32.totalorder %v819, 2
    %vm840 = vcmp.lt.s32.totalorder %v819, 3
    %vm841 = vcmp.lt.s32.totalorder %v819, 4
    %v842 = vsel %vm838, %v822, %v825
    %v843 = vsel %vm841, %v831, 2102212464
    %v844 = vsel %vm840, %v828, %v843
    %v845 = vsel %vm839, %v842, %v844
    %v846 = vsel %vm838, %v825, %v828
    %v847 = vsel %vm841, %v834, 920167782
    %v848 = vsel %vm840, %v831, %v847
    %v849 = vsel %vm839, %v846, %v848
    %v850 = vsel %vm838, %v828, %v831
    %v851 = vsel %vm841, %v837, 1326507024
    %v852 = vsel %vm840, %v834, %v851
    %v853 = vsel %vm839, %v850, %v852
    %v854 = vshll.u32 %v814, 8
    %v855 = vmul.u32.u64.compose %v854, %v853
    %v856 = vextract.low.u32 %v855
    %v857 = vextract.high.u32 %v855
    %v858 = vmul.u32.u64.compose %v854, %v849
    %v859 = vextract.low.u32 %v858
    %v860 = vextract.high.u32 %v858
    %v861 = vmul.u32 %v854, %v845
    %v862 = vadd.s32 %v857, %v859
    %vm863 = vc.u32 %v857, %v859
    %v864 = vadd.s32 %v860, 1
    %v865 = vsel %vm863, %v864, %v860
    %v866 = vadd.s32 %v861, %v865
    %v867 = vadd.s32 %v866, 536870912
    %v868 = vshrl.u32 %v867, 30
    %v869 = vshll.u32 %v868, 30
    %v870 = vsub.s32 %v866, %v869
    %vm871 = vcmp.lt.s32.totalorder %v870, 0
    %v872 = vsub.s32 0, %v870
    %v873 = vsel %vm871, %v872, %v870
    %v874 = vclz %v873
    %v875 = vsub.s32 %v874, 2
    %vm876 = vcmp.gt.s32.totalorder 0, %v875
    %v877 = vsel %vm876, 0, %v875
    %v878 = vsub.s32 32, %v877
    %v879 = vshll.u32 %v870, %v877
    %v880 = vshrl.u32 %v862, %v878
    %v881 = vor.u32 %v879, %v880
    %v882 = vsub.s32 4294967266, %v877
    %v883 = vadd.s32 %v882, 127
    %v884 = vshll.u32 %v883, 23
    %v885 = vor.u32 4788187, %v884
    %v886 = vand.u32 2147483647, %v885
    %v888 = vcvt.s32.f32 %v881
    %v889 = vmul.f32 %v888, %v886
    %v890 = vxor.u32 %v889, 2147483648
    %v891 = vsel %vm808, %v890, %v889
    %v892 = vsub.s32 4, %v868
    %v893 = vsel %vm808, %v892, %v868
    %v894 = vsel %vm807, %v688, %v891
    %v895 = vsel %vm807, 0, %v893
    %v896 = vcosq.f32.pop %v894
    %v897 = vsinq.f32.pop %v894
    %vm898 = vweird.f32 %v688
    %v899 = vand.u32 %v895, 3
    %vm900 = vcmp.lt.s32.totalorder %v899, 2
    %vm901 = vcmp.eq.s32.totalorder %v899, 0
    %v902 = vxor.u32 %v897, 2147483648
    %v903 = vsel %vm901, %v896, %v902
    %vm904 = vcmp.eq.s32.totalorder %v899, 2
    %v905 = vxor.u32 %v896, 2147483648
    %v906 = vsel %vm904, %v905, %v897
    %v907 = vsel %vm900, %v903, %v906
    %v908 = vsel %vm898, nan, %v907
    %v909 = vand.u32 2147483647, %v689
    %vm910 = vcmp.le.f32.partialorder %v909, 0.7853982
    %vm911 = vcmp.lt.s32.totalorder %v689, 0
    %v912 = vand.u32 %v689, 2139095040
    %v913 = vshrl.u32 %v912, 23
    %v914 = vsub.s32 %v913, 127
    %v915 = vand.u32 2147483647, %v689
    %v916 = vand.u32 %v915, 8388607
    %v917 = vor.u32 %v916, 8388608
    %v918 = vsub.s32 0, %v917
    %v919 = vadd.s32 %v914, 1
    %vm920 = vcmp.gt.s32.totalorder %v919, 0
    %v921 = vsel %vm920, %v919, 0
    %v922 = vshrl.u32 %v921, 5
    %v923 = vand.u32 %v921, 31
    %v924 = vsub.s32 32, %v923
    %v925 = vshrl.u32 683565275, %v924
    %v926 = vshll.u32 683565275, %v923
    %v927 = vshrl.u32 2475754826, %v924
    %v928 = vor.u32 %v926, %v927
    %v929 = vshll.u32 2475754826, %v923
    %v930 = vshrl.u32 2131351028, %v924
    %v931 = vor.u32 %v929, %v930
    %v932 = vshll.u32 2131351028, %v923
    %v933 = vshrl.u32 2102212464, %v924
    %v934 = vor.u32 %v932, %v933
    %v935 = vshll.u32 2102212464, %v923
    %v936 = vshrl.u32 920167782, %v924
    %v937 = vor.u32 %v935, %v936
    %v938 = vshll.u32 920167782, %v923
    %v939 = vshrl.u32 1326507024, %v924
    %v940 = vor.u32 %v938, %v939
    %vm941 = vcmp.lt.s32.totalorder %v922, 1
    %vm942 = vcmp.lt.s32.totalorder %v922, 2
    %vm943 = vcmp.lt.s32.totalorder %v922, 3
    %vm944 = vcmp.lt.s32.totalorder %v922, 4
    %v945 = vsel %vm941, %v925, %v928
    %v946 = vsel %vm944, %v934, 2102212464
    %v947 = vsel %vm943, %v931, %v946
    %v948 = vsel %vm942, %v945, %v947
    %v949 = vsel %vm941, %v928, %v931
    %v950 = vsel %vm944, %v937, 920167782
    %v951 = vsel %vm943, %v934, %v950
    %v952 = vsel %vm942, %v949, %v951
    %v953 = vsel %vm941, %v931, %v934
    %v954 = vsel %vm944, %v940, 1326507024
    %v955 = vsel %vm943, %v937, %v954
    %v956 = vsel %vm942, %v953, %v955
    %v957 = vshll.u32 %v917, 8
    %v958 = vmul.u32.u64.compose %v957, %v956
    %v959 = vextract.low.u32 %v958
    %v960 = vextract.high.u32 %v958
    %v961 = vmul.u32.u64.compose %v957, %v952
    %v962 = vextract.low.u32 %v961
    %v963 = vextract.high.u32 %v961
    %v964 = vmul.u32 %v957, %v948
    %v965 = vadd.s32 %v960, %v962
    %vm966 = vc.u32 %v960, %v962
    %v967 = vadd.s32 %v963, 1
    %v968 = vsel %vm966, %v967, %v963
    %v969 = vadd.s32 %v964, %v968
    %v970 = vadd.s32 %v969, 536870912
    %v971 = vshrl.u32 %v970, 30
    %v972 = vshll.u32 %v971, 30
    %v973 = vsub.s32 %v969, %v972
    %vm974 = vcmp.lt.s32.totalorder %v973, 0
    %v975 = vsub.s32 0, %v973
    %v976 = vsel %vm974, %v975, %v973
    %v977 = vclz %v976
    %v978 = vsub.s32 %v977, 2
    %vm979 = vcmp.gt.s32.totalorder 0, %v978
    %v980 = vsel %vm979, 0, %v978
    %v981 = vsub.s32 32, %v980
    %v982 = vshll.u32 %v973, %v980
    %v983 = vshrl.u32 %v965, %v981
    %v984 = vor.u32 %v982, %v983
    %v985 = vsub.s32 4294967266, %v980
    %v986 = vadd.s32 %v985, 127
    %v987 = vshll.u32 %v986, 23
    %v988 = vor.u32 4788187, %v987
    %v989 = vand.u32 2147483647, %v988
    %v991 = vcvt.s32.f32 %v984
    %v992 = vmul.f32 %v991, %v989
    %v993 = vxor.u32 %v992, 2147483648
    %v994 = vsel %vm911, %v993, %v992
    %v995 = vsub.s32 4, %v971
    %v996 = vsel %vm911, %v995, %v971
    %v997 = vsel %vm910, %v689, %v994
    %v998 = vsel %vm910, 0, %v996
    %v999 = vcosq.f32.pop %v997
    %v1000 = vsinq.f32.pop %v997
    %vm1001 = vweird.f32 %v689
    %v1002 = vand.u32 %v998, 3
    %vm1003 = vcmp.lt.s32.totalorder %v1002, 2
    %vm1004 = vcmp.eq.s32.totalorder %v1002, 0
    %v1005 = vxor.u32 %v1000, 2147483648
    %v1006 = vsel %vm1004, %v999, %v1005
    %vm1007 = vcmp.eq.s32.totalorder %v1002, 2
    %v1008 = vxor.u32 %v999, 2147483648
    %v1009 = vsel %vm1007, %v1008, %v1000
    %v1010 = vsel %vm1003, %v1006, %v1009
    %v1011 = vsel %vm1001, nan, %v1010
    %v1012 = vand.u32 2147483647, %v690
    %vm1013 = vcmp.le.f32.partialorder %v1012, 0.7853982
    %vm1014 = vcmp.lt.s32.totalorder %v690, 0
    %v1015 = vand.u32 %v690, 2139095040
    %v1016 = vshrl.u32 %v1015, 23
    %v1017 = vsub.s32 %v1016, 127
    %v1018 = vand.u32 2147483647, %v690
    %v1019 = vand.u32 %v1018, 8388607
    %v1020 = vor.u32 %v1019, 8388608
    %v1021 = vsub.s32 0, %v1020
    %v1022 = vadd.s32 %v1017, 1
    %vm1023 = vcmp.gt.s32.totalorder %v1022, 0
    %v1024 = vsel %vm1023, %v1022, 0
    %v1025 = vshrl.u32 %v1024, 5
    %v1026 = vand.u32 %v1024, 31
    %v1027 = vsub.s32 32, %v1026
    %v1028 = vshrl.u32 683565275, %v1027
    %v1029 = vshll.u32 683565275, %v1026
    %v1030 = vshrl.u32 2475754826, %v1027
    %v1031 = vor.u32 %v1029, %v1030
    %v1032 = vshll.u32 2475754826, %v1026
    %v1033 = vshrl.u32 2131351028, %v1027
    %v1034 = vor.u32 %v1032, %v1033
    %v1035 = vshll.u32 2131351028, %v1026
    %v1036 = vshrl.u32 2102212464, %v1027
    %v1037 = vor.u32 %v1035, %v1036
    %v1038 = vshll.u32 2102212464, %v1026
    %v1039 = vshrl.u32 920167782, %v1027
    %v1040 = vor.u32 %v1038, %v1039
    %v1041 = vshll.u32 920167782, %v1026
    %v1042 = vshrl.u32 1326507024, %v1027
    %v1043 = vor.u32 %v1041, %v1042
    %vm1044 = vcmp.lt.s32.totalorder %v1025, 1
    %vm1045 = vcmp.lt.s32.totalorder %v1025, 2
    %vm1046 = vcmp.lt.s32.totalorder %v1025, 3
    %vm1047 = vcmp.lt.s32.totalorder %v1025, 4
    %v1048 = vsel %vm1044, %v1028, %v1031
    %v1049 = vsel %vm1047, %v1037, 2102212464
    %v1050 = vsel %vm1046, %v1034, %v1049
    %v1051 = vsel %vm1045, %v1048, %v1050
    %v1052 = vsel %vm1044, %v1031, %v1034
    %v1053 = vsel %vm1047, %v1040, 920167782
    %v1054 = vsel %vm1046, %v1037, %v1053
    %v1055 = vsel %vm1045, %v1052, %v1054
    %v1056 = vsel %vm1044, %v1034, %v1037
    %v1057 = vsel %vm1047, %v1043, 1326507024
    %v1058 = vsel %vm1046, %v1040, %v1057
    %v1059 = vsel %vm1045, %v1056, %v1058
    %v1060 = vshll.u32 %v1020, 8
    %v1061 = vmul.u32.u64.compose %v1060, %v1059
    %v1062 = vextract.low.u32 %v1061
    %v1063 = vextract.high.u32 %v1061
    %v1064 = vmul.u32.u64.compose %v1060, %v1055
    %v1065 = vextract.low.u32 %v1064
    %v1066 = vextract.high.u32 %v1064
    %v1067 = vmul.u32 %v1060, %v1051
    %v1068 = vadd.s32 %v1063, %v1065
    %vm1069 = vc.u32 %v1063, %v1065
    %v1070 = vadd.s32 %v1066, 1
    %v1071 = vsel %vm1069, %v1070, %v1066
    %v1072 = vadd.s32 %v1067, %v1071
    %v1073 = vadd.s32 %v1072, 536870912
    %v1074 = vshrl.u32 %v1073, 30
    %v1075 = vshll.u32 %v1074, 30
    %v1076 = vsub.s32 %v1072, %v1075
    %vm1077 = vcmp.lt.s32.totalorder %v1076, 0
    %v1078 = vsub.s32 0, %v1076
    %v1079 = vsel %vm1077, %v1078, %v1076
    %v1080 = vclz %v1079
    %v1081 = vsub.s32 %v1080, 2
    %vm1082 = vcmp.gt.s32.totalorder 0, %v1081
    %v1083 = vsel %vm1082, 0, %v1081
    %v1084 = vsub.s32 32, %v1083
    %v1085 = vshll.u32 %v1076, %v1083
    %v1086 = vshrl.u32 %v1068, %v1084
    %v1087 = vor.u32 %v1085, %v1086
    %v1088 = vsub.s32 4294967266, %v1083
    %v1089 = vadd.s32 %v1088, 127
    %v1090 = vshll.u32 %v1089, 23
    %v1091 = vor.u32 4788187, %v1090
    %v1092 = vand.u32 2147483647, %v1091
    %v1094 = vcvt.s32.f32 %v1087
    %v1095 = vmul.f32 %v1094, %v1092
    %v1096 = vxor.u32 %v1095, 2147483648
    %v1097 = vsel %vm1014, %v1096, %v1095
    %v1098 = vsub.s32 4, %v1074
    %v1099 = vsel %vm1014, %v1098, %v1074
    %v1100 = vsel %vm1013, %v690, %v1097
    %v1101 = vsel %vm1013, 0, %v1099
    %v1102 = vcosq.f32.pop %v1100
    %v1103 = vsinq.f32.pop %v1100
    %vm1104 = vweird.f32 %v690
    %v1105 = vand.u32 %v1101, 3
    %vm1106 = vcmp.lt.s32.totalorder %v1105, 2
    %vm1107 = vcmp.eq.s32.totalorder %v1105, 0
    %v1108 = vxor.u32 %v1103, 2147483648
    %v1109 = vsel %vm1107, %v1102, %v1108
    %vm1110 = vcmp.eq.s32.totalorder %v1105, 2
    %v1111 = vxor.u32 %v1102, 2147483648
    %v1112 = vsel %vm1110, %v1111, %v1103
    %v1113 = vsel %vm1106, %v1109, %v1112
    %v1114 = vsel %vm1104, nan, %v1113
    %v1115 = vand.u32 2147483647, %v691
    %vm1116 = vcmp.le.f32.partialorder %v1115, 0.7853982
    %vm1117 = vcmp.lt.s32.totalorder %v691, 0
    %v1118 = vand.u32 %v691, 2139095040
    %v1119 = vshrl.u32 %v1118, 23
    %v1120 = vsub.s32 %v1119, 127
    %v1121 = vand.u32 2147483647, %v691
    %v1122 = vand.u32 %v1121, 8388607
    %v1123 = vor.u32 %v1122, 8388608
    %v1124 = vsub.s32 0, %v1123
    %v1125 = vadd.s32 %v1120, 1
    %vm1126 = vcmp.gt.s32.totalorder %v1125, 0
    %v1127 = vsel %vm1126, %v1125, 0
    %v1128 = vshrl.u32 %v1127, 5
    %v1129 = vand.u32 %v1127, 31
    %v1130 = vsub.s32 32, %v1129
    %v1131 = vshrl.u32 683565275, %v1130
    %v1132 = vshll.u32 683565275, %v1129
    %v1133 = vshrl.u32 2475754826, %v1130
    %v1134 = vor.u32 %v1132, %v1133
    %v1135 = vshll.u32 2475754826, %v1129
    %v1136 = vshrl.u32 2131351028, %v1130
    %v1137 = vor.u32 %v1135, %v1136
    %v1138 = vshll.u32 2131351028, %v1129
    %v1139 = vshrl.u32 2102212464, %v1130
    %v1140 = vor.u32 %v1138, %v1139
    %v1141 = vshll.u32 2102212464, %v1129
    %v1142 = vshrl.u32 920167782, %v1130
    %v1143 = vor.u32 %v1141, %v1142
    %v1144 = vshll.u32 920167782, %v1129
    %v1145 = vshrl.u32 1326507024, %v1130
    %v1146 = vor.u32 %v1144, %v1145
    %vm1147 = vcmp.lt.s32.totalorder %v1128, 1
    %vm1148 = vcmp.lt.s32.totalorder %v1128, 2
    %vm1149 = vcmp.lt.s32.totalorder %v1128, 3
    %vm1150 = vcmp.lt.s32.totalorder %v1128, 4
    %v1151 = vsel %vm1147, %v1131, %v1134
    %v1152 = vsel %vm1150, %v1140, 2102212464
    %v1153 = vsel %vm1149, %v1137, %v1152
    %v1154 = vsel %vm1148, %v1151, %v1153
    %v1155 = vsel %vm1147, %v1134, %v1137
    %v1156 = vsel %vm1150, %v1143, 920167782
    %v1157 = vsel %vm1149, %v1140, %v1156
    %v1158 = vsel %vm1148, %v1155, %v1157
    %v1159 = vsel %vm1147, %v1137, %v1140
    %v1160 = vsel %vm1150, %v1146, 1326507024
    %v1161 = vsel %vm1149, %v1143, %v1160
    %v1162 = vsel %vm1148, %v1159, %v1161
    %v1163 = vshll.u32 %v1123, 8
    %v1164 = vmul.u32.u64.compose %v1163, %v1162
    %v1165 = vextract.low.u32 %v1164
    %v1166 = vextract.high.u32 %v1164
    %v1167 = vmul.u32.u64.compose %v1163, %v1158
    %v1168 = vextract.low.u32 %v1167
    %v1169 = vextract.high.u32 %v1167
    %v1170 = vmul.u32 %v1163, %v1154
    %v1171 = vadd.s32 %v1166, %v1168
    %vm1172 = vc.u32 %v1166, %v1168
    %v1173 = vadd.s32 %v1169, 1
    %v1174 = vsel %vm1172, %v1173, %v1169
    %v1175 = vadd.s32 %v1170, %v1174
    %v1176 = vadd.s32 %v1175, 536870912
    %v1177 = vshrl.u32 %v1176, 30
    %v1178 = vshll.u32 %v1177, 30
    %v1179 = vsub.s32 %v1175, %v1178
    %vm1180 = vcmp.lt.s32.totalorder %v1179, 0
    %v1181 = vsub.s32 0, %v1179
    %v1182 = vsel %vm1180, %v1181, %v1179
    %v1183 = vclz %v1182
    %v1184 = vsub.s32 %v1183, 2
    %vm1185 = vcmp.gt.s32.totalorder 0, %v1184
    %v1186 = vsel %vm1185, 0, %v1184
    %v1187 = vsub.s32 32, %v1186
    %v1188 = vshll.u32 %v1179, %v1186
    %v1189 = vshrl.u32 %v1171, %v1187
    %v1190 = vor.u32 %v1188, %v1189
    %v1191 = vsub.s32 4294967266, %v1186
    %v1192 = vadd.s32 %v1191, 127
    %v1193 = vshll.u32 %v1192, 23
    %v1194 = vor.u32 4788187, %v1193
    %v1195 = vand.u32 2147483647, %v1194
    %v1197 = vcvt.s32.f32 %v1190
    %v1198 = vmul.f32 %v1197, %v1195
    %v1199 = vxor.u32 %v1198, 2147483648
    %v1200 = vsel %vm1117, %v1199, %v1198
    %v1201 = vsub.s32 4, %v1177
    %v1202 = vsel %vm1117, %v1201, %v1177
    %v1203 = vsel %vm1116, %v691, %v1200
    %v1204 = vsel %vm1116, 0, %v1202
    %v1205 = vcosq.f32.pop %v1203
    %v1206 = vsinq.f32.pop %v1203
    %vm1207 = vweird.f32 %v691
    %v1208 = vand.u32 %v1204, 3
    %vm1209 = vcmp.lt.s32.totalorder %v1208, 2
    %vm1210 = vcmp.eq.s32.totalorder %v1208, 0
    %v1211 = vxor.u32 %v1206, 2147483648
    %v1212 = vsel %vm1210, %v1205, %v1211
    %vm1213 = vcmp.eq.s32.totalorder %v1208, 2
    %v1214 = vxor.u32 %v1205, 2147483648
    %v1215 = vsel %vm1213, %v1214, %v1206
    %v1216 = vsel %vm1209, %v1212, %v1215
    %v1217 = vsel %vm1207, nan, %v1216
    %v1218 = vand.u32 2147483647, %v692
    %vm1219 = vcmp.le.f32.partialorder %v1218, 0.7853982
    %vm1220 = vcmp.lt.s32.totalorder %v692, 0
    %v1221 = vand.u32 %v692, 2139095040
    %v1222 = vshrl.u32 %v1221, 23
    %v1223 = vsub.s32 %v1222, 127
    %v1224 = vand.u32 2147483647, %v692
    %v1225 = vand.u32 %v1224, 8388607
    %v1226 = vor.u32 %v1225, 8388608
    %v1227 = vsub.s32 0, %v1226
    %v1228 = vadd.s32 %v1223, 1
    %vm1229 = vcmp.gt.s32.totalorder %v1228, 0
    %v1230 = vsel %vm1229, %v1228, 0
    %v1231 = vshrl.u32 %v1230, 5
    %v1232 = vand.u32 %v1230, 31
    %v1233 = vsub.s32 32, %v1232
    %v1234 = vshrl.u32 683565275, %v1233
    %v1235 = vshll.u32 683565275, %v1232
    %v1236 = vshrl.u32 2475754826, %v1233
    %v1237 = vor.u32 %v1235, %v1236
    %v1238 = vshll.u32 2475754826, %v1232
    %v1239 = vshrl.u32 2131351028, %v1233
    %v1240 = vor.u32 %v1238, %v1239
    %v1241 = vshll.u32 2131351028, %v1232
    %v1242 = vshrl.u32 2102212464, %v1233
    %v1243 = vor.u32 %v1241, %v1242
    %v1244 = vshll.u32 2102212464, %v1232
    %v1245 = vshrl.u32 920167782, %v1233
    %v1246 = vor.u32 %v1244, %v1245
    %v1247 = vshll.u32 920167782, %v1232
    %v1248 = vshrl.u32 1326507024, %v1233
    %v1249 = vor.u32 %v1247, %v1248
    %vm1250 = vcmp.lt.s32.totalorder %v1231, 1
    %vm1251 = vcmp.lt.s32.totalorder %v1231, 2
    %vm1252 = vcmp.lt.s32.totalorder %v1231, 3
    %vm1253 = vcmp.lt.s32.totalorder %v1231, 4
    %v1254 = vsel %vm1250, %v1234, %v1237
    %v1255 = vsel %vm1253, %v1243, 2102212464
    %v1256 = vsel %vm1252, %v1240, %v1255
    %v1257 = vsel %vm1251, %v1254, %v1256
    %v1258 = vsel %vm1250, %v1237, %v1240
    %v1259 = vsel %vm1253, %v1246, 920167782
    %v1260 = vsel %vm1252, %v1243, %v1259
    %v1261 = vsel %vm1251, %v1258, %v1260
    %v1262 = vsel %vm1250, %v1240, %v1243
    %v1263 = vsel %vm1253, %v1249, 1326507024
    %v1264 = vsel %vm1252, %v1246, %v1263
    %v1265 = vsel %vm1251, %v1262, %v1264
    %v1266 = vshll.u32 %v1226, 8
    %v1267 = vmul.u32.u64.compose %v1266, %v1265
    %v1268 = vextract.low.u32 %v1267
    %v1269 = vextract.high.u32 %v1267
    %v1270 = vmul.u32.u64.compose %v1266, %v1261
    %v1271 = vextract.low.u32 %v1270
    %v1272 = vextract.high.u32 %v1270
    %v1273 = vmul.u32 %v1266, %v1257
    %v1274 = vadd.s32 %v1269, %v1271
    %vm1275 = vc.u32 %v1269, %v1271
    %v1276 = vadd.s32 %v1272, 1
    %v1277 = vsel %vm1275, %v1276, %v1272
    %v1278 = vadd.s32 %v1273, %v1277
    %v1279 = vadd.s32 %v1278, 536870912
    %v1280 = vshrl.u32 %v1279, 30
    %v1281 = vshll.u32 %v1280, 30
    %v1282 = vsub.s32 %v1278, %v1281
    %vm1283 = vcmp.lt.s32.totalorder %v1282, 0
    %v1284 = vsub.s32 0, %v1282
    %v1285 = vsel %vm1283, %v1284, %v1282
    %v1286 = vclz %v1285
    %v1287 = vsub.s32 %v1286, 2
    %vm1288 = vcmp.gt.s32.totalorder 0, %v1287
    %v1289 = vsel %vm1288, 0, %v1287
    %v1290 = vsub.s32 32, %v1289
    %v1291 = vshll.u32 %v1282, %v1289
    %v1292 = vshrl.u32 %v1274, %v1290
    %v1293 = vor.u32 %v1291, %v1292
    %v1294 = vsub.s32 4294967266, %v1289
    %v1295 = vadd.s32 %v1294, 127
    %v1296 = vshll.u32 %v1295, 23
    %v1297 = vor.u32 4788187, %v1296
    %v1298 = vand.u32 2147483647, %v1297
    %v1300 = vcvt.s32.f32 %v1293
    %v1301 = vmul.f32 %v1300, %v1298
    %v1302 = vxor.u32 %v1301, 2147483648
    %v1303 = vsel %vm1220, %v1302, %v1301
    %v1304 = vsub.s32 4, %v1280
    %v1305 = vsel %vm1220, %v1304, %v1280
    %v1306 = vsel %vm1219, %v692, %v1303
    %v1307 = vsel %vm1219, 0, %v1305
    %v1308 = vcosq.f32.pop %v1306
    %v1309 = vsinq.f32.pop %v1306
    %vm1310 = vweird.f32 %v692
    %v1311 = vand.u32 %v1307, 3
    %vm1312 = vcmp.lt.s32.totalorder %v1311, 2
    %vm1313 = vcmp.eq.s32.totalorder %v1311, 0
    %v1314 = vxor.u32 %v1309, 2147483648
    %v1315 = vsel %vm1313, %v1308, %v1314
    %vm1316 = vcmp.eq.s32.totalorder %v1311, 2
    %v1317 = vxor.u32 %v1308, 2147483648
    %v1318 = vsel %vm1316, %v1317, %v1309
    %v1319 = vsel %vm1312, %v1315, %v1318
    %v1320 = vsel %vm1310, nan, %v1319
    %v1321 = vand.u32 2147483647, %v693
    %vm1322 = vcmp.le.f32.partialorder %v1321, 0.7853982
    %vm1323 = vcmp.lt.s32.totalorder %v693, 0
    %v1324 = vand.u32 %v693, 2139095040
    %v1325 = vshrl.u32 %v1324, 23
    %v1326 = vsub.s32 %v1325, 127
    %v1327 = vand.u32 2147483647, %v693
    %v1328 = vand.u32 %v1327, 8388607
    %v1329 = vor.u32 %v1328, 8388608
    %v1330 = vsub.s32 0, %v1329
    %v1331 = vadd.s32 %v1326, 1
    %vm1332 = vcmp.gt.s32.totalorder %v1331, 0
    %v1333 = vsel %vm1332, %v1331, 0
    %v1334 = vshrl.u32 %v1333, 5
    %v1335 = vand.u32 %v1333, 31
    %v1336 = vsub.s32 32, %v1335
    %v1337 = vshrl.u32 683565275, %v1336
    %v1338 = vshll.u32 683565275, %v1335
    %v1339 = vshrl.u32 2475754826, %v1336
    %v1340 = vor.u32 %v1338, %v1339
    %v1341 = vshll.u32 2475754826, %v1335
    %v1342 = vshrl.u32 2131351028, %v1336
    %v1343 = vor.u32 %v1341, %v1342
    %v1344 = vshll.u32 2131351028, %v1335
    %v1345 = vshrl.u32 2102212464, %v1336
    %v1346 = vor.u32 %v1344, %v1345
    %v1347 = vshll.u32 2102212464, %v1335
    %v1348 = vshrl.u32 920167782, %v1336
    %v1349 = vor.u32 %v1347, %v1348
    %v1350 = vshll.u32 920167782, %v1335
    %v1351 = vshrl.u32 1326507024, %v1336
    %v1352 = vor.u32 %v1350, %v1351
    %vm1353 = vcmp.lt.s32.totalorder %v1334, 1
    %vm1354 = vcmp.lt.s32.totalorder %v1334, 2
    %vm1355 = vcmp.lt.s32.totalorder %v1334, 3
    %vm1356 = vcmp.lt.s32.totalorder %v1334, 4
    %v1357 = vsel %vm1353, %v1337, %v1340
    %v1358 = vsel %vm1356, %v1346, 2102212464
    %v1359 = vsel %vm1355, %v1343, %v1358
    %v1360 = vsel %vm1354, %v1357, %v1359
    %v1361 = vsel %vm1353, %v1340, %v1343
    %v1362 = vsel %vm1356, %v1349, 920167782
    %v1363 = vsel %vm1355, %v1346, %v1362
    %v1364 = vsel %vm1354, %v1361, %v1363
    %v1365 = vsel %vm1353, %v1343, %v1346
    %v1366 = vsel %vm1356, %v1352, 1326507024
    %v1367 = vsel %vm1355, %v1349, %v1366
    %v1368 = vsel %vm1354, %v1365, %v1367
    %v1369 = vshll.u32 %v1329, 8
    %v1370 = vmul.u32.u64.compose %v1369, %v1368
    %v1371 = vextract.low.u32 %v1370
    %v1372 = vextract.high.u32 %v1370
    %v1373 = vmul.u32.u64.compose %v1369, %v1364
    %v1374 = vextract.low.u32 %v1373
    %v1375 = vextract.high.u32 %v1373
    %v1376 = vmul.u32 %v1369, %v1360
    %v1377 = vadd.s32 %v1372, %v1374
    %vm1378 = vc.u32 %v1372, %v1374
    %v1379 = vadd.s32 %v1375, 1
    %v1380 = vsel %vm1378, %v1379, %v1375
    %v1381 = vadd.s32 %v1376, %v1380
    %v1382 = vadd.s32 %v1381, 536870912
    %v1383 = vshrl.u32 %v1382, 30
    %v1384 = vshll.u32 %v1383, 30
    %v1385 = vsub.s32 %v1381, %v1384
    %vm1386 = vcmp.lt.s32.totalorder %v1385, 0
    %v1387 = vsub.s32 0, %v1385
    %v1388 = vsel %vm1386, %v1387, %v1385
    %v1389 = vclz %v1388
    %v1390 = vsub.s32 %v1389, 2
    %vm1391 = vcmp.gt.s32.totalorder 0, %v1390
    %v1392 = vsel %vm1391, 0, %v1390
    %v1393 = vsub.s32 32, %v1392
    %v1394 = vshll.u32 %v1385, %v1392
    %v1395 = vshrl.u32 %v1377, %v1393
    %v1396 = vor.u32 %v1394, %v1395
    %v1397 = vsub.s32 4294967266, %v1392
    %v1398 = vadd.s32 %v1397, 127
    %v1399 = vshll.u32 %v1398, 23
    %v1400 = vor.u32 4788187, %v1399
    %v1401 = vand.u32 2147483647, %v1400
    %v1403 = vcvt.s32.f32 %v1396
    %v1404 = vmul.f32 %v1403, %v1401
    %v1405 = vxor.u32 %v1404, 2147483648
    %v1406 = vsel %vm1323, %v1405, %v1404
    %v1407 = vsub.s32 4, %v1383
    %v1408 = vsel %vm1323, %v1407, %v1383
    %v1409 = vsel %vm1322, %v693, %v1406
    %v1410 = vsel %vm1322, 0, %v1408
    %v1411 = vcosq.f32.pop %v1409
    %v1412 = vsinq.f32.pop %v1409
    %vm1413 = vweird.f32 %v693
    %v1414 = vand.u32 %v1410, 3
    %vm1415 = vcmp.lt.s32.totalorder %v1414, 2
    %vm1416 = vcmp.eq.s32.totalorder %v1414, 0
    %v1417 = vxor.u32 %v1412, 2147483648
    %v1418 = vsel %vm1416, %v1411, %v1417
    %vm1419 = vcmp.eq.s32.totalorder %v1414, 2
    %v1420 = vxor.u32 %v1411, 2147483648
    %v1421 = vsel %vm1419, %v1420, %v1412
    %v1422 = vsel %vm1415, %v1418, %v1421
    %v1423 = vsel %vm1413, nan, %v1422
    %v1424 = vand.u32 2147483647, %v694
    %vm1425 = vcmp.le.f32.partialorder %v1424, 0.7853982
    %vm1426 = vcmp.lt.s32.totalorder %v694, 0
    %v1427 = vand.u32 %v694, 2139095040
    %v1428 = vshrl.u32 %v1427, 23
    %v1429 = vsub.s32 %v1428, 127
    %v1430 = vand.u32 2147483647, %v694
    %v1431 = vand.u32 %v1430, 8388607
    %v1432 = vor.u32 %v1431, 8388608
    %v1433 = vsub.s32 0, %v1432
    %v1434 = vadd.s32 %v1429, 1
    %vm1435 = vcmp.gt.s32.totalorder %v1434, 0
    %v1436 = vsel %vm1435, %v1434, 0
    %v1437 = vshrl.u32 %v1436, 5
    %v1438 = vand.u32 %v1436, 31
    %v1439 = vsub.s32 32, %v1438
    %v1440 = vshrl.u32 683565275, %v1439
    %v1441 = vshll.u32 683565275, %v1438
    %v1442 = vshrl.u32 2475754826, %v1439
    %v1443 = vor.u32 %v1441, %v1442
    %v1444 = vshll.u32 2475754826, %v1438
    %v1445 = vshrl.u32 2131351028, %v1439
    %v1446 = vor.u32 %v1444, %v1445
    %v1447 = vshll.u32 2131351028, %v1438
    %v1448 = vshrl.u32 2102212464, %v1439
    %v1449 = vor.u32 %v1447, %v1448
    %v1450 = vshll.u32 2102212464, %v1438
    %v1451 = vshrl.u32 920167782, %v1439
    %v1452 = vor.u32 %v1450, %v1451
    %v1453 = vshll.u32 920167782, %v1438
    %v1454 = vshrl.u32 1326507024, %v1439
    %v1455 = vor.u32 %v1453, %v1454
    %vm1456 = vcmp.lt.s32.totalorder %v1437, 1
    %vm1457 = vcmp.lt.s32.totalorder %v1437, 2
    %vm1458 = vcmp.lt.s32.totalorder %v1437, 3
    %vm1459 = vcmp.lt.s32.totalorder %v1437, 4
    %v1460 = vsel %vm1456, %v1440, %v1443
    %v1461 = vsel %vm1459, %v1449, 2102212464
    %v1462 = vsel %vm1458, %v1446, %v1461
    %v1463 = vsel %vm1457, %v1460, %v1462
    %v1464 = vsel %vm1456, %v1443, %v1446
    %v1465 = vsel %vm1459, %v1452, 920167782
    %v1466 = vsel %vm1458, %v1449, %v1465
    %v1467 = vsel %vm1457, %v1464, %v1466
    %v1468 = vsel %vm1456, %v1446, %v1449
    %v1469 = vsel %vm1459, %v1455, 1326507024
    %v1470 = vsel %vm1458, %v1452, %v1469
    %v1471 = vsel %vm1457, %v1468, %v1470
    %v1472 = vshll.u32 %v1432, 8
    %v1473 = vmul.u32.u64.compose %v1472, %v1471
    %v1474 = vextract.low.u32 %v1473
    %v1475 = vextract.high.u32 %v1473
    %v1476 = vmul.u32.u64.compose %v1472, %v1467
    %v1477 = vextract.low.u32 %v1476
    %v1478 = vextract.high.u32 %v1476
    %v1479 = vmul.u32 %v1472, %v1463
    %v1480 = vadd.s32 %v1475, %v1477
    %vm1481 = vc.u32 %v1475, %v1477
    %v1482 = vadd.s32 %v1478, 1
    %v1483 = vsel %vm1481, %v1482, %v1478
    %v1484 = vadd.s32 %v1479, %v1483
    %v1485 = vadd.s32 %v1484, 536870912
    %v1486 = vshrl.u32 %v1485, 30
    %v1487 = vshll.u32 %v1486, 30
    %v1488 = vsub.s32 %v1484, %v1487
    %vm1489 = vcmp.lt.s32.totalorder %v1488, 0
    %v1490 = vsub.s32 0, %v1488
    %v1491 = vsel %vm1489, %v1490, %v1488
    %v1492 = vclz %v1491
    %v1493 = vsub.s32 %v1492, 2
    %vm1494 = vcmp.gt.s32.totalorder 0, %v1493
    %v1495 = vsel %vm1494, 0, %v1493
    %v1496 = vsub.s32 32, %v1495
    %v1497 = vshll.u32 %v1488, %v1495
    %v1498 = vshrl.u32 %v1480, %v1496
    %v1499 = vor.u32 %v1497, %v1498
    %v1500 = vsub.s32 4294967266, %v1495
    %v1501 = vadd.s32 %v1500, 127
    %v1502 = vshll.u32 %v1501, 23
    %v1503 = vor.u32 4788187, %v1502
    %v1504 = vand.u32 2147483647, %v1503
    %v1506 = vcvt.s32.f32 %v1499
    %v1507 = vmul.f32 %v1506, %v1504
    %v1508 = vxor.u32 %v1507, 2147483648
    %v1509 = vsel %vm1426, %v1508, %v1507
    %v1510 = vsub.s32 4, %v1486
    %v1511 = vsel %vm1426, %v1510, %v1486
    %v1512 = vsel %vm1425, %v694, %v1509
    %v1513 = vsel %vm1425, 0, %v1511
    %v1514 = vcosq.f32.pop %v1512
    %v1515 = vsinq.f32.pop %v1512
    %vm1516 = vweird.f32 %v694
    %v1517 = vand.u32 %v1513, 3
    %vm1518 = vcmp.lt.s32.totalorder %v1517, 2
    %vm1519 = vcmp.eq.s32.totalorder %v1517, 0
    %v1520 = vxor.u32 %v1515, 2147483648
    %v1521 = vsel %vm1519, %v1514, %v1520
    %vm1522 = vcmp.eq.s32.totalorder %v1517, 2
    %v1523 = vxor.u32 %v1514, 2147483648
    %v1524 = vsel %vm1522, %v1523, %v1515
    %v1525 = vsel %vm1518, %v1521, %v1524
    %v1526 = vsel %vm1516, nan, %v1525
    %v1527 = vand.u32 2147483647, %v695
    %vm1528 = vcmp.le.f32.partialorder %v1527, 0.7853982
    %vm1529 = vcmp.lt.s32.totalorder %v695, 0
    %v1530 = vand.u32 %v695, 2139095040
    %v1531 = vshrl.u32 %v1530, 23
    %v1532 = vsub.s32 %v1531, 127
    %v1533 = vand.u32 2147483647, %v695
    %v1534 = vand.u32 %v1533, 8388607
    %v1535 = vor.u32 %v1534, 8388608
    %v1536 = vsub.s32 0, %v1535
    %v1537 = vadd.s32 %v1532, 1
    %vm1538 = vcmp.gt.s32.totalorder %v1537, 0
    %v1539 = vsel %vm1538, %v1537, 0
    %v1540 = vshrl.u32 %v1539, 5
    %v1541 = vand.u32 %v1539, 31
    %v1542 = vsub.s32 32, %v1541
    %v1543 = vshrl.u32 683565275, %v1542
    %v1544 = vshll.u32 683565275, %v1541
    %v1545 = vshrl.u32 2475754826, %v1542
    %v1546 = vor.u32 %v1544, %v1545
    %v1547 = vshll.u32 2475754826, %v1541
    %v1548 = vshrl.u32 2131351028, %v1542
    %v1549 = vor.u32 %v1547, %v1548
    %v1550 = vshll.u32 2131351028, %v1541
    %v1551 = vshrl.u32 2102212464, %v1542
    %v1552 = vor.u32 %v1550, %v1551
    %v1553 = vshll.u32 2102212464, %v1541
    %v1554 = vshrl.u32 920167782, %v1542
    %v1555 = vor.u32 %v1553, %v1554
    %v1556 = vshll.u32 920167782, %v1541
    %v1557 = vshrl.u32 1326507024, %v1542
    %v1558 = vor.u32 %v1556, %v1557
    %vm1559 = vcmp.lt.s32.totalorder %v1540, 1
    %vm1560 = vcmp.lt.s32.totalorder %v1540, 2
    %vm1561 = vcmp.lt.s32.totalorder %v1540, 3
    %vm1562 = vcmp.lt.s32.totalorder %v1540, 4
    %v1563 = vsel %vm1559, %v1543, %v1546
    %v1564 = vsel %vm1562, %v1552, 2102212464
    %v1565 = vsel %vm1561, %v1549, %v1564
    %v1566 = vsel %vm1560, %v1563, %v1565
    %v1567 = vsel %vm1559, %v1546, %v1549
    %v1568 = vsel %vm1562, %v1555, 920167782
    %v1569 = vsel %vm1561, %v1552, %v1568
    %v1570 = vsel %vm1560, %v1567, %v1569
    %v1571 = vsel %vm1559, %v1549, %v1552
    %v1572 = vsel %vm1562, %v1558, 1326507024
    %v1573 = vsel %vm1561, %v1555, %v1572
    %v1574 = vsel %vm1560, %v1571, %v1573
    %v1575 = vshll.u32 %v1535, 8
    %v1576 = vmul.u32.u64.compose %v1575, %v1574
    %v1577 = vextract.low.u32 %v1576
    %v1578 = vextract.high.u32 %v1576
    %v1579 = vmul.u32.u64.compose %v1575, %v1570
    %v1580 = vextract.low.u32 %v1579
    %v1581 = vextract.high.u32 %v1579
    %v1582 = vmul.u32 %v1575, %v1566
    %v1583 = vadd.s32 %v1578, %v1580
    %vm1584 = vc.u32 %v1578, %v1580
    %v1585 = vadd.s32 %v1581, 1
    %v1586 = vsel %vm1584, %v1585, %v1581
    %v1587 = vadd.s32 %v1582, %v1586
    %v1588 = vadd.s32 %v1587, 536870912
    %v1589 = vshrl.u32 %v1588, 30
    %v1590 = vshll.u32 %v1589, 30
    %v1591 = vsub.s32 %v1587, %v1590
    %vm1592 = vcmp.lt.s32.totalorder %v1591, 0
    %v1593 = vsub.s32 0, %v1591
    %v1594 = vsel %vm1592, %v1593, %v1591
    %v1595 = vclz %v1594
    %v1596 = vsub.s32 %v1595, 2
    %vm1597 = vcmp.gt.s32.totalorder 0, %v1596
    %v1598 = vsel %vm1597, 0, %v1596
    %v1599 = vsub.s32 32, %v1598
    %v1600 = vshll.u32 %v1591, %v1598
    %v1601 = vshrl.u32 %v1583, %v1599
    %v1602 = vor.u32 %v1600, %v1601
    %v1603 = vsub.s32 4294967266, %v1598
    %v1604 = vadd.s32 %v1603, 127
    %v1605 = vshll.u32 %v1604, 23
    %v1606 = vor.u32 4788187, %v1605
    %v1607 = vand.u32 2147483647, %v1606
    %v1609 = vcvt.s32.f32 %v1602
    %v1610 = vmul.f32 %v1609, %v1607
    %v1611 = vxor.u32 %v1610, 2147483648
    %v1612 = vsel %vm1529, %v1611, %v1610
    %v1613 = vsub.s32 4, %v1589
    %v1614 = vsel %vm1529, %v1613, %v1589
    %v1615 = vsel %vm1528, %v695, %v1612
    %v1616 = vsel %vm1528, 0, %v1614
    %v1617 = vcosq.f32.pop %v1615
    %v1618 = vsinq.f32.pop %v1615
    %vm1619 = vweird.f32 %v695
    %v1620 = vand.u32 %v1616, 3
    %vm1621 = vcmp.lt.s32.totalorder %v1620, 2
    %vm1622 = vcmp.eq.s32.totalorder %v1620, 0
    %v1623 = vxor.u32 %v1618, 2147483648
    %v1624 = vsel %vm1622, %v1617, %v1623
    %vm1625 = vcmp.eq.s32.totalorder %v1620, 2
    %v1626 = vxor.u32 %v1617, 2147483648
    %v1627 = vsel %vm1625, %v1626, %v1618
    %v1628 = vsel %vm1621, %v1624, %v1627
    %v1629 = vsel %vm1619, nan, %v1628
    %v1630 = vand.u32 2147483647, %v696
    %vm1631 = vcmp.le.f32.partialorder %v1630, 0.7853982
    %vm1632 = vcmp.lt.s32.totalorder %v696, 0
    %v1633 = vand.u32 %v696, 2139095040
    %v1634 = vshrl.u32 %v1633, 23
    %v1635 = vsub.s32 %v1634, 127
    %v1636 = vand.u32 2147483647, %v696
    %v1637 = vand.u32 %v1636, 8388607
    %v1638 = vor.u32 %v1637, 8388608
    %v1639 = vsub.s32 0, %v1638
    %v1640 = vadd.s32 %v1635, 1
    %vm1641 = vcmp.gt.s32.totalorder %v1640, 0
    %v1642 = vsel %vm1641, %v1640, 0
    %v1643 = vshrl.u32 %v1642, 5
    %v1644 = vand.u32 %v1642, 31
    %v1645 = vsub.s32 32, %v1644
    %v1646 = vshrl.u32 683565275, %v1645
    %v1647 = vshll.u32 683565275, %v1644
    %v1648 = vshrl.u32 2475754826, %v1645
    %v1649 = vor.u32 %v1647, %v1648
    %v1650 = vshll.u32 2475754826, %v1644
    %v1651 = vshrl.u32 2131351028, %v1645
    %v1652 = vor.u32 %v1650, %v1651
    %v1653 = vshll.u32 2131351028, %v1644
    %v1654 = vshrl.u32 2102212464, %v1645
    %v1655 = vor.u32 %v1653, %v1654
    %v1656 = vshll.u32 2102212464, %v1644
    %v1657 = vshrl.u32 920167782, %v1645
    %v1658 = vor.u32 %v1656, %v1657
    %v1659 = vshll.u32 920167782, %v1644
    %v1660 = vshrl.u32 1326507024, %v1645
    %v1661 = vor.u32 %v1659, %v1660
    %vm1662 = vcmp.lt.s32.totalorder %v1643, 1
    %vm1663 = vcmp.lt.s32.totalorder %v1643, 2
    %vm1664 = vcmp.lt.s32.totalorder %v1643, 3
    %vm1665 = vcmp.lt.s32.totalorder %v1643, 4
    %v1666 = vsel %vm1662, %v1646, %v1649
    %v1667 = vsel %vm1665, %v1655, 2102212464
    %v1668 = vsel %vm1664, %v1652, %v1667
    %v1669 = vsel %vm1663, %v1666, %v1668
    %v1670 = vsel %vm1662, %v1649, %v1652
    %v1671 = vsel %vm1665, %v1658, 920167782
    %v1672 = vsel %vm1664, %v1655, %v1671
    %v1673 = vsel %vm1663, %v1670, %v1672
    %v1674 = vsel %vm1662, %v1652, %v1655
    %v1675 = vsel %vm1665, %v1661, 1326507024
    %v1676 = vsel %vm1664, %v1658, %v1675
    %v1677 = vsel %vm1663, %v1674, %v1676
    %v1678 = vshll.u32 %v1638, 8
    %v1679 = vmul.u32.u64.compose %v1678, %v1677
    %v1680 = vextract.low.u32 %v1679
    %v1681 = vextract.high.u32 %v1679
    %v1682 = vmul.u32.u64.compose %v1678, %v1673
    %v1683 = vextract.low.u32 %v1682
    %v1684 = vextract.high.u32 %v1682
    %v1685 = vmul.u32 %v1678, %v1669
    %v1686 = vadd.s32 %v1681, %v1683
    %vm1687 = vc.u32 %v1681, %v1683
    %v1688 = vadd.s32 %v1684, 1
    %v1689 = vsel %vm1687, %v1688, %v1684
    %v1690 = vadd.s32 %v1685, %v1689
    %v1691 = vadd.s32 %v1690, 536870912
    %v1692 = vshrl.u32 %v1691, 30
    %v1693 = vshll.u32 %v1692, 30
    %v1694 = vsub.s32 %v1690, %v1693
    %vm1695 = vcmp.lt.s32.totalorder %v1694, 0
    %v1696 = vsub.s32 0, %v1694
    %v1697 = vsel %vm1695, %v1696, %v1694
    %v1698 = vclz %v1697
    %v1699 = vsub.s32 %v1698, 2
    %vm1700 = vcmp.gt.s32.totalorder 0, %v1699
    %v1701 = vsel %vm1700, 0, %v1699
    %v1702 = vsub.s32 32, %v1701
    %v1703 = vshll.u32 %v1694, %v1701
    %v1704 = vshrl.u32 %v1686, %v1702
    %v1705 = vor.u32 %v1703, %v1704
    %v1706 = vsub.s32 4294967266, %v1701
    %v1707 = vadd.s32 %v1706, 127
    %v1708 = vshll.u32 %v1707, 23
    %v1709 = vor.u32 4788187, %v1708
    %v1710 = vand.u32 2147483647, %v1709
    %v1712 = vcvt.s32.f32 %v1705
    %v1713 = vmul.f32 %v1712, %v1710
    %v1714 = vxor.u32 %v1713, 2147483648
    %v1715 = vsel %vm1632, %v1714, %v1713
    %v1716 = vsub.s32 4, %v1692
    %v1717 = vsel %vm1632, %v1716, %v1692
    %v1718 = vsel %vm1631, %v696, %v1715
    %v1719 = vsel %vm1631, 0, %v1717
    %v1720 = vcosq.f32.pop %v1718
    %v1721 = vsinq.f32.pop %v1718
    %vm1722 = vweird.f32 %v696
    %v1723 = vand.u32 %v1719, 3
    %vm1724 = vcmp.lt.s32.totalorder %v1723, 2
    %vm1725 = vcmp.eq.s32.totalorder %v1723, 0
    %v1726 = vxor.u32 %v1721, 2147483648
    %v1727 = vsel %vm1725, %v1720, %v1726
    %vm1728 = vcmp.eq.s32.totalorder %v1723, 2
    %v1729 = vxor.u32 %v1720, 2147483648
    %v1730 = vsel %vm1728, %v1729, %v1721
    %v1731 = vsel %vm1724, %v1727, %v1730
    %v1732 = vsel %vm1722, nan, %v1731
    %v1733 = vand.u32 2147483647, %v697
    %vm1734 = vcmp.le.f32.partialorder %v1733, 0.7853982
    %vm1735 = vcmp.lt.s32.totalorder %v697, 0
    %v1736 = vand.u32 %v697, 2139095040
    %v1737 = vshrl.u32 %v1736, 23
    %v1738 = vsub.s32 %v1737, 127
    %v1739 = vand.u32 2147483647, %v697
    %v1740 = vand.u32 %v1739, 8388607
    %v1741 = vor.u32 %v1740, 8388608
    %v1742 = vsub.s32 0, %v1741
    %v1743 = vadd.s32 %v1738, 1
    %vm1744 = vcmp.gt.s32.totalorder %v1743, 0
    %v1745 = vsel %vm1744, %v1743, 0
    %v1746 = vshrl.u32 %v1745, 5
    %v1747 = vand.u32 %v1745, 31
    %v1748 = vsub.s32 32, %v1747
    %v1749 = vshrl.u32 683565275, %v1748
    %v1750 = vshll.u32 683565275, %v1747
    %v1751 = vshrl.u32 2475754826, %v1748
    %v1752 = vor.u32 %v1750, %v1751
    %v1753 = vshll.u32 2475754826, %v1747
    %v1754 = vshrl.u32 2131351028, %v1748
    %v1755 = vor.u32 %v1753, %v1754
    %v1756 = vshll.u32 2131351028, %v1747
    %v1757 = vshrl.u32 2102212464, %v1748
    %v1758 = vor.u32 %v1756, %v1757
    %v1759 = vshll.u32 2102212464, %v1747
    %v1760 = vshrl.u32 920167782, %v1748
    %v1761 = vor.u32 %v1759, %v1760
    %v1762 = vshll.u32 920167782, %v1747
    %v1763 = vshrl.u32 1326507024, %v1748
    %v1764 = vor.u32 %v1762, %v1763
    %vm1765 = vcmp.lt.s32.totalorder %v1746, 1
    %vm1766 = vcmp.lt.s32.totalorder %v1746, 2
    %vm1767 = vcmp.lt.s32.totalorder %v1746, 3
    %vm1768 = vcmp.lt.s32.totalorder %v1746, 4
    %v1769 = vsel %vm1765, %v1749, %v1752
    %v1770 = vsel %vm1768, %v1758, 2102212464
    %v1771 = vsel %vm1767, %v1755, %v1770
    %v1772 = vsel %vm1766, %v1769, %v1771
    %v1773 = vsel %vm1765, %v1752, %v1755
    %v1774 = vsel %vm1768, %v1761, 920167782
    %v1775 = vsel %vm1767, %v1758, %v1774
    %v1776 = vsel %vm1766, %v1773, %v1775
    %v1777 = vsel %vm1765, %v1755, %v1758
    %v1778 = vsel %vm1768, %v1764, 1326507024
    %v1779 = vsel %vm1767, %v1761, %v1778
    %v1780 = vsel %vm1766, %v1777, %v1779
    %v1781 = vshll.u32 %v1741, 8
    %v1782 = vmul.u32.u64.compose %v1781, %v1780
    %v1783 = vextract.low.u32 %v1782
    %v1784 = vextract.high.u32 %v1782
    %v1785 = vmul.u32.u64.compose %v1781, %v1776
    %v1786 = vextract.low.u32 %v1785
    %v1787 = vextract.high.u32 %v1785
    %v1788 = vmul.u32 %v1781, %v1772
    %v1789 = vadd.s32 %v1784, %v1786
    %vm1790 = vc.u32 %v1784, %v1786
    %v1791 = vadd.s32 %v1787, 1
    %v1792 = vsel %vm1790, %v1791, %v1787
    %v1793 = vadd.s32 %v1788, %v1792
    %v1794 = vadd.s32 %v1793, 536870912
    %v1795 = vshrl.u32 %v1794, 30
    %v1796 = vshll.u32 %v1795, 30
    %v1797 = vsub.s32 %v1793, %v1796
    %vm1798 = vcmp.lt.s32.totalorder %v1797, 0
    %v1799 = vsub.s32 0, %v1797
    %v1800 = vsel %vm1798, %v1799, %v1797
    %v1801 = vclz %v1800
    %v1802 = vsub.s32 %v1801, 2
    %vm1803 = vcmp.gt.s32.totalorder 0, %v1802
    %v1804 = vsel %vm1803, 0, %v1802
    %v1805 = vsub.s32 32, %v1804
    %v1806 = vshll.u32 %v1797, %v1804
    %v1807 = vshrl.u32 %v1789, %v1805
    %v1808 = vor.u32 %v1806, %v1807
    %v1809 = vsub.s32 4294967266, %v1804
    %v1810 = vadd.s32 %v1809, 127
    %v1811 = vshll.u32 %v1810, 23
    %v1812 = vor.u32 4788187, %v1811
    %v1813 = vand.u32 2147483647, %v1812
    %v1815 = vcvt.s32.f32 %v1808
    %v1816 = vmul.f32 %v1815, %v1813
    %v1817 = vxor.u32 %v1816, 2147483648
    %v1818 = vsel %vm1735, %v1817, %v1816
    %v1819 = vsub.s32 4, %v1795
    %v1820 = vsel %vm1735, %v1819, %v1795
    %v1821 = vsel %vm1734, %v697, %v1818
    %v1822 = vsel %vm1734, 0, %v1820
    %v1823 = vcosq.f32.pop %v1821
    %v1824 = vsinq.f32.pop %v1821
    %vm1825 = vweird.f32 %v697
    %v1826 = vand.u32 %v1822, 3
    %vm1827 = vcmp.lt.s32.totalorder %v1826, 2
    %vm1828 = vcmp.eq.s32.totalorder %v1826, 0
    %v1829 = vxor.u32 %v1824, 2147483648
    %v1830 = vsel %vm1828, %v1823, %v1829
    %vm1831 = vcmp.eq.s32.totalorder %v1826, 2
    %v1832 = vxor.u32 %v1823, 2147483648
    %v1833 = vsel %vm1831, %v1832, %v1824
    %v1834 = vsel %vm1827, %v1830, %v1833
    %v1835 = vsel %vm1825, nan, %v1834
    %v1836 = vand.u32 2147483647, %v698
    %vm1837 = vcmp.le.f32.partialorder %v1836, 0.7853982
    %vm1838 = vcmp.lt.s32.totalorder %v698, 0
    %v1839 = vand.u32 %v698, 2139095040
    %v1840 = vshrl.u32 %v1839, 23
    %v1841 = vsub.s32 %v1840, 127
    %v1842 = vand.u32 2147483647, %v698
    %v1843 = vand.u32 %v1842, 8388607
    %v1844 = vor.u32 %v1843, 8388608
    %v1845 = vsub.s32 0, %v1844
    %v1846 = vadd.s32 %v1841, 1
    %vm1847 = vcmp.gt.s32.totalorder %v1846, 0
    %v1848 = vsel %vm1847, %v1846, 0
    %v1849 = vshrl.u32 %v1848, 5
    %v1850 = vand.u32 %v1848, 31
    %v1851 = vsub.s32 32, %v1850
    %v1852 = vshrl.u32 683565275, %v1851
    %v1853 = vshll.u32 683565275, %v1850
    %v1854 = vshrl.u32 2475754826, %v1851
    %v1855 = vor.u32 %v1853, %v1854
    %v1856 = vshll.u32 2475754826, %v1850
    %v1857 = vshrl.u32 2131351028, %v1851
    %v1858 = vor.u32 %v1856, %v1857
    %v1859 = vshll.u32 2131351028, %v1850
    %v1860 = vshrl.u32 2102212464, %v1851
    %v1861 = vor.u32 %v1859, %v1860
    %v1862 = vshll.u32 2102212464, %v1850
    %v1863 = vshrl.u32 920167782, %v1851
    %v1864 = vor.u32 %v1862, %v1863
    %v1865 = vshll.u32 920167782, %v1850
    %v1866 = vshrl.u32 1326507024, %v1851
    %v1867 = vor.u32 %v1865, %v1866
    %vm1868 = vcmp.lt.s32.totalorder %v1849, 1
    %vm1869 = vcmp.lt.s32.totalorder %v1849, 2
    %vm1870 = vcmp.lt.s32.totalorder %v1849, 3
    %vm1871 = vcmp.lt.s32.totalorder %v1849, 4
    %v1872 = vsel %vm1868, %v1852, %v1855
    %v1873 = vsel %vm1871, %v1861, 2102212464
    %v1874 = vsel %vm1870, %v1858, %v1873
    %v1875 = vsel %vm1869, %v1872, %v1874
    %v1876 = vsel %vm1868, %v1855, %v1858
    %v1877 = vsel %vm1871, %v1864, 920167782
    %v1878 = vsel %vm1870, %v1861, %v1877
    %v1879 = vsel %vm1869, %v1876, %v1878
    %v1880 = vsel %vm1868, %v1858, %v1861
    %v1881 = vsel %vm1871, %v1867, 1326507024
    %v1882 = vsel %vm1870, %v1864, %v1881
    %v1883 = vsel %vm1869, %v1880, %v1882
    %v1884 = vshll.u32 %v1844, 8
    %v1885 = vmul.u32.u64.compose %v1884, %v1883
    %v1886 = vextract.low.u32 %v1885
    %v1887 = vextract.high.u32 %v1885
    %v1888 = vmul.u32.u64.compose %v1884, %v1879
    %v1889 = vextract.low.u32 %v1888
    %v1890 = vextract.high.u32 %v1888
    %v1891 = vmul.u32 %v1884, %v1875
    %v1892 = vadd.s32 %v1887, %v1889
    %vm1893 = vc.u32 %v1887, %v1889
    %v1894 = vadd.s32 %v1890, 1
    %v1895 = vsel %vm1893, %v1894, %v1890
    %v1896 = vadd.s32 %v1891, %v1895
    %v1897 = vadd.s32 %v1896, 536870912
    %v1898 = vshrl.u32 %v1897, 30
    %v1899 = vshll.u32 %v1898, 30
    %v1900 = vsub.s32 %v1896, %v1899
    %vm1901 = vcmp.lt.s32.totalorder %v1900, 0
    %v1902 = vsub.s32 0, %v1900
    %v1903 = vsel %vm1901, %v1902, %v1900
    %v1904 = vclz %v1903
    %v1905 = vsub.s32 %v1904, 2
    %vm1906 = vcmp.gt.s32.totalorder 0, %v1905
    %v1907 = vsel %vm1906, 0, %v1905
    %v1908 = vsub.s32 32, %v1907
    %v1909 = vshll.u32 %v1900, %v1907
    %v1910 = vshrl.u32 %v1892, %v1908
    %v1911 = vor.u32 %v1909, %v1910
    %v1912 = vsub.s32 4294967266, %v1907
    %v1913 = vadd.s32 %v1912, 127
    %v1914 = vshll.u32 %v1913, 23
    %v1915 = vor.u32 4788187, %v1914
    %v1916 = vand.u32 2147483647, %v1915
    %v1918 = vcvt.s32.f32 %v1911
    %v1919 = vmul.f32 %v1918, %v1916
    %v1920 = vxor.u32 %v1919, 2147483648
    %v1921 = vsel %vm1838, %v1920, %v1919
    %v1922 = vsub.s32 4, %v1898
    %v1923 = vsel %vm1838, %v1922, %v1898
    %v1924 = vsel %vm1837, %v698, %v1921
    %v1925 = vsel %vm1837, 0, %v1923
    %v1926 = vcosq.f32.pop %v1924
    %v1927 = vsinq.f32.pop %v1924
    %vm1928 = vweird.f32 %v698
    %v1929 = vand.u32 %v1925, 3
    %vm1930 = vcmp.lt.s32.totalorder %v1929, 2
    %vm1931 = vcmp.eq.s32.totalorder %v1929, 0
    %v1932 = vxor.u32 %v1927, 2147483648
    %v1933 = vsel %vm1931, %v1926, %v1932
    %vm1934 = vcmp.eq.s32.totalorder %v1929, 2
    %v1935 = vxor.u32 %v1926, 2147483648
    %v1936 = vsel %vm1934, %v1935, %v1927
    %v1937 = vsel %vm1930, %v1933, %v1936
    %v1938 = vsel %vm1928, nan, %v1937
    %v1939 = vand.u32 2147483647, %v699
    %vm1940 = vcmp.le.f32.partialorder %v1939, 0.7853982
    %vm1941 = vcmp.lt.s32.totalorder %v699, 0
    %v1942 = vand.u32 %v699, 2139095040
    %v1943 = vshrl.u32 %v1942, 23
    %v1944 = vsub.s32 %v1943, 127
    %v1945 = vand.u32 2147483647, %v699
    %v1946 = vand.u32 %v1945, 8388607
    %v1947 = vor.u32 %v1946, 8388608
    %v1948 = vsub.s32 0, %v1947
    %v1949 = vadd.s32 %v1944, 1
    %vm1950 = vcmp.gt.s32.totalorder %v1949, 0
    %v1951 = vsel %vm1950, %v1949, 0
    %v1952 = vshrl.u32 %v1951, 5
    %v1953 = vand.u32 %v1951, 31
    %v1954 = vsub.s32 32, %v1953
    %v1955 = vshrl.u32 683565275, %v1954
    %v1956 = vshll.u32 683565275, %v1953
    %v1957 = vshrl.u32 2475754826, %v1954
    %v1958 = vor.u32 %v1956, %v1957
    %v1959 = vshll.u32 2475754826, %v1953
    %v1960 = vshrl.u32 2131351028, %v1954
    %v1961 = vor.u32 %v1959, %v1960
    %v1962 = vshll.u32 2131351028, %v1953
    %v1963 = vshrl.u32 2102212464, %v1954
    %v1964 = vor.u32 %v1962, %v1963
    %v1965 = vshll.u32 2102212464, %v1953
    %v1966 = vshrl.u32 920167782, %v1954
    %v1967 = vor.u32 %v1965, %v1966
    %v1968 = vshll.u32 920167782, %v1953
    %v1969 = vshrl.u32 1326507024, %v1954
    %v1970 = vor.u32 %v1968, %v1969
    %vm1971 = vcmp.lt.s32.totalorder %v1952, 1
    %vm1972 = vcmp.lt.s32.totalorder %v1952, 2
    %vm1973 = vcmp.lt.s32.totalorder %v1952, 3
    %vm1974 = vcmp.lt.s32.totalorder %v1952, 4
    %v1975 = vsel %vm1971, %v1955, %v1958
    %v1976 = vsel %vm1974, %v1964, 2102212464
    %v1977 = vsel %vm1973, %v1961, %v1976
    %v1978 = vsel %vm1972, %v1975, %v1977
    %v1979 = vsel %vm1971, %v1958, %v1961
    %v1980 = vsel %vm1974, %v1967, 920167782
    %v1981 = vsel %vm1973, %v1964, %v1980
    %v1982 = vsel %vm1972, %v1979, %v1981
    %v1983 = vsel %vm1971, %v1961, %v1964
    %v1984 = vsel %vm1974, %v1970, 1326507024
    %v1985 = vsel %vm1973, %v1967, %v1984
    %v1986 = vsel %vm1972, %v1983, %v1985
    %v1987 = vshll.u32 %v1947, 8
    %v1988 = vmul.u32.u64.compose %v1987, %v1986
    %v1989 = vextract.low.u32 %v1988
    %v1990 = vextract.high.u32 %v1988
    %v1991 = vmul.u32.u64.compose %v1987, %v1982
    %v1992 = vextract.low.u32 %v1991
    %v1993 = vextract.high.u32 %v1991
    %v1994 = vmul.u32 %v1987, %v1978
    %v1995 = vadd.s32 %v1990, %v1992
    %vm1996 = vc.u32 %v1990, %v1992
    %v1997 = vadd.s32 %v1993, 1
    %v1998 = vsel %vm1996, %v1997, %v1993
    %v1999 = vadd.s32 %v1994, %v1998
    %v2000 = vadd.s32 %v1999, 536870912
    %v2001 = vshrl.u32 %v2000, 30
    %v2002 = vshll.u32 %v2001, 30
    %v2003 = vsub.s32 %v1999, %v2002
    %vm2004 = vcmp.lt.s32.totalorder %v2003, 0
    %v2005 = vsub.s32 0, %v2003
    %v2006 = vsel %vm2004, %v2005, %v2003
    %v2007 = vclz %v2006
    %v2008 = vsub.s32 %v2007, 2
    %vm2009 = vcmp.gt.s32.totalorder 0, %v2008
    %v2010 = vsel %vm2009, 0, %v2008
    %v2011 = vsub.s32 32, %v2010
    %v2012 = vshll.u32 %v2003, %v2010
    %v2013 = vshrl.u32 %v1995, %v2011
    %v2014 = vor.u32 %v2012, %v2013
    %v2015 = vsub.s32 4294967266, %v2010
    %v2016 = vadd.s32 %v2015, 127
    %v2017 = vshll.u32 %v2016, 23
    %v2018 = vor.u32 4788187, %v2017
    %v2019 = vand.u32 2147483647, %v2018
    %v2021 = vcvt.s32.f32 %v2014
    %v2022 = vmul.f32 %v2021, %v2019
    %v2023 = vxor.u32 %v2022, 2147483648
    %v2024 = vsel %vm1941, %v2023, %v2022
    %v2025 = vsub.s32 4, %v2001
    %v2026 = vsel %vm1941, %v2025, %v2001
    %v2027 = vsel %vm1940, %v699, %v2024
    %v2028 = vsel %vm1940, 0, %v2026
    %v2029 = vcosq.f32.pop %v2027
    %v2030 = vsinq.f32.pop %v2027
    %vm2031 = vweird.f32 %v699
    %v2032 = vand.u32 %v2028, 3
    %vm2033 = vcmp.lt.s32.totalorder %v2032, 2
    %vm2034 = vcmp.eq.s32.totalorder %v2032, 0
    %v2035 = vxor.u32 %v2030, 2147483648
    %v2036 = vsel %vm2034, %v2029, %v2035
    %vm2037 = vcmp.eq.s32.totalorder %v2032, 2
    %v2038 = vxor.u32 %v2029, 2147483648
    %v2039 = vsel %vm2037, %v2038, %v2030
    %v2040 = vsel %vm2033, %v2036, %v2039
    %v2041 = vsel %vm2031, nan, %v2040
    %v2042 = vand.u32 2147483647, %v700
    %vm2043 = vcmp.le.f32.partialorder %v2042, 0.7853982
    %vm2044 = vcmp.lt.s32.totalorder %v700, 0
    %v2045 = vand.u32 %v700, 2139095040
    %v2046 = vshrl.u32 %v2045, 23
    %v2047 = vsub.s32 %v2046, 127
    %v2048 = vand.u32 2147483647, %v700
    %v2049 = vand.u32 %v2048, 8388607
    %v2050 = vor.u32 %v2049, 8388608
    %v2051 = vsub.s32 0, %v2050
    %v2052 = vadd.s32 %v2047, 1
    %vm2053 = vcmp.gt.s32.totalorder %v2052, 0
    %v2054 = vsel %vm2053, %v2052, 0
    %v2055 = vshrl.u32 %v2054, 5
    %v2056 = vand.u32 %v2054, 31
    %v2057 = vsub.s32 32, %v2056
    %v2058 = vshrl.u32 683565275, %v2057
    %v2059 = vshll.u32 683565275, %v2056
    %v2060 = vshrl.u32 2475754826, %v2057
    %v2061 = vor.u32 %v2059, %v2060
    %v2062 = vshll.u32 2475754826, %v2056
    %v2063 = vshrl.u32 2131351028, %v2057
    %v2064 = vor.u32 %v2062, %v2063
    %v2065 = vshll.u32 2131351028, %v2056
    %v2066 = vshrl.u32 2102212464, %v2057
    %v2067 = vor.u32 %v2065, %v2066
    %v2068 = vshll.u32 2102212464, %v2056
    %v2069 = vshrl.u32 920167782, %v2057
    %v2070 = vor.u32 %v2068, %v2069
    %v2071 = vshll.u32 920167782, %v2056
    %v2072 = vshrl.u32 1326507024, %v2057
    %v2073 = vor.u32 %v2071, %v2072
    %vm2074 = vcmp.lt.s32.totalorder %v2055, 1
    %vm2075 = vcmp.lt.s32.totalorder %v2055, 2
    %vm2076 = vcmp.lt.s32.totalorder %v2055, 3
    %vm2077 = vcmp.lt.s32.totalorder %v2055, 4
    %v2078 = vsel %vm2074, %v2058, %v2061
    %v2079 = vsel %vm2077, %v2067, 2102212464
    %v2080 = vsel %vm2076, %v2064, %v2079
    %v2081 = vsel %vm2075, %v2078, %v2080
    %v2082 = vsel %vm2074, %v2061, %v2064
    %v2083 = vsel %vm2077, %v2070, 920167782
    %v2084 = vsel %vm2076, %v2067, %v2083
    %v2085 = vsel %vm2075, %v2082, %v2084
    %v2086 = vsel %vm2074, %v2064, %v2067
    %v2087 = vsel %vm2077, %v2073, 1326507024
    %v2088 = vsel %vm2076, %v2070, %v2087
    %v2089 = vsel %vm2075, %v2086, %v2088
    %v2090 = vshll.u32 %v2050, 8
    %v2091 = vmul.u32.u64.compose %v2090, %v2089
    %v2092 = vextract.low.u32 %v2091
    %v2093 = vextract.high.u32 %v2091
    %v2094 = vmul.u32.u64.compose %v2090, %v2085
    %v2095 = vextract.low.u32 %v2094
    %v2096 = vextract.high.u32 %v2094
    %v2097 = vmul.u32 %v2090, %v2081
    %v2098 = vadd.s32 %v2093, %v2095
    %vm2099 = vc.u32 %v2093, %v2095
    %v2100 = vadd.s32 %v2096, 1
    %v2101 = vsel %vm2099, %v2100, %v2096
    %v2102 = vadd.s32 %v2097, %v2101
    %v2103 = vadd.s32 %v2102, 536870912
    %v2104 = vshrl.u32 %v2103, 30
    %v2105 = vshll.u32 %v2104, 30
    %v2106 = vsub.s32 %v2102, %v2105
    %vm2107 = vcmp.lt.s32.totalorder %v2106, 0
    %v2108 = vsub.s32 0, %v2106
    %v2109 = vsel %vm2107, %v2108, %v2106
    %v2110 = vclz %v2109
    %v2111 = vsub.s32 %v2110, 2
    %vm2112 = vcmp.gt.s32.totalorder 0, %v2111
    %v2113 = vsel %vm2112, 0, %v2111
    %v2114 = vsub.s32 32, %v2113
    %v2115 = vshll.u32 %v2106, %v2113
    %v2116 = vshrl.u32 %v2098, %v2114
    %v2117 = vor.u32 %v2115, %v2116
    %v2118 = vsub.s32 4294967266, %v2113
    %v2119 = vadd.s32 %v2118, 127
    %v2120 = vshll.u32 %v2119, 23
    %v2121 = vor.u32 4788187, %v2120
    %v2122 = vand.u32 2147483647, %v2121
    %v2124 = vcvt.s32.f32 %v2117
    %v2125 = vmul.f32 %v2124, %v2122
    %v2126 = vxor.u32 %v2125, 2147483648
    %v2127 = vsel %vm2044, %v2126, %v2125
    %v2128 = vsub.s32 4, %v2104
    %v2129 = vsel %vm2044, %v2128, %v2104
    %v2130 = vsel %vm2043, %v700, %v2127
    %v2131 = vsel %vm2043, 0, %v2129
    %v2132 = vcosq.f32.pop %v2130
    %v2133 = vsinq.f32.pop %v2130
    %vm2134 = vweird.f32 %v700
    %v2135 = vand.u32 %v2131, 3
    %vm2136 = vcmp.lt.s32.totalorder %v2135, 2
    %vm2137 = vcmp.eq.s32.totalorder %v2135, 0
    %v2138 = vxor.u32 %v2133, 2147483648
    %v2139 = vsel %vm2137, %v2132, %v2138
    %vm2140 = vcmp.eq.s32.totalorder %v2135, 2
    %v2141 = vxor.u32 %v2132, 2147483648
    %v2142 = vsel %vm2140, %v2141, %v2133
    %v2143 = vsel %vm2136, %v2139, %v2142
    %v2144 = vsel %vm2134, nan, %v2143
    %v2145 = vand.u32 2147483647, %v701
    %vm2146 = vcmp.le.f32.partialorder %v2145, 0.7853982
    %vm2147 = vcmp.lt.s32.totalorder %v701, 0
    %v2148 = vand.u32 %v701, 2139095040
    %v2149 = vshrl.u32 %v2148, 23
    %v2150 = vsub.s32 %v2149, 127
    %v2151 = vand.u32 2147483647, %v701
    %v2152 = vand.u32 %v2151, 8388607
    %v2153 = vor.u32 %v2152, 8388608
    %v2154 = vsub.s32 0, %v2153
    %v2155 = vadd.s32 %v2150, 1
    %vm2156 = vcmp.gt.s32.totalorder %v2155, 0
    %v2157 = vsel %vm2156, %v2155, 0
    %v2158 = vshrl.u32 %v2157, 5
    %v2159 = vand.u32 %v2157, 31
    %v2160 = vsub.s32 32, %v2159
    %v2161 = vshrl.u32 683565275, %v2160
    %v2162 = vshll.u32 683565275, %v2159
    %v2163 = vshrl.u32 2475754826, %v2160
    %v2164 = vor.u32 %v2162, %v2163
    %v2165 = vshll.u32 2475754826, %v2159
    %v2166 = vshrl.u32 2131351028, %v2160
    %v2167 = vor.u32 %v2165, %v2166
    %v2168 = vshll.u32 2131351028, %v2159
    %v2169 = vshrl.u32 2102212464, %v2160
    %v2170 = vor.u32 %v2168, %v2169
    %v2171 = vshll.u32 2102212464, %v2159
    %v2172 = vshrl.u32 920167782, %v2160
    %v2173 = vor.u32 %v2171, %v2172
    %v2174 = vshll.u32 920167782, %v2159
    %v2175 = vshrl.u32 1326507024, %v2160
    %v2176 = vor.u32 %v2174, %v2175
    %vm2177 = vcmp.lt.s32.totalorder %v2158, 1
    %vm2178 = vcmp.lt.s32.totalorder %v2158, 2
    %vm2179 = vcmp.lt.s32.totalorder %v2158, 3
    %vm2180 = vcmp.lt.s32.totalorder %v2158, 4
    %v2181 = vsel %vm2177, %v2161, %v2164
    %v2182 = vsel %vm2180, %v2170, 2102212464
    %v2183 = vsel %vm2179, %v2167, %v2182
    %v2184 = vsel %vm2178, %v2181, %v2183
    %v2185 = vsel %vm2177, %v2164, %v2167
    %v2186 = vsel %vm2180, %v2173, 920167782
    %v2187 = vsel %vm2179, %v2170, %v2186
    %v2188 = vsel %vm2178, %v2185, %v2187
    %v2189 = vsel %vm2177, %v2167, %v2170
    %v2190 = vsel %vm2180, %v2176, 1326507024
    %v2191 = vsel %vm2179, %v2173, %v2190
    %v2192 = vsel %vm2178, %v2189, %v2191
    %v2193 = vshll.u32 %v2153, 8
    %v2194 = vmul.u32.u64.compose %v2193, %v2192
    %v2195 = vextract.low.u32 %v2194
    %v2196 = vextract.high.u32 %v2194
    %v2197 = vmul.u32.u64.compose %v2193, %v2188
    %v2198 = vextract.low.u32 %v2197
    %v2199 = vextract.high.u32 %v2197
    %v2200 = vmul.u32 %v2193, %v2184
    %v2201 = vadd.s32 %v2196, %v2198
    %vm2202 = vc.u32 %v2196, %v2198
    %v2203 = vadd.s32 %v2199, 1
    %v2204 = vsel %vm2202, %v2203, %v2199
    %v2205 = vadd.s32 %v2200, %v2204
    %v2206 = vadd.s32 %v2205, 536870912
    %v2207 = vshrl.u32 %v2206, 30
    %v2208 = vshll.u32 %v2207, 30
    %v2209 = vsub.s32 %v2205, %v2208
    %vm2210 = vcmp.lt.s32.totalorder %v2209, 0
    %v2211 = vsub.s32 0, %v2209
    %v2212 = vsel %vm2210, %v2211, %v2209
    %v2213 = vclz %v2212
    %v2214 = vsub.s32 %v2213, 2
    %vm2215 = vcmp.gt.s32.totalorder 0, %v2214
    %v2216 = vsel %vm2215, 0, %v2214
    %v2217 = vsub.s32 32, %v2216
    %v2218 = vshll.u32 %v2209, %v2216
    %v2219 = vshrl.u32 %v2201, %v2217
    %v2220 = vor.u32 %v2218, %v2219
    %v2221 = vsub.s32 4294967266, %v2216
    %v2222 = vadd.s32 %v2221, 127
    %v2223 = vshll.u32 %v2222, 23
    %v2224 = vor.u32 4788187, %v2223
    %v2225 = vand.u32 2147483647, %v2224
    %v2227 = vcvt.s32.f32 %v2220
    %v2228 = vmul.f32 %v2227, %v2225
    %v2229 = vxor.u32 %v2228, 2147483648
    %v2230 = vsel %vm2147, %v2229, %v2228
    %v2231 = vsub.s32 4, %v2207
    %v2232 = vsel %vm2147, %v2231, %v2207
    %v2233 = vsel %vm2146, %v701, %v2230
    %v2234 = vsel %vm2146, 0, %v2232
    %v2235 = vcosq.f32.pop %v2233
    %v2236 = vsinq.f32.pop %v2233
    %vm2237 = vweird.f32 %v701
    %v2238 = vand.u32 %v2234, 3
    %vm2239 = vcmp.lt.s32.totalorder %v2238, 2
    %vm2240 = vcmp.eq.s32.totalorder %v2238, 0
    %v2241 = vxor.u32 %v2236, 2147483648
    %v2242 = vsel %vm2240, %v2235, %v2241
    %vm2243 = vcmp.eq.s32.totalorder %v2238, 2
    %v2244 = vxor.u32 %v2235, 2147483648
    %v2245 = vsel %vm2243, %v2244, %v2236
    %v2246 = vsel %vm2239, %v2242, %v2245
    %v2247 = vsel %vm2237, nan, %v2246
    %v2248 = vand.u32 2147483647, %v702
    %vm2249 = vcmp.le.f32.partialorder %v2248, 0.7853982
    %vm2250 = vcmp.lt.s32.totalorder %v702, 0
    %v2251 = vand.u32 %v702, 2139095040
    %v2252 = vshrl.u32 %v2251, 23
    %v2253 = vsub.s32 %v2252, 127
    %v2254 = vand.u32 2147483647, %v702
    %v2255 = vand.u32 %v2254, 8388607
    %v2256 = vor.u32 %v2255, 8388608
    %v2257 = vsub.s32 0, %v2256
    %v2258 = vadd.s32 %v2253, 1
    %vm2259 = vcmp.gt.s32.totalorder %v2258, 0
    %v2260 = vsel %vm2259, %v2258, 0
    %v2261 = vshrl.u32 %v2260, 5
    %v2262 = vand.u32 %v2260, 31
    %v2263 = vsub.s32 32, %v2262
    %v2264 = vshrl.u32 683565275, %v2263
    %v2265 = vshll.u32 683565275, %v2262
    %v2266 = vshrl.u32 2475754826, %v2263
    %v2267 = vor.u32 %v2265, %v2266
    %v2268 = vshll.u32 2475754826, %v2262
    %v2269 = vshrl.u32 2131351028, %v2263
    %v2270 = vor.u32 %v2268, %v2269
    %v2271 = vshll.u32 2131351028, %v2262
    %v2272 = vshrl.u32 2102212464, %v2263
    %v2273 = vor.u32 %v2271, %v2272
    %v2274 = vshll.u32 2102212464, %v2262
    %v2275 = vshrl.u32 920167782, %v2263
    %v2276 = vor.u32 %v2274, %v2275
    %v2277 = vshll.u32 920167782, %v2262
    %v2278 = vshrl.u32 1326507024, %v2263
    %v2279 = vor.u32 %v2277, %v2278
    %vm2280 = vcmp.lt.s32.totalorder %v2261, 1
    %vm2281 = vcmp.lt.s32.totalorder %v2261, 2
    %vm2282 = vcmp.lt.s32.totalorder %v2261, 3
    %vm2283 = vcmp.lt.s32.totalorder %v2261, 4
    %v2284 = vsel %vm2280, %v2264, %v2267
    %v2285 = vsel %vm2283, %v2273, 2102212464
    %v2286 = vsel %vm2282, %v2270, %v2285
    %v2287 = vsel %vm2281, %v2284, %v2286
    %v2288 = vsel %vm2280, %v2267, %v2270
    %v2289 = vsel %vm2283, %v2276, 920167782
    %v2290 = vsel %vm2282, %v2273, %v2289
    %v2291 = vsel %vm2281, %v2288, %v2290
    %v2292 = vsel %vm2280, %v2270, %v2273
    %v2293 = vsel %vm2283, %v2279, 1326507024
    %v2294 = vsel %vm2282, %v2276, %v2293
    %v2295 = vsel %vm2281, %v2292, %v2294
    %v2296 = vshll.u32 %v2256, 8
    %v2297 = vmul.u32.u64.compose %v2296, %v2295
    %v2298 = vextract.low.u32 %v2297
    %v2299 = vextract.high.u32 %v2297
    %v2300 = vmul.u32.u64.compose %v2296, %v2291
    %v2301 = vextract.low.u32 %v2300
    %v2302 = vextract.high.u32 %v2300
    %v2303 = vmul.u32 %v2296, %v2287
    %v2304 = vadd.s32 %v2299, %v2301
    %vm2305 = vc.u32 %v2299, %v2301
    %v2306 = vadd.s32 %v2302, 1
    %v2307 = vsel %vm2305, %v2306, %v2302
    %v2308 = vadd.s32 %v2303, %v2307
    %v2309 = vadd.s32 %v2308, 536870912
    %v2310 = vshrl.u32 %v2309, 30
    %v2311 = vshll.u32 %v2310, 30
    %v2312 = vsub.s32 %v2308, %v2311
    %vm2313 = vcmp.lt.s32.totalorder %v2312, 0
    %v2314 = vsub.s32 0, %v2312
    %v2315 = vsel %vm2313, %v2314, %v2312
    %v2316 = vclz %v2315
    %v2317 = vsub.s32 %v2316, 2
    %vm2318 = vcmp.gt.s32.totalorder 0, %v2317
    %v2319 = vsel %vm2318, 0, %v2317
    %v2320 = vsub.s32 32, %v2319
    %v2321 = vshll.u32 %v2312, %v2319
    %v2322 = vshrl.u32 %v2304, %v2320
    %v2323 = vor.u32 %v2321, %v2322
    %v2324 = vsub.s32 4294967266, %v2319
    %v2325 = vadd.s32 %v2324, 127
    %v2326 = vshll.u32 %v2325, 23
    %v2327 = vor.u32 4788187, %v2326
    %v2328 = vand.u32 2147483647, %v2327
    %v2330 = vcvt.s32.f32 %v2323
    %v2331 = vmul.f32 %v2330, %v2328
    %v2332 = vxor.u32 %v2331, 2147483648
    %v2333 = vsel %vm2250, %v2332, %v2331
    %v2334 = vsub.s32 4, %v2310
    %v2335 = vsel %vm2250, %v2334, %v2310
    %v2336 = vsel %vm2249, %v702, %v2333
    %v2337 = vsel %vm2249, 0, %v2335
    %v2338 = vcosq.f32.pop %v2336
    %v2339 = vsinq.f32.pop %v2336
    %vm2340 = vweird.f32 %v702
    %v2341 = vand.u32 %v2337, 3
    %vm2342 = vcmp.lt.s32.totalorder %v2341, 2
    %vm2343 = vcmp.eq.s32.totalorder %v2341, 0
    %v2344 = vxor.u32 %v2339, 2147483648
    %v2345 = vsel %vm2343, %v2338, %v2344
    %vm2346 = vcmp.eq.s32.totalorder %v2341, 2
    %v2347 = vxor.u32 %v2338, 2147483648
    %v2348 = vsel %vm2346, %v2347, %v2339
    %v2349 = vsel %vm2342, %v2345, %v2348
    %v2350 = vsel %vm2340, nan, %v2349
    %v2351 = vmul.f32 %v581, %v805
    %v2352 = vmul.f32 %v588, %v908
    %v2353 = vmul.f32 %v595, %v1011
    %v2354 = vmul.f32 %v602, %v1114
    %v2355 = vmul.f32 %v609, %v1217
    %v2356 = vmul.f32 %v616, %v1320
    %v2357 = vmul.f32 %v623, %v1423
    %v2358 = vmul.f32 %v630, %v1526
    %v2359 = vmul.f32 %v637, %v1629
    %v2360 = vmul.f32 %v644, %v1732
    %v2361 = vmul.f32 %v651, %v1835
    %v2362 = vmul.f32 %v658, %v1938
    %v2363 = vmul.f32 %v665, %v2041
    %v2364 = vmul.f32 %v672, %v2144
    %v2365 = vmul.f32 %v679, %v2247
    %v2366 = vmul.f32 %v686, %v2350
    %v2367 = vand.u32 2147483647, %v687
    %vm2368 = vcmp.le.f32.partialorder %v2367, 0.7853982
    %vm2369 = vcmp.lt.s32.totalorder %v687, 0
    %v2370 = vand.u32 %v687, 2139095040
    %v2371 = vshrl.u32 %v2370, 23
    %v2372 = vsub.s32 %v2371, 127
    %v2373 = vand.u32 2147483647, %v687
    %v2374 = vand.u32 %v2373, 8388607
    %v2375 = vor.u32 %v2374, 8388608
    %v2376 = vsub.s32 0, %v2375
    %v2377 = vadd.s32 %v2372, 1
    %vm2378 = vcmp.gt.s32.totalorder %v2377, 0
    %v2379 = vsel %vm2378, %v2377, 0
    %v2380 = vshrl.u32 %v2379, 5
    %v2381 = vand.u32 %v2379, 31
    %v2382 = vsub.s32 32, %v2381
    %v2383 = vshrl.u32 683565275, %v2382
    %v2384 = vshll.u32 683565275, %v2381
    %v2385 = vshrl.u32 2475754826, %v2382
    %v2386 = vor.u32 %v2384, %v2385
    %v2387 = vshll.u32 2475754826, %v2381
    %v2388 = vshrl.u32 2131351028, %v2382
    %v2389 = vor.u32 %v2387, %v2388
    %v2390 = vshll.u32 2131351028, %v2381
    %v2391 = vshrl.u32 2102212464, %v2382
    %v2392 = vor.u32 %v2390, %v2391
    %v2393 = vshll.u32 2102212464, %v2381
    %v2394 = vshrl.u32 920167782, %v2382
    %v2395 = vor.u32 %v2393, %v2394
    %v2396 = vshll.u32 920167782, %v2381
    %v2397 = vshrl.u32 1326507024, %v2382
    %v2398 = vor.u32 %v2396, %v2397
    %vm2399 = vcmp.lt.s32.totalorder %v2380, 1
    %vm2400 = vcmp.lt.s32.totalorder %v2380, 2
    %vm2401 = vcmp.lt.s32.totalorder %v2380, 3
    %vm2402 = vcmp.lt.s32.totalorder %v2380, 4
    %v2403 = vsel %vm2399, %v2383, %v2386
    %v2404 = vsel %vm2402, %v2392, 2102212464
    %v2405 = vsel %vm2401, %v2389, %v2404
    %v2406 = vsel %vm2400, %v2403, %v2405
    %v2407 = vsel %vm2399, %v2386, %v2389
    %v2408 = vsel %vm2402, %v2395, 920167782
    %v2409 = vsel %vm2401, %v2392, %v2408
    %v2410 = vsel %vm2400, %v2407, %v2409
    %v2411 = vsel %vm2399, %v2389, %v2392
    %v2412 = vsel %vm2402, %v2398, 1326507024
    %v2413 = vsel %vm2401, %v2395, %v2412
    %v2414 = vsel %vm2400, %v2411, %v2413
    %v2415 = vshll.u32 %v2375, 8
    %v2416 = vmul.u32.u64.compose %v2415, %v2414
    %v2417 = vextract.low.u32 %v2416
    %v2418 = vextract.high.u32 %v2416
    %v2419 = vmul.u32.u64.compose %v2415, %v2410
    %v2420 = vextract.low.u32 %v2419
    %v2421 = vextract.high.u32 %v2419
    %v2422 = vmul.u32 %v2415, %v2406
    %v2423 = vadd.s32 %v2418, %v2420
    %vm2424 = vc.u32 %v2418, %v2420
    %v2425 = vadd.s32 %v2421, 1
    %v2426 = vsel %vm2424, %v2425, %v2421
    %v2427 = vadd.s32 %v2422, %v2426
    %v2428 = vadd.s32 %v2427, 536870912
    %v2429 = vshrl.u32 %v2428, 30
    %v2430 = vshll.u32 %v2429, 30
    %v2431 = vsub.s32 %v2427, %v2430
    %vm2432 = vcmp.lt.s32.totalorder %v2431, 0
    %v2433 = vsub.s32 0, %v2431
    %v2434 = vsel %vm2432, %v2433, %v2431
    %v2435 = vclz %v2434
    %v2436 = vsub.s32 %v2435, 2
    %vm2437 = vcmp.gt.s32.totalorder 0, %v2436
    %v2438 = vsel %vm2437, 0, %v2436
    %v2439 = vsub.s32 32, %v2438
    %v2440 = vshll.u32 %v2431, %v2438
    %v2441 = vshrl.u32 %v2423, %v2439
    %v2442 = vor.u32 %v2440, %v2441
    %v2443 = vsub.s32 4294967266, %v2438
    %v2444 = vadd.s32 %v2443, 127
    %v2445 = vshll.u32 %v2444, 23
    %v2446 = vor.u32 4788187, %v2445
    %v2447 = vand.u32 2147483647, %v2446
    %v2449 = vcvt.s32.f32 %v2442
    %v2450 = vmul.f32 %v2449, %v2447
    %v2451 = vxor.u32 %v2450, 2147483648
    %v2452 = vsel %vm2369, %v2451, %v2450
    %v2453 = vsub.s32 4, %v2429
    %v2454 = vsel %vm2369, %v2453, %v2429
    %v2455 = vsel %vm2368, %v687, %v2452
    %v2456 = vsel %vm2368, 0, %v2454
    %v2457 = vcosq.f32.pop %v2455
    %v2458 = vsinq.f32.pop %v2455
    %vm2459 = vweird.f32 %v687
    %v2460 = vadd.s32 %v2456, 3
    %v2461 = vand.u32 %v2460, 3
    %vm2462 = vcmp.lt.s32.totalorder %v2461, 2
    %vm2463 = vcmp.eq.s32.totalorder %v2461, 0
    %v2464 = vxor.u32 %v2458, 2147483648
    %v2465 = vsel %vm2463, %v2457, %v2464
    %vm2466 = vcmp.eq.s32.totalorder %v2461, 2
    %v2467 = vxor.u32 %v2457, 2147483648
    %v2468 = vsel %vm2466, %v2467, %v2458
    %v2469 = vsel %vm2462, %v2465, %v2468
    %v2470 = vsel %vm2459, nan, %v2469
    %v2471 = vand.u32 2147483647, %v688
    %vm2472 = vcmp.le.f32.partialorder %v2471, 0.7853982
    %vm2473 = vcmp.lt.s32.totalorder %v688, 0
    %v2474 = vand.u32 %v688, 2139095040
    %v2475 = vshrl.u32 %v2474, 23
    %v2476 = vsub.s32 %v2475, 127
    %v2477 = vand.u32 2147483647, %v688
    %v2478 = vand.u32 %v2477, 8388607
    %v2479 = vor.u32 %v2478, 8388608
    %v2480 = vsub.s32 0, %v2479
    %v2481 = vadd.s32 %v2476, 1
    %vm2482 = vcmp.gt.s32.totalorder %v2481, 0
    %v2483 = vsel %vm2482, %v2481, 0
    %v2484 = vshrl.u32 %v2483, 5
    %v2485 = vand.u32 %v2483, 31
    %v2486 = vsub.s32 32, %v2485
    %v2487 = vshrl.u32 683565275, %v2486
    %v2488 = vshll.u32 683565275, %v2485
    %v2489 = vshrl.u32 2475754826, %v2486
    %v2490 = vor.u32 %v2488, %v2489
    %v2491 = vshll.u32 2475754826, %v2485
    %v2492 = vshrl.u32 2131351028, %v2486
    %v2493 = vor.u32 %v2491, %v2492
    %v2494 = vshll.u32 2131351028, %v2485
    %v2495 = vshrl.u32 2102212464, %v2486
    %v2496 = vor.u32 %v2494, %v2495
    %v2497 = vshll.u32 2102212464, %v2485
    %v2498 = vshrl.u32 920167782, %v2486
    %v2499 = vor.u32 %v2497, %v2498
    %v2500 = vshll.u32 920167782, %v2485
    %v2501 = vshrl.u32 1326507024, %v2486
    %v2502 = vor.u32 %v2500, %v2501
    %vm2503 = vcmp.lt.s32.totalorder %v2484, 1
    %vm2504 = vcmp.lt.s32.totalorder %v2484, 2
    %vm2505 = vcmp.lt.s32.totalorder %v2484, 3
    %vm2506 = vcmp.lt.s32.totalorder %v2484, 4
    %v2507 = vsel %vm2503, %v2487, %v2490
    %v2508 = vsel %vm2506, %v2496, 2102212464
    %v2509 = vsel %vm2505, %v2493, %v2508
    %v2510 = vsel %vm2504, %v2507, %v2509
    %v2511 = vsel %vm2503, %v2490, %v2493
    %v2512 = vsel %vm2506, %v2499, 920167782
    %v2513 = vsel %vm2505, %v2496, %v2512
    %v2514 = vsel %vm2504, %v2511, %v2513
    %v2515 = vsel %vm2503, %v2493, %v2496
    %v2516 = vsel %vm2506, %v2502, 1326507024
    %v2517 = vsel %vm2505, %v2499, %v2516
    %v2518 = vsel %vm2504, %v2515, %v2517
    %v2519 = vshll.u32 %v2479, 8
    %v2520 = vmul.u32.u64.compose %v2519, %v2518
    %v2521 = vextract.low.u32 %v2520
    %v2522 = vextract.high.u32 %v2520
    %v2523 = vmul.u32.u64.compose %v2519, %v2514
    %v2524 = vextract.low.u32 %v2523
    %v2525 = vextract.high.u32 %v2523
    %v2526 = vmul.u32 %v2519, %v2510
    %v2527 = vadd.s32 %v2522, %v2524
    %vm2528 = vc.u32 %v2522, %v2524
    %v2529 = vadd.s32 %v2525, 1
    %v2530 = vsel %vm2528, %v2529, %v2525
    %v2531 = vadd.s32 %v2526, %v2530
    %v2532 = vadd.s32 %v2531, 536870912
    %v2533 = vshrl.u32 %v2532, 30
    %v2534 = vshll.u32 %v2533, 30
    %v2535 = vsub.s32 %v2531, %v2534
    %vm2536 = vcmp.lt.s32.totalorder %v2535, 0
    %v2537 = vsub.s32 0, %v2535
    %v2538 = vsel %vm2536, %v2537, %v2535
    %v2539 = vclz %v2538
    %v2540 = vsub.s32 %v2539, 2
    %vm2541 = vcmp.gt.s32.totalorder 0, %v2540
    %v2542 = vsel %vm2541, 0, %v2540
    %v2543 = vsub.s32 32, %v2542
    %v2544 = vshll.u32 %v2535, %v2542
    %v2545 = vshrl.u32 %v2527, %v2543
    %v2546 = vor.u32 %v2544, %v2545
    %v2547 = vsub.s32 4294967266, %v2542
    %v2548 = vadd.s32 %v2547, 127
    %v2549 = vshll.u32 %v2548, 23
    %v2550 = vor.u32 4788187, %v2549
    %v2551 = vand.u32 2147483647, %v2550
    %v2553 = vcvt.s32.f32 %v2546
    %v2554 = vmul.f32 %v2553, %v2551
    %v2555 = vxor.u32 %v2554, 2147483648
    %v2556 = vsel %vm2473, %v2555, %v2554
    %v2557 = vsub.s32 4, %v2533
    %v2558 = vsel %vm2473, %v2557, %v2533
    %v2559 = vsel %vm2472, %v688, %v2556
    %v2560 = vsel %vm2472, 0, %v2558
    %v2561 = vcosq.f32.pop %v2559
    %v2562 = vsinq.f32.pop %v2559
    %vm2563 = vweird.f32 %v688
    %v2564 = vadd.s32 %v2560, 3
    %v2565 = vand.u32 %v2564, 3
    %vm2566 = vcmp.lt.s32.totalorder %v2565, 2
    %vm2567 = vcmp.eq.s32.totalorder %v2565, 0
    %v2568 = vxor.u32 %v2562, 2147483648
    %v2569 = vsel %vm2567, %v2561, %v2568
    %vm2570 = vcmp.eq.s32.totalorder %v2565, 2
    %v2571 = vxor.u32 %v2561, 2147483648
    %v2572 = vsel %vm2570, %v2571, %v2562
    %v2573 = vsel %vm2566, %v2569, %v2572
    %v2574 = vsel %vm2563, nan, %v2573
    %v2575 = vand.u32 2147483647, %v689
    %vm2576 = vcmp.le.f32.partialorder %v2575, 0.7853982
    %vm2577 = vcmp.lt.s32.totalorder %v689, 0
    %v2578 = vand.u32 %v689, 2139095040
    %v2579 = vshrl.u32 %v2578, 23
    %v2580 = vsub.s32 %v2579, 127
    %v2581 = vand.u32 2147483647, %v689
    %v2582 = vand.u32 %v2581, 8388607
    %v2583 = vor.u32 %v2582, 8388608
    %v2584 = vsub.s32 0, %v2583
    %v2585 = vadd.s32 %v2580, 1
    %vm2586 = vcmp.gt.s32.totalorder %v2585, 0
    %v2587 = vsel %vm2586, %v2585, 0
    %v2588 = vshrl.u32 %v2587, 5
    %v2589 = vand.u32 %v2587, 31
    %v2590 = vsub.s32 32, %v2589
    %v2591 = vshrl.u32 683565275, %v2590
    %v2592 = vshll.u32 683565275, %v2589
    %v2593 = vshrl.u32 2475754826, %v2590
    %v2594 = vor.u32 %v2592, %v2593
    %v2595 = vshll.u32 2475754826, %v2589
    %v2596 = vshrl.u32 2131351028, %v2590
    %v2597 = vor.u32 %v2595, %v2596
    %v2598 = vshll.u32 2131351028, %v2589
    %v2599 = vshrl.u32 2102212464, %v2590
    %v2600 = vor.u32 %v2598, %v2599
    %v2601 = vshll.u32 2102212464, %v2589
    %v2602 = vshrl.u32 920167782, %v2590
    %v2603 = vor.u32 %v2601, %v2602
    %v2604 = vshll.u32 920167782, %v2589
    %v2605 = vshrl.u32 1326507024, %v2590
    %v2606 = vor.u32 %v2604, %v2605
    %vm2607 = vcmp.lt.s32.totalorder %v2588, 1
    %vm2608 = vcmp.lt.s32.totalorder %v2588, 2
    %vm2609 = vcmp.lt.s32.totalorder %v2588, 3
    %vm2610 = vcmp.lt.s32.totalorder %v2588, 4
    %v2611 = vsel %vm2607, %v2591, %v2594
    %v2612 = vsel %vm2610, %v2600, 2102212464
    %v2613 = vsel %vm2609, %v2597, %v2612
    %v2614 = vsel %vm2608, %v2611, %v2613
    %v2615 = vsel %vm2607, %v2594, %v2597
    %v2616 = vsel %vm2610, %v2603, 920167782
    %v2617 = vsel %vm2609, %v2600, %v2616
    %v2618 = vsel %vm2608, %v2615, %v2617
    %v2619 = vsel %vm2607, %v2597, %v2600
    %v2620 = vsel %vm2610, %v2606, 1326507024
    %v2621 = vsel %vm2609, %v2603, %v2620
    %v2622 = vsel %vm2608, %v2619, %v2621
    %v2623 = vshll.u32 %v2583, 8
    %v2624 = vmul.u32.u64.compose %v2623, %v2622
    %v2625 = vextract.low.u32 %v2624
    %v2626 = vextract.high.u32 %v2624
    %v2627 = vmul.u32.u64.compose %v2623, %v2618
    %v2628 = vextract.low.u32 %v2627
    %v2629 = vextract.high.u32 %v2627
    %v2630 = vmul.u32 %v2623, %v2614
    %v2631 = vadd.s32 %v2626, %v2628
    %vm2632 = vc.u32 %v2626, %v2628
    %v2633 = vadd.s32 %v2629, 1
    %v2634 = vsel %vm2632, %v2633, %v2629
    %v2635 = vadd.s32 %v2630, %v2634
    %v2636 = vadd.s32 %v2635, 536870912
    %v2637 = vshrl.u32 %v2636, 30
    %v2638 = vshll.u32 %v2637, 30
    %v2639 = vsub.s32 %v2635, %v2638
    %vm2640 = vcmp.lt.s32.totalorder %v2639, 0
    %v2641 = vsub.s32 0, %v2639
    %v2642 = vsel %vm2640, %v2641, %v2639
    %v2643 = vclz %v2642
    %v2644 = vsub.s32 %v2643, 2
    %vm2645 = vcmp.gt.s32.totalorder 0, %v2644
    %v2646 = vsel %vm2645, 0, %v2644
    %v2647 = vsub.s32 32, %v2646
    %v2648 = vshll.u32 %v2639, %v2646
    %v2649 = vshrl.u32 %v2631, %v2647
    %v2650 = vor.u32 %v2648, %v2649
    %v2651 = vsub.s32 4294967266, %v2646
    %v2652 = vadd.s32 %v2651, 127
    %v2653 = vshll.u32 %v2652, 23
    %v2654 = vor.u32 4788187, %v2653
    %v2655 = vand.u32 2147483647, %v2654
    %v2657 = vcvt.s32.f32 %v2650
    %v2658 = vmul.f32 %v2657, %v2655
    %v2659 = vxor.u32 %v2658, 2147483648
    %v2660 = vsel %vm2577, %v2659, %v2658
    %v2661 = vsub.s32 4, %v2637
    %v2662 = vsel %vm2577, %v2661, %v2637
    %v2663 = vsel %vm2576, %v689, %v2660
    %v2664 = vsel %vm2576, 0, %v2662
    %v2665 = vcosq.f32.pop %v2663
    %v2666 = vsinq.f32.pop %v2663
    %vm2667 = vweird.f32 %v689
    %v2668 = vadd.s32 %v2664, 3
    %v2669 = vand.u32 %v2668, 3
    %vm2670 = vcmp.lt.s32.totalorder %v2669, 2
    %vm2671 = vcmp.eq.s32.totalorder %v2669, 0
    %v2672 = vxor.u32 %v2666, 2147483648
    %v2673 = vsel %vm2671, %v2665, %v2672
    %vm2674 = vcmp.eq.s32.totalorder %v2669, 2
    %v2675 = vxor.u32 %v2665, 2147483648
    %v2676 = vsel %vm2674, %v2675, %v2666
    %v2677 = vsel %vm2670, %v2673, %v2676
    %v2678 = vsel %vm2667, nan, %v2677
    %v2679 = vand.u32 2147483647, %v690
    %vm2680 = vcmp.le.f32.partialorder %v2679, 0.7853982
    %vm2681 = vcmp.lt.s32.totalorder %v690, 0
    %v2682 = vand.u32 %v690, 2139095040
    %v2683 = vshrl.u32 %v2682, 23
    %v2684 = vsub.s32 %v2683, 127
    %v2685 = vand.u32 2147483647, %v690
    %v2686 = vand.u32 %v2685, 8388607
    %v2687 = vor.u32 %v2686, 8388608
    %v2688 = vsub.s32 0, %v2687
    %v2689 = vadd.s32 %v2684, 1
    %vm2690 = vcmp.gt.s32.totalorder %v2689, 0
    %v2691 = vsel %vm2690, %v2689, 0
    %v2692 = vshrl.u32 %v2691, 5
    %v2693 = vand.u32 %v2691, 31
    %v2694 = vsub.s32 32, %v2693
    %v2695 = vshrl.u32 683565275, %v2694
    %v2696 = vshll.u32 683565275, %v2693
    %v2697 = vshrl.u32 2475754826, %v2694
    %v2698 = vor.u32 %v2696, %v2697
    %v2699 = vshll.u32 2475754826, %v2693
    %v2700 = vshrl.u32 2131351028, %v2694
    %v2701 = vor.u32 %v2699, %v2700
    %v2702 = vshll.u32 2131351028, %v2693
    %v2703 = vshrl.u32 2102212464, %v2694
    %v2704 = vor.u32 %v2702, %v2703
    %v2705 = vshll.u32 2102212464, %v2693
    %v2706 = vshrl.u32 920167782, %v2694
    %v2707 = vor.u32 %v2705, %v2706
    %v2708 = vshll.u32 920167782, %v2693
    %v2709 = vshrl.u32 1326507024, %v2694
    %v2710 = vor.u32 %v2708, %v2709
    %vm2711 = vcmp.lt.s32.totalorder %v2692, 1
    %vm2712 = vcmp.lt.s32.totalorder %v2692, 2
    %vm2713 = vcmp.lt.s32.totalorder %v2692, 3
    %vm2714 = vcmp.lt.s32.totalorder %v2692, 4
    %v2715 = vsel %vm2711, %v2695, %v2698
    %v2716 = vsel %vm2714, %v2704, 2102212464
    %v2717 = vsel %vm2713, %v2701, %v2716
    %v2718 = vsel %vm2712, %v2715, %v2717
    %v2719 = vsel %vm2711, %v2698, %v2701
    %v2720 = vsel %vm2714, %v2707, 920167782
    %v2721 = vsel %vm2713, %v2704, %v2720
    %v2722 = vsel %vm2712, %v2719, %v2721
    %v2723 = vsel %vm2711, %v2701, %v2704
    %v2724 = vsel %vm2714, %v2710, 1326507024
    %v2725 = vsel %vm2713, %v2707, %v2724
    %v2726 = vsel %vm2712, %v2723, %v2725
    %v2727 = vshll.u32 %v2687, 8
    %v2728 = vmul.u32.u64.compose %v2727, %v2726
    %v2729 = vextract.low.u32 %v2728
    %v2730 = vextract.high.u32 %v2728
    %v2731 = vmul.u32.u64.compose %v2727, %v2722
    %v2732 = vextract.low.u32 %v2731
    %v2733 = vextract.high.u32 %v2731
    %v2734 = vmul.u32 %v2727, %v2718
    %v2735 = vadd.s32 %v2730, %v2732
    %vm2736 = vc.u32 %v2730, %v2732
    %v2737 = vadd.s32 %v2733, 1
    %v2738 = vsel %vm2736, %v2737, %v2733
    %v2739 = vadd.s32 %v2734, %v2738
    %v2740 = vadd.s32 %v2739, 536870912
    %v2741 = vshrl.u32 %v2740, 30
    %v2742 = vshll.u32 %v2741, 30
    %v2743 = vsub.s32 %v2739, %v2742
    %vm2744 = vcmp.lt.s32.totalorder %v2743, 0
    %v2745 = vsub.s32 0, %v2743
    %v2746 = vsel %vm2744, %v2745, %v2743
    %v2747 = vclz %v2746
    %v2748 = vsub.s32 %v2747, 2
    %vm2749 = vcmp.gt.s32.totalorder 0, %v2748
    %v2750 = vsel %vm2749, 0, %v2748
    %v2751 = vsub.s32 32, %v2750
    %v2752 = vshll.u32 %v2743, %v2750
    %v2753 = vshrl.u32 %v2735, %v2751
    %v2754 = vor.u32 %v2752, %v2753
    %v2755 = vsub.s32 4294967266, %v2750
    %v2756 = vadd.s32 %v2755, 127
    %v2757 = vshll.u32 %v2756, 23
    %v2758 = vor.u32 4788187, %v2757
    %v2759 = vand.u32 2147483647, %v2758
    %v2761 = vcvt.s32.f32 %v2754
    %v2762 = vmul.f32 %v2761, %v2759
    %v2763 = vxor.u32 %v2762, 2147483648
    %v2764 = vsel %vm2681, %v2763, %v2762
    %v2765 = vsub.s32 4, %v2741
    %v2766 = vsel %vm2681, %v2765, %v2741
    %v2767 = vsel %vm2680, %v690, %v2764
    %v2768 = vsel %vm2680, 0, %v2766
    %v2769 = vcosq.f32.pop %v2767
    %v2770 = vsinq.f32.pop %v2767
    %vm2771 = vweird.f32 %v690
    %v2772 = vadd.s32 %v2768, 3
    %v2773 = vand.u32 %v2772, 3
    %vm2774 = vcmp.lt.s32.totalorder %v2773, 2
    %vm2775 = vcmp.eq.s32.totalorder %v2773, 0
    %v2776 = vxor.u32 %v2770, 2147483648
    %v2777 = vsel %vm2775, %v2769, %v2776
    %vm2778 = vcmp.eq.s32.totalorder %v2773, 2
    %v2779 = vxor.u32 %v2769, 2147483648
    %v2780 = vsel %vm2778, %v2779, %v2770
    %v2781 = vsel %vm2774, %v2777, %v2780
    %v2782 = vsel %vm2771, nan, %v2781
    %v2783 = vand.u32 2147483647, %v691
    %vm2784 = vcmp.le.f32.partialorder %v2783, 0.7853982
    %vm2785 = vcmp.lt.s32.totalorder %v691, 0
    %v2786 = vand.u32 %v691, 2139095040
    %v2787 = vshrl.u32 %v2786, 23
    %v2788 = vsub.s32 %v2787, 127
    %v2789 = vand.u32 2147483647, %v691
    %v2790 = vand.u32 %v2789, 8388607
    %v2791 = vor.u32 %v2790, 8388608
    %v2792 = vsub.s32 0, %v2791
    %v2793 = vadd.s32 %v2788, 1
    %vm2794 = vcmp.gt.s32.totalorder %v2793, 0
    %v2795 = vsel %vm2794, %v2793, 0
    %v2796 = vshrl.u32 %v2795, 5
    %v2797 = vand.u32 %v2795, 31
    %v2798 = vsub.s32 32, %v2797
    %v2799 = vshrl.u32 683565275, %v2798
    %v2800 = vshll.u32 683565275, %v2797
    %v2801 = vshrl.u32 2475754826, %v2798
    %v2802 = vor.u32 %v2800, %v2801
    %v2803 = vshll.u32 2475754826, %v2797
    %v2804 = vshrl.u32 2131351028, %v2798
    %v2805 = vor.u32 %v2803, %v2804
    %v2806 = vshll.u32 2131351028, %v2797
    %v2807 = vshrl.u32 2102212464, %v2798
    %v2808 = vor.u32 %v2806, %v2807
    %v2809 = vshll.u32 2102212464, %v2797
    %v2810 = vshrl.u32 920167782, %v2798
    %v2811 = vor.u32 %v2809, %v2810
    %v2812 = vshll.u32 920167782, %v2797
    %v2813 = vshrl.u32 1326507024, %v2798
    %v2814 = vor.u32 %v2812, %v2813
    %vm2815 = vcmp.lt.s32.totalorder %v2796, 1
    %vm2816 = vcmp.lt.s32.totalorder %v2796, 2
    %vm2817 = vcmp.lt.s32.totalorder %v2796, 3
    %vm2818 = vcmp.lt.s32.totalorder %v2796, 4
    %v2819 = vsel %vm2815, %v2799, %v2802
    %v2820 = vsel %vm2818, %v2808, 2102212464
    %v2821 = vsel %vm2817, %v2805, %v2820
    %v2822 = vsel %vm2816, %v2819, %v2821
    %v2823 = vsel %vm2815, %v2802, %v2805
    %v2824 = vsel %vm2818, %v2811, 920167782
    %v2825 = vsel %vm2817, %v2808, %v2824
    %v2826 = vsel %vm2816, %v2823, %v2825
    %v2827 = vsel %vm2815, %v2805, %v2808
    %v2828 = vsel %vm2818, %v2814, 1326507024
    %v2829 = vsel %vm2817, %v2811, %v2828
    %v2830 = vsel %vm2816, %v2827, %v2829
    %v2831 = vshll.u32 %v2791, 8
    %v2832 = vmul.u32.u64.compose %v2831, %v2830
    %v2833 = vextract.low.u32 %v2832
    %v2834 = vextract.high.u32 %v2832
    %v2835 = vmul.u32.u64.compose %v2831, %v2826
    %v2836 = vextract.low.u32 %v2835
    %v2837 = vextract.high.u32 %v2835
    %v2838 = vmul.u32 %v2831, %v2822
    %v2839 = vadd.s32 %v2834, %v2836
    %vm2840 = vc.u32 %v2834, %v2836
    %v2841 = vadd.s32 %v2837, 1
    %v2842 = vsel %vm2840, %v2841, %v2837
    %v2843 = vadd.s32 %v2838, %v2842
    %v2844 = vadd.s32 %v2843, 536870912
    %v2845 = vshrl.u32 %v2844, 30
    %v2846 = vshll.u32 %v2845, 30
    %v2847 = vsub.s32 %v2843, %v2846
    %vm2848 = vcmp.lt.s32.totalorder %v2847, 0
    %v2849 = vsub.s32 0, %v2847
    %v2850 = vsel %vm2848, %v2849, %v2847
    %v2851 = vclz %v2850
    %v2852 = vsub.s32 %v2851, 2
    %vm2853 = vcmp.gt.s32.totalorder 0, %v2852
    %v2854 = vsel %vm2853, 0, %v2852
    %v2855 = vsub.s32 32, %v2854
    %v2856 = vshll.u32 %v2847, %v2854
    %v2857 = vshrl.u32 %v2839, %v2855
    %v2858 = vor.u32 %v2856, %v2857
    %v2859 = vsub.s32 4294967266, %v2854
    %v2860 = vadd.s32 %v2859, 127
    %v2861 = vshll.u32 %v2860, 23
    %v2862 = vor.u32 4788187, %v2861
    %v2863 = vand.u32 2147483647, %v2862
    %v2865 = vcvt.s32.f32 %v2858
    %v2866 = vmul.f32 %v2865, %v2863
    %v2867 = vxor.u32 %v2866, 2147483648
    %v2868 = vsel %vm2785, %v2867, %v2866
    %v2869 = vsub.s32 4, %v2845
    %v2870 = vsel %vm2785, %v2869, %v2845
    %v2871 = vsel %vm2784, %v691, %v2868
    %v2872 = vsel %vm2784, 0, %v2870
    %v2873 = vcosq.f32.pop %v2871
    %v2874 = vsinq.f32.pop %v2871
    %vm2875 = vweird.f32 %v691
    %v2876 = vadd.s32 %v2872, 3
    %v2877 = vand.u32 %v2876, 3
    %vm2878 = vcmp.lt.s32.totalorder %v2877, 2
    %vm2879 = vcmp.eq.s32.totalorder %v2877, 0
    %v2880 = vxor.u32 %v2874, 2147483648
    %v2881 = vsel %vm2879, %v2873, %v2880
    %vm2882 = vcmp.eq.s32.totalorder %v2877, 2
    %v2883 = vxor.u32 %v2873, 2147483648
    %v2884 = vsel %vm2882, %v2883, %v2874
    %v2885 = vsel %vm2878, %v2881, %v2884
    %v2886 = vsel %vm2875, nan, %v2885
    %v2887 = vand.u32 2147483647, %v692
    %vm2888 = vcmp.le.f32.partialorder %v2887, 0.7853982
    %vm2889 = vcmp.lt.s32.totalorder %v692, 0
    %v2890 = vand.u32 %v692, 2139095040
    %v2891 = vshrl.u32 %v2890, 23
    %v2892 = vsub.s32 %v2891, 127
    %v2893 = vand.u32 2147483647, %v692
    %v2894 = vand.u32 %v2893, 8388607
    %v2895 = vor.u32 %v2894, 8388608
    %v2896 = vsub.s32 0, %v2895
    %v2897 = vadd.s32 %v2892, 1
    %vm2898 = vcmp.gt.s32.totalorder %v2897, 0
    %v2899 = vsel %vm2898, %v2897, 0
    %v2900 = vshrl.u32 %v2899, 5
    %v2901 = vand.u32 %v2899, 31
    %v2902 = vsub.s32 32, %v2901
    %v2903 = vshrl.u32 683565275, %v2902
    %v2904 = vshll.u32 683565275, %v2901
    %v2905 = vshrl.u32 2475754826, %v2902
    %v2906 = vor.u32 %v2904, %v2905
    %v2907 = vshll.u32 2475754826, %v2901
    %v2908 = vshrl.u32 2131351028, %v2902
    %v2909 = vor.u32 %v2907, %v2908
    %v2910 = vshll.u32 2131351028, %v2901
    %v2911 = vshrl.u32 2102212464, %v2902
    %v2912 = vor.u32 %v2910, %v2911
    %v2913 = vshll.u32 2102212464, %v2901
    %v2914 = vshrl.u32 920167782, %v2902
    %v2915 = vor.u32 %v2913, %v2914
    %v2916 = vshll.u32 920167782, %v2901
    %v2917 = vshrl.u32 1326507024, %v2902
    %v2918 = vor.u32 %v2916, %v2917
    %vm2919 = vcmp.lt.s32.totalorder %v2900, 1
    %vm2920 = vcmp.lt.s32.totalorder %v2900, 2
    %vm2921 = vcmp.lt.s32.totalorder %v2900, 3
    %vm2922 = vcmp.lt.s32.totalorder %v2900, 4
    %v2923 = vsel %vm2919, %v2903, %v2906
    %v2924 = vsel %vm2922, %v2912, 2102212464
    %v2925 = vsel %vm2921, %v2909, %v2924
    %v2926 = vsel %vm2920, %v2923, %v2925
    %v2927 = vsel %vm2919, %v2906, %v2909
    %v2928 = vsel %vm2922, %v2915, 920167782
    %v2929 = vsel %vm2921, %v2912, %v2928
    %v2930 = vsel %vm2920, %v2927, %v2929
    %v2931 = vsel %vm2919, %v2909, %v2912
    %v2932 = vsel %vm2922, %v2918, 1326507024
    %v2933 = vsel %vm2921, %v2915, %v2932
    %v2934 = vsel %vm2920, %v2931, %v2933
    %v2935 = vshll.u32 %v2895, 8
    %v2936 = vmul.u32.u64.compose %v2935, %v2934
    %v2937 = vextract.low.u32 %v2936
    %v2938 = vextract.high.u32 %v2936
    %v2939 = vmul.u32.u64.compose %v2935, %v2930
    %v2940 = vextract.low.u32 %v2939
    %v2941 = vextract.high.u32 %v2939
    %v2942 = vmul.u32 %v2935, %v2926
    %v2943 = vadd.s32 %v2938, %v2940
    %vm2944 = vc.u32 %v2938, %v2940
    %v2945 = vadd.s32 %v2941, 1
    %v2946 = vsel %vm2944, %v2945, %v2941
    %v2947 = vadd.s32 %v2942, %v2946
    %v2948 = vadd.s32 %v2947, 536870912
    %v2949 = vshrl.u32 %v2948, 30
    %v2950 = vshll.u32 %v2949, 30
    %v2951 = vsub.s32 %v2947, %v2950
    %vm2952 = vcmp.lt.s32.totalorder %v2951, 0
    %v2953 = vsub.s32 0, %v2951
    %v2954 = vsel %vm2952, %v2953, %v2951
    %v2955 = vclz %v2954
    %v2956 = vsub.s32 %v2955, 2
    %vm2957 = vcmp.gt.s32.totalorder 0, %v2956
    %v2958 = vsel %vm2957, 0, %v2956
    %v2959 = vsub.s32 32, %v2958
    %v2960 = vshll.u32 %v2951, %v2958
    %v2961 = vshrl.u32 %v2943, %v2959
    %v2962 = vor.u32 %v2960, %v2961
    %v2963 = vsub.s32 4294967266, %v2958
    %v2964 = vadd.s32 %v2963, 127
    %v2965 = vshll.u32 %v2964, 23
    %v2966 = vor.u32 4788187, %v2965
    %v2967 = vand.u32 2147483647, %v2966
    %v2969 = vcvt.s32.f32 %v2962
    %v2970 = vmul.f32 %v2969, %v2967
    %v2971 = vxor.u32 %v2970, 2147483648
    %v2972 = vsel %vm2889, %v2971, %v2970
    %v2973 = vsub.s32 4, %v2949
    %v2974 = vsel %vm2889, %v2973, %v2949
    %v2975 = vsel %vm2888, %v692, %v2972
    %v2976 = vsel %vm2888, 0, %v2974
    %v2977 = vcosq.f32.pop %v2975
    %v2978 = vsinq.f32.pop %v2975
    %vm2979 = vweird.f32 %v692
    %v2980 = vadd.s32 %v2976, 3
    %v2981 = vand.u32 %v2980, 3
    %vm2982 = vcmp.lt.s32.totalorder %v2981, 2
    %vm2983 = vcmp.eq.s32.totalorder %v2981, 0
    %v2984 = vxor.u32 %v2978, 2147483648
    %v2985 = vsel %vm2983, %v2977, %v2984
    %vm2986 = vcmp.eq.s32.totalorder %v2981, 2
    %v2987 = vxor.u32 %v2977, 2147483648
    %v2988 = vsel %vm2986, %v2987, %v2978
    %v2989 = vsel %vm2982, %v2985, %v2988
    %v2990 = vsel %vm2979, nan, %v2989
    %v2991 = vand.u32 2147483647, %v693
    %vm2992 = vcmp.le.f32.partialorder %v2991, 0.7853982
    %vm2993 = vcmp.lt.s32.totalorder %v693, 0
    %v2994 = vand.u32 %v693, 2139095040
    %v2995 = vshrl.u32 %v2994, 23
    %v2996 = vsub.s32 %v2995, 127
    %v2997 = vand.u32 2147483647, %v693
    %v2998 = vand.u32 %v2997, 8388607
    %v2999 = vor.u32 %v2998, 8388608
    %v3000 = vsub.s32 0, %v2999
    %v3001 = vadd.s32 %v2996, 1
    %vm3002 = vcmp.gt.s32.totalorder %v3001, 0
    %v3003 = vsel %vm3002, %v3001, 0
    %v3004 = vshrl.u32 %v3003, 5
    %v3005 = vand.u32 %v3003, 31
    %v3006 = vsub.s32 32, %v3005
    %v3007 = vshrl.u32 683565275, %v3006
    %v3008 = vshll.u32 683565275, %v3005
    %v3009 = vshrl.u32 2475754826, %v3006
    %v3010 = vor.u32 %v3008, %v3009
    %v3011 = vshll.u32 2475754826, %v3005
    %v3012 = vshrl.u32 2131351028, %v3006
    %v3013 = vor.u32 %v3011, %v3012
    %v3014 = vshll.u32 2131351028, %v3005
    %v3015 = vshrl.u32 2102212464, %v3006
    %v3016 = vor.u32 %v3014, %v3015
    %v3017 = vshll.u32 2102212464, %v3005
    %v3018 = vshrl.u32 920167782, %v3006
    %v3019 = vor.u32 %v3017, %v3018
    %v3020 = vshll.u32 920167782, %v3005
    %v3021 = vshrl.u32 1326507024, %v3006
    %v3022 = vor.u32 %v3020, %v3021
    %vm3023 = vcmp.lt.s32.totalorder %v3004, 1
    %vm3024 = vcmp.lt.s32.totalorder %v3004, 2
    %vm3025 = vcmp.lt.s32.totalorder %v3004, 3
    %vm3026 = vcmp.lt.s32.totalorder %v3004, 4
    %v3027 = vsel %vm3023, %v3007, %v3010
    %v3028 = vsel %vm3026, %v3016, 2102212464
    %v3029 = vsel %vm3025, %v3013, %v3028
    %v3030 = vsel %vm3024, %v3027, %v3029
    %v3031 = vsel %vm3023, %v3010, %v3013
    %v3032 = vsel %vm3026, %v3019, 920167782
    %v3033 = vsel %vm3025, %v3016, %v3032
    %v3034 = vsel %vm3024, %v3031, %v3033
    %v3035 = vsel %vm3023, %v3013, %v3016
    %v3036 = vsel %vm3026, %v3022, 1326507024
    %v3037 = vsel %vm3025, %v3019, %v3036
    %v3038 = vsel %vm3024, %v3035, %v3037
    %v3039 = vshll.u32 %v2999, 8
    %v3040 = vmul.u32.u64.compose %v3039, %v3038
    %v3041 = vextract.low.u32 %v3040
    %v3042 = vextract.high.u32 %v3040
    %v3043 = vmul.u32.u64.compose %v3039, %v3034
    %v3044 = vextract.low.u32 %v3043
    %v3045 = vextract.high.u32 %v3043
    %v3046 = vmul.u32 %v3039, %v3030
    %v3047 = vadd.s32 %v3042, %v3044
    %vm3048 = vc.u32 %v3042, %v3044
    %v3049 = vadd.s32 %v3045, 1
    %v3050 = vsel %vm3048, %v3049, %v3045
    %v3051 = vadd.s32 %v3046, %v3050
    %v3052 = vadd.s32 %v3051, 536870912
    %v3053 = vshrl.u32 %v3052, 30
    %v3054 = vshll.u32 %v3053, 30
    %v3055 = vsub.s32 %v3051, %v3054
    %vm3056 = vcmp.lt.s32.totalorder %v3055, 0
    %v3057 = vsub.s32 0, %v3055
    %v3058 = vsel %vm3056, %v3057, %v3055
    %v3059 = vclz %v3058
    %v3060 = vsub.s32 %v3059, 2
    %vm3061 = vcmp.gt.s32.totalorder 0, %v3060
    %v3062 = vsel %vm3061, 0, %v3060
    %v3063 = vsub.s32 32, %v3062
    %v3064 = vshll.u32 %v3055, %v3062
    %v3065 = vshrl.u32 %v3047, %v3063
    %v3066 = vor.u32 %v3064, %v3065
    %v3067 = vsub.s32 4294967266, %v3062
    %v3068 = vadd.s32 %v3067, 127
    %v3069 = vshll.u32 %v3068, 23
    %v3070 = vor.u32 4788187, %v3069
    %v3071 = vand.u32 2147483647, %v3070
    %v3073 = vcvt.s32.f32 %v3066
    %v3074 = vmul.f32 %v3073, %v3071
    %v3075 = vxor.u32 %v3074, 2147483648
    %v3076 = vsel %vm2993, %v3075, %v3074
    %v3077 = vsub.s32 4, %v3053
    %v3078 = vsel %vm2993, %v3077, %v3053
    %v3079 = vsel %vm2992, %v693, %v3076
    %v3080 = vsel %vm2992, 0, %v3078
    %v3081 = vcosq.f32.pop %v3079
    %v3082 = vsinq.f32.pop %v3079
    %vm3083 = vweird.f32 %v693
    %v3084 = vadd.s32 %v3080, 3
    %v3085 = vand.u32 %v3084, 3
    %vm3086 = vcmp.lt.s32.totalorder %v3085, 2
    %vm3087 = vcmp.eq.s32.totalorder %v3085, 0
    %v3088 = vxor.u32 %v3082, 2147483648
    %v3089 = vsel %vm3087, %v3081, %v3088
    %vm3090 = vcmp.eq.s32.totalorder %v3085, 2
    %v3091 = vxor.u32 %v3081, 2147483648
    %v3092 = vsel %vm3090, %v3091, %v3082
    %v3093 = vsel %vm3086, %v3089, %v3092
    %v3094 = vsel %vm3083, nan, %v3093
    %v3095 = vand.u32 2147483647, %v694
    %vm3096 = vcmp.le.f32.partialorder %v3095, 0.7853982
    %vm3097 = vcmp.lt.s32.totalorder %v694, 0
    %v3098 = vand.u32 %v694, 2139095040
    %v3099 = vshrl.u32 %v3098, 23
    %v3100 = vsub.s32 %v3099, 127
    %v3101 = vand.u32 2147483647, %v694
    %v3102 = vand.u32 %v3101, 8388607
    %v3103 = vor.u32 %v3102, 8388608
    %v3104 = vsub.s32 0, %v3103
    %v3105 = vadd.s32 %v3100, 1
    %vm3106 = vcmp.gt.s32.totalorder %v3105, 0
    %v3107 = vsel %vm3106, %v3105, 0
    %v3108 = vshrl.u32 %v3107, 5
    %v3109 = vand.u32 %v3107, 31
    %v3110 = vsub.s32 32, %v3109
    %v3111 = vshrl.u32 683565275, %v3110
    %v3112 = vshll.u32 683565275, %v3109
    %v3113 = vshrl.u32 2475754826, %v3110
    %v3114 = vor.u32 %v3112, %v3113
    %v3115 = vshll.u32 2475754826, %v3109
    %v3116 = vshrl.u32 2131351028, %v3110
    %v3117 = vor.u32 %v3115, %v3116
    %v3118 = vshll.u32 2131351028, %v3109
    %v3119 = vshrl.u32 2102212464, %v3110
    %v3120 = vor.u32 %v3118, %v3119
    %v3121 = vshll.u32 2102212464, %v3109
    %v3122 = vshrl.u32 920167782, %v3110
    %v3123 = vor.u32 %v3121, %v3122
    %v3124 = vshll.u32 920167782, %v3109
    %v3125 = vshrl.u32 1326507024, %v3110
    %v3126 = vor.u32 %v3124, %v3125
    %vm3127 = vcmp.lt.s32.totalorder %v3108, 1
    %vm3128 = vcmp.lt.s32.totalorder %v3108, 2
    %vm3129 = vcmp.lt.s32.totalorder %v3108, 3
    %vm3130 = vcmp.lt.s32.totalorder %v3108, 4
    %v3131 = vsel %vm3127, %v3111, %v3114
    %v3132 = vsel %vm3130, %v3120, 2102212464
    %v3133 = vsel %vm3129, %v3117, %v3132
    %v3134 = vsel %vm3128, %v3131, %v3133
    %v3135 = vsel %vm3127, %v3114, %v3117
    %v3136 = vsel %vm3130, %v3123, 920167782
    %v3137 = vsel %vm3129, %v3120, %v3136
    %v3138 = vsel %vm3128, %v3135, %v3137
    %v3139 = vsel %vm3127, %v3117, %v3120
    %v3140 = vsel %vm3130, %v3126, 1326507024
    %v3141 = vsel %vm3129, %v3123, %v3140
    %v3142 = vsel %vm3128, %v3139, %v3141
    %v3143 = vshll.u32 %v3103, 8
    %v3144 = vmul.u32.u64.compose %v3143, %v3142
    %v3145 = vextract.low.u32 %v3144
    %v3146 = vextract.high.u32 %v3144
    %v3147 = vmul.u32.u64.compose %v3143, %v3138
    %v3148 = vextract.low.u32 %v3147
    %v3149 = vextract.high.u32 %v3147
    %v3150 = vmul.u32 %v3143, %v3134
    %v3151 = vadd.s32 %v3146, %v3148
    %vm3152 = vc.u32 %v3146, %v3148
    %v3153 = vadd.s32 %v3149, 1
    %v3154 = vsel %vm3152, %v3153, %v3149
    %v3155 = vadd.s32 %v3150, %v3154
    %v3156 = vadd.s32 %v3155, 536870912
    %v3157 = vshrl.u32 %v3156, 30
    %v3158 = vshll.u32 %v3157, 30
    %v3159 = vsub.s32 %v3155, %v3158
    %vm3160 = vcmp.lt.s32.totalorder %v3159, 0
    %v3161 = vsub.s32 0, %v3159
    %v3162 = vsel %vm3160, %v3161, %v3159
    %v3163 = vclz %v3162
    %v3164 = vsub.s32 %v3163, 2
    %vm3165 = vcmp.gt.s32.totalorder 0, %v3164
    %v3166 = vsel %vm3165, 0, %v3164
    %v3167 = vsub.s32 32, %v3166
    %v3168 = vshll.u32 %v3159, %v3166
    %v3169 = vshrl.u32 %v3151, %v3167
    %v3170 = vor.u32 %v3168, %v3169
    %v3171 = vsub.s32 4294967266, %v3166
    %v3172 = vadd.s32 %v3171, 127
    %v3173 = vshll.u32 %v3172, 23
    %v3174 = vor.u32 4788187, %v3173
    %v3175 = vand.u32 2147483647, %v3174
    %v3177 = vcvt.s32.f32 %v3170
    %v3178 = vmul.f32 %v3177, %v3175
    %v3179 = vxor.u32 %v3178, 2147483648
    %v3180 = vsel %vm3097, %v3179, %v3178
    %v3181 = vsub.s32 4, %v3157
    %v3182 = vsel %vm3097, %v3181, %v3157
    %v3183 = vsel %vm3096, %v694, %v3180
    %v3184 = vsel %vm3096, 0, %v3182
    %v3185 = vcosq.f32.pop %v3183
    %v3186 = vsinq.f32.pop %v3183
    %vm3187 = vweird.f32 %v694
    %v3188 = vadd.s32 %v3184, 3
    %v3189 = vand.u32 %v3188, 3
    %vm3190 = vcmp.lt.s32.totalorder %v3189, 2
    %vm3191 = vcmp.eq.s32.totalorder %v3189, 0
    %v3192 = vxor.u32 %v3186, 2147483648
    %v3193 = vsel %vm3191, %v3185, %v3192
    %vm3194 = vcmp.eq.s32.totalorder %v3189, 2
    %v3195 = vxor.u32 %v3185, 2147483648
    %v3196 = vsel %vm3194, %v3195, %v3186
    %v3197 = vsel %vm3190, %v3193, %v3196
    %v3198 = vsel %vm3187, nan, %v3197
    %v3199 = vand.u32 2147483647, %v695
    %vm3200 = vcmp.le.f32.partialorder %v3199, 0.7853982
    %vm3201 = vcmp.lt.s32.totalorder %v695, 0
    %v3202 = vand.u32 %v695, 2139095040
    %v3203 = vshrl.u32 %v3202, 23
    %v3204 = vsub.s32 %v3203, 127
    %v3205 = vand.u32 2147483647, %v695
    %v3206 = vand.u32 %v3205, 8388607
    %v3207 = vor.u32 %v3206, 8388608
    %v3208 = vsub.s32 0, %v3207
    %v3209 = vadd.s32 %v3204, 1
    %vm3210 = vcmp.gt.s32.totalorder %v3209, 0
    %v3211 = vsel %vm3210, %v3209, 0
    %v3212 = vshrl.u32 %v3211, 5
    %v3213 = vand.u32 %v3211, 31
    %v3214 = vsub.s32 32, %v3213
    %v3215 = vshrl.u32 683565275, %v3214
    %v3216 = vshll.u32 683565275, %v3213
    %v3217 = vshrl.u32 2475754826, %v3214
    %v3218 = vor.u32 %v3216, %v3217
    %v3219 = vshll.u32 2475754826, %v3213
    %v3220 = vshrl.u32 2131351028, %v3214
    %v3221 = vor.u32 %v3219, %v3220
    %v3222 = vshll.u32 2131351028, %v3213
    %v3223 = vshrl.u32 2102212464, %v3214
    %v3224 = vor.u32 %v3222, %v3223
    %v3225 = vshll.u32 2102212464, %v3213
    %v3226 = vshrl.u32 920167782, %v3214
    %v3227 = vor.u32 %v3225, %v3226
    %v3228 = vshll.u32 920167782, %v3213
    %v3229 = vshrl.u32 1326507024, %v3214
    %v3230 = vor.u32 %v3228, %v3229
    %vm3231 = vcmp.lt.s32.totalorder %v3212, 1
    %vm3232 = vcmp.lt.s32.totalorder %v3212, 2
    %vm3233 = vcmp.lt.s32.totalorder %v3212, 3
    %vm3234 = vcmp.lt.s32.totalorder %v3212, 4
    %v3235 = vsel %vm3231, %v3215, %v3218
    %v3236 = vsel %vm3234, %v3224, 2102212464
    %v3237 = vsel %vm3233, %v3221, %v3236
    %v3238 = vsel %vm3232, %v3235, %v3237
    %v3239 = vsel %vm3231, %v3218, %v3221
    %v3240 = vsel %vm3234, %v3227, 920167782
    %v3241 = vsel %vm3233, %v3224, %v3240
    %v3242 = vsel %vm3232, %v3239, %v3241
    %v3243 = vsel %vm3231, %v3221, %v3224
    %v3244 = vsel %vm3234, %v3230, 1326507024
    %v3245 = vsel %vm3233, %v3227, %v3244
    %v3246 = vsel %vm3232, %v3243, %v3245
    %v3247 = vshll.u32 %v3207, 8
    %v3248 = vmul.u32.u64.compose %v3247, %v3246
    %v3249 = vextract.low.u32 %v3248
    %v3250 = vextract.high.u32 %v3248
    %v3251 = vmul.u32.u64.compose %v3247, %v3242
    %v3252 = vextract.low.u32 %v3251
    %v3253 = vextract.high.u32 %v3251
    %v3254 = vmul.u32 %v3247, %v3238
    %v3255 = vadd.s32 %v3250, %v3252
    %vm3256 = vc.u32 %v3250, %v3252
    %v3257 = vadd.s32 %v3253, 1
    %v3258 = vsel %vm3256, %v3257, %v3253
    %v3259 = vadd.s32 %v3254, %v3258
    %v3260 = vadd.s32 %v3259, 536870912
    %v3261 = vshrl.u32 %v3260, 30
    %v3262 = vshll.u32 %v3261, 30
    %v3263 = vsub.s32 %v3259, %v3262
    %vm3264 = vcmp.lt.s32.totalorder %v3263, 0
    %v3265 = vsub.s32 0, %v3263
    %v3266 = vsel %vm3264, %v3265, %v3263
    %v3267 = vclz %v3266
    %v3268 = vsub.s32 %v3267, 2
    %vm3269 = vcmp.gt.s32.totalorder 0, %v3268
    %v3270 = vsel %vm3269, 0, %v3268
    %v3271 = vsub.s32 32, %v3270
    %v3272 = vshll.u32 %v3263, %v3270
    %v3273 = vshrl.u32 %v3255, %v3271
    %v3274 = vor.u32 %v3272, %v3273
    %v3275 = vsub.s32 4294967266, %v3270
    %v3276 = vadd.s32 %v3275, 127
    %v3277 = vshll.u32 %v3276, 23
    %v3278 = vor.u32 4788187, %v3277
    %v3279 = vand.u32 2147483647, %v3278
    %v3281 = vcvt.s32.f32 %v3274
    %v3282 = vmul.f32 %v3281, %v3279
    %v3283 = vxor.u32 %v3282, 2147483648
    %v3284 = vsel %vm3201, %v3283, %v3282
    %v3285 = vsub.s32 4, %v3261
    %v3286 = vsel %vm3201, %v3285, %v3261
    %v3287 = vsel %vm3200, %v695, %v3284
    %v3288 = vsel %vm3200, 0, %v3286
    %v3289 = vcosq.f32.pop %v3287
    %v3290 = vsinq.f32.pop %v3287
    %vm3291 = vweird.f32 %v695
    %v3292 = vadd.s32 %v3288, 3
    %v3293 = vand.u32 %v3292, 3
    %vm3294 = vcmp.lt.s32.totalorder %v3293, 2
    %vm3295 = vcmp.eq.s32.totalorder %v3293, 0
    %v3296 = vxor.u32 %v3290, 2147483648
    %v3297 = vsel %vm3295, %v3289, %v3296
    %vm3298 = vcmp.eq.s32.totalorder %v3293, 2
    %v3299 = vxor.u32 %v3289, 2147483648
    %v3300 = vsel %vm3298, %v3299, %v3290
    %v3301 = vsel %vm3294, %v3297, %v3300
    %v3302 = vsel %vm3291, nan, %v3301
    %v3303 = vand.u32 2147483647, %v696
    %vm3304 = vcmp.le.f32.partialorder %v3303, 0.7853982
    %vm3305 = vcmp.lt.s32.totalorder %v696, 0
    %v3306 = vand.u32 %v696, 2139095040
    %v3307 = vshrl.u32 %v3306, 23
    %v3308 = vsub.s32 %v3307, 127
    %v3309 = vand.u32 2147483647, %v696
    %v3310 = vand.u32 %v3309, 8388607
    %v3311 = vor.u32 %v3310, 8388608
    %v3312 = vsub.s32 0, %v3311
    %v3313 = vadd.s32 %v3308, 1
    %vm3314 = vcmp.gt.s32.totalorder %v3313, 0
    %v3315 = vsel %vm3314, %v3313, 0
    %v3316 = vshrl.u32 %v3315, 5
    %v3317 = vand.u32 %v3315, 31
    %v3318 = vsub.s32 32, %v3317
    %v3319 = vshrl.u32 683565275, %v3318
    %v3320 = vshll.u32 683565275, %v3317
    %v3321 = vshrl.u32 2475754826, %v3318
    %v3322 = vor.u32 %v3320, %v3321
    %v3323 = vshll.u32 2475754826, %v3317
    %v3324 = vshrl.u32 2131351028, %v3318
    %v3325 = vor.u32 %v3323, %v3324
    %v3326 = vshll.u32 2131351028, %v3317
    %v3327 = vshrl.u32 2102212464, %v3318
    %v3328 = vor.u32 %v3326, %v3327
    %v3329 = vshll.u32 2102212464, %v3317
    %v3330 = vshrl.u32 920167782, %v3318
    %v3331 = vor.u32 %v3329, %v3330
    %v3332 = vshll.u32 920167782, %v3317
    %v3333 = vshrl.u32 1326507024, %v3318
    %v3334 = vor.u32 %v3332, %v3333
    %vm3335 = vcmp.lt.s32.totalorder %v3316, 1
    %vm3336 = vcmp.lt.s32.totalorder %v3316, 2
    %vm3337 = vcmp.lt.s32.totalorder %v3316, 3
    %vm3338 = vcmp.lt.s32.totalorder %v3316, 4
    %v3339 = vsel %vm3335, %v3319, %v3322
    %v3340 = vsel %vm3338, %v3328, 2102212464
    %v3341 = vsel %vm3337, %v3325, %v3340
    %v3342 = vsel %vm3336, %v3339, %v3341
    %v3343 = vsel %vm3335, %v3322, %v3325
    %v3344 = vsel %vm3338, %v3331, 920167782
    %v3345 = vsel %vm3337, %v3328, %v3344
    %v3346 = vsel %vm3336, %v3343, %v3345
    %v3347 = vsel %vm3335, %v3325, %v3328
    %v3348 = vsel %vm3338, %v3334, 1326507024
    %v3349 = vsel %vm3337, %v3331, %v3348
    %v3350 = vsel %vm3336, %v3347, %v3349
    %v3351 = vshll.u32 %v3311, 8
    %v3352 = vmul.u32.u64.compose %v3351, %v3350
    %v3353 = vextract.low.u32 %v3352
    %v3354 = vextract.high.u32 %v3352
    %v3355 = vmul.u32.u64.compose %v3351, %v3346
    %v3356 = vextract.low.u32 %v3355
    %v3357 = vextract.high.u32 %v3355
    %v3358 = vmul.u32 %v3351, %v3342
    %v3359 = vadd.s32 %v3354, %v3356
    %vm3360 = vc.u32 %v3354, %v3356
    %v3361 = vadd.s32 %v3357, 1
    %v3362 = vsel %vm3360, %v3361, %v3357
    %v3363 = vadd.s32 %v3358, %v3362
    %v3364 = vadd.s32 %v3363, 536870912
    %v3365 = vshrl.u32 %v3364, 30
    %v3366 = vshll.u32 %v3365, 30
    %v3367 = vsub.s32 %v3363, %v3366
    %vm3368 = vcmp.lt.s32.totalorder %v3367, 0
    %v3369 = vsub.s32 0, %v3367
    %v3370 = vsel %vm3368, %v3369, %v3367
    %v3371 = vclz %v3370
    %v3372 = vsub.s32 %v3371, 2
    %vm3373 = vcmp.gt.s32.totalorder 0, %v3372
    %v3374 = vsel %vm3373, 0, %v3372
    %v3375 = vsub.s32 32, %v3374
    %v3376 = vshll.u32 %v3367, %v3374
    %v3377 = vshrl.u32 %v3359, %v3375
    %v3378 = vor.u32 %v3376, %v3377
    %v3379 = vsub.s32 4294967266, %v3374
    %v3380 = vadd.s32 %v3379, 127
    %v3381 = vshll.u32 %v3380, 23
    %v3382 = vor.u32 4788187, %v3381
    %v3383 = vand.u32 2147483647, %v3382
    %v3385 = vcvt.s32.f32 %v3378
    %v3386 = vmul.f32 %v3385, %v3383
    %v3387 = vxor.u32 %v3386, 2147483648
    %v3388 = vsel %vm3305, %v3387, %v3386
    %v3389 = vsub.s32 4, %v3365
    %v3390 = vsel %vm3305, %v3389, %v3365
    %v3391 = vsel %vm3304, %v696, %v3388
    %v3392 = vsel %vm3304, 0, %v3390
    %v3393 = vcosq.f32.pop %v3391
    %v3394 = vsinq.f32.pop %v3391
    %vm3395 = vweird.f32 %v696
    %v3396 = vadd.s32 %v3392, 3
    %v3397 = vand.u32 %v3396, 3
    %vm3398 = vcmp.lt.s32.totalorder %v3397, 2
    %vm3399 = vcmp.eq.s32.totalorder %v3397, 0
    %v3400 = vxor.u32 %v3394, 2147483648
    %v3401 = vsel %vm3399, %v3393, %v3400
    %vm3402 = vcmp.eq.s32.totalorder %v3397, 2
    %v3403 = vxor.u32 %v3393, 2147483648
    %v3404 = vsel %vm3402, %v3403, %v3394
    %v3405 = vsel %vm3398, %v3401, %v3404
    %v3406 = vsel %vm3395, nan, %v3405
    %v3407 = vand.u32 2147483647, %v697
    %vm3408 = vcmp.le.f32.partialorder %v3407, 0.7853982
    %vm3409 = vcmp.lt.s32.totalorder %v697, 0
    %v3410 = vand.u32 %v697, 2139095040
    %v3411 = vshrl.u32 %v3410, 23
    %v3412 = vsub.s32 %v3411, 127
    %v3413 = vand.u32 2147483647, %v697
    %v3414 = vand.u32 %v3413, 8388607
    %v3415 = vor.u32 %v3414, 8388608
    %v3416 = vsub.s32 0, %v3415
    %v3417 = vadd.s32 %v3412, 1
    %vm3418 = vcmp.gt.s32.totalorder %v3417, 0
    %v3419 = vsel %vm3418, %v3417, 0
    %v3420 = vshrl.u32 %v3419, 5
    %v3421 = vand.u32 %v3419, 31
    %v3422 = vsub.s32 32, %v3421
    %v3423 = vshrl.u32 683565275, %v3422
    %v3424 = vshll.u32 683565275, %v3421
    %v3425 = vshrl.u32 2475754826, %v3422
    %v3426 = vor.u32 %v3424, %v3425
    %v3427 = vshll.u32 2475754826, %v3421
    %v3428 = vshrl.u32 2131351028, %v3422
    %v3429 = vor.u32 %v3427, %v3428
    %v3430 = vshll.u32 2131351028, %v3421
    %v3431 = vshrl.u32 2102212464, %v3422
    %v3432 = vor.u32 %v3430, %v3431
    %v3433 = vshll.u32 2102212464, %v3421
    %v3434 = vshrl.u32 920167782, %v3422
    %v3435 = vor.u32 %v3433, %v3434
    %v3436 = vshll.u32 920167782, %v3421
    %v3437 = vshrl.u32 1326507024, %v3422
    %v3438 = vor.u32 %v3436, %v3437
    %vm3439 = vcmp.lt.s32.totalorder %v3420, 1
    %vm3440 = vcmp.lt.s32.totalorder %v3420, 2
    %vm3441 = vcmp.lt.s32.totalorder %v3420, 3
    %vm3442 = vcmp.lt.s32.totalorder %v3420, 4
    %v3443 = vsel %vm3439, %v3423, %v3426
    %v3444 = vsel %vm3442, %v3432, 2102212464
    %v3445 = vsel %vm3441, %v3429, %v3444
    %v3446 = vsel %vm3440, %v3443, %v3445
    %v3447 = vsel %vm3439, %v3426, %v3429
    %v3448 = vsel %vm3442, %v3435, 920167782
    %v3449 = vsel %vm3441, %v3432, %v3448
    %v3450 = vsel %vm3440, %v3447, %v3449
    %v3451 = vsel %vm3439, %v3429, %v3432
    %v3452 = vsel %vm3442, %v3438, 1326507024
    %v3453 = vsel %vm3441, %v3435, %v3452
    %v3454 = vsel %vm3440, %v3451, %v3453
    %v3455 = vshll.u32 %v3415, 8
    %v3456 = vmul.u32.u64.compose %v3455, %v3454
    %v3457 = vextract.low.u32 %v3456
    %v3458 = vextract.high.u32 %v3456
    %v3459 = vmul.u32.u64.compose %v3455, %v3450
    %v3460 = vextract.low.u32 %v3459
    %v3461 = vextract.high.u32 %v3459
    %v3462 = vmul.u32 %v3455, %v3446
    %v3463 = vadd.s32 %v3458, %v3460
    %vm3464 = vc.u32 %v3458, %v3460
    %v3465 = vadd.s32 %v3461, 1
    %v3466 = vsel %vm3464, %v3465, %v3461
    %v3467 = vadd.s32 %v3462, %v3466
    %v3468 = vadd.s32 %v3467, 536870912
    %v3469 = vshrl.u32 %v3468, 30
    %v3470 = vshll.u32 %v3469, 30
    %v3471 = vsub.s32 %v3467, %v3470
    %vm3472 = vcmp.lt.s32.totalorder %v3471, 0
    %v3473 = vsub.s32 0, %v3471
    %v3474 = vsel %vm3472, %v3473, %v3471
    %v3475 = vclz %v3474
    %v3476 = vsub.s32 %v3475, 2
    %vm3477 = vcmp.gt.s32.totalorder 0, %v3476
    %v3478 = vsel %vm3477, 0, %v3476
    %v3479 = vsub.s32 32, %v3478
    %v3480 = vshll.u32 %v3471, %v3478
    %v3481 = vshrl.u32 %v3463, %v3479
    %v3482 = vor.u32 %v3480, %v3481
    %v3483 = vsub.s32 4294967266, %v3478
    %v3484 = vadd.s32 %v3483, 127
    %v3485 = vshll.u32 %v3484, 23
    %v3486 = vor.u32 4788187, %v3485
    %v3487 = vand.u32 2147483647, %v3486
    %v3489 = vcvt.s32.f32 %v3482
    %v3490 = vmul.f32 %v3489, %v3487
    %v3491 = vxor.u32 %v3490, 2147483648
    %v3492 = vsel %vm3409, %v3491, %v3490
    %v3493 = vsub.s32 4, %v3469
    %v3494 = vsel %vm3409, %v3493, %v3469
    %v3495 = vsel %vm3408, %v697, %v3492
    %v3496 = vsel %vm3408, 0, %v3494
    %v3497 = vcosq.f32.pop %v3495
    %v3498 = vsinq.f32.pop %v3495
    %vm3499 = vweird.f32 %v697
    %v3500 = vadd.s32 %v3496, 3
    %v3501 = vand.u32 %v3500, 3
    %vm3502 = vcmp.lt.s32.totalorder %v3501, 2
    %vm3503 = vcmp.eq.s32.totalorder %v3501, 0
    %v3504 = vxor.u32 %v3498, 2147483648
    %v3505 = vsel %vm3503, %v3497, %v3504
    %vm3506 = vcmp.eq.s32.totalorder %v3501, 2
    %v3507 = vxor.u32 %v3497, 2147483648
    %v3508 = vsel %vm3506, %v3507, %v3498
    %v3509 = vsel %vm3502, %v3505, %v3508
    %v3510 = vsel %vm3499, nan, %v3509
    %v3511 = vand.u32 2147483647, %v698
    %vm3512 = vcmp.le.f32.partialorder %v3511, 0.7853982
    %vm3513 = vcmp.lt.s32.totalorder %v698, 0
    %v3514 = vand.u32 %v698, 2139095040
    %v3515 = vshrl.u32 %v3514, 23
    %v3516 = vsub.s32 %v3515, 127
    %v3517 = vand.u32 2147483647, %v698
    %v3518 = vand.u32 %v3517, 8388607
    %v3519 = vor.u32 %v3518, 8388608
    %v3520 = vsub.s32 0, %v3519
    %v3521 = vadd.s32 %v3516, 1
    %vm3522 = vcmp.gt.s32.totalorder %v3521, 0
    %v3523 = vsel %vm3522, %v3521, 0
    %v3524 = vshrl.u32 %v3523, 5
    %v3525 = vand.u32 %v3523, 31
    %v3526 = vsub.s32 32, %v3525
    %v3527 = vshrl.u32 683565275, %v3526
    %v3528 = vshll.u32 683565275, %v3525
    %v3529 = vshrl.u32 2475754826, %v3526
    %v3530 = vor.u32 %v3528, %v3529
    %v3531 = vshll.u32 2475754826, %v3525
    %v3532 = vshrl.u32 2131351028, %v3526
    %v3533 = vor.u32 %v3531, %v3532
    %v3534 = vshll.u32 2131351028, %v3525
    %v3535 = vshrl.u32 2102212464, %v3526
    %v3536 = vor.u32 %v3534, %v3535
    %v3537 = vshll.u32 2102212464, %v3525
    %v3538 = vshrl.u32 920167782, %v3526
    %v3539 = vor.u32 %v3537, %v3538
    %v3540 = vshll.u32 920167782, %v3525
    %v3541 = vshrl.u32 1326507024, %v3526
    %v3542 = vor.u32 %v3540, %v3541
    %vm3543 = vcmp.lt.s32.totalorder %v3524, 1
    %vm3544 = vcmp.lt.s32.totalorder %v3524, 2
    %vm3545 = vcmp.lt.s32.totalorder %v3524, 3
    %vm3546 = vcmp.lt.s32.totalorder %v3524, 4
    %v3547 = vsel %vm3543, %v3527, %v3530
    %v3548 = vsel %vm3546, %v3536, 2102212464
    %v3549 = vsel %vm3545, %v3533, %v3548
    %v3550 = vsel %vm3544, %v3547, %v3549
    %v3551 = vsel %vm3543, %v3530, %v3533
    %v3552 = vsel %vm3546, %v3539, 920167782
    %v3553 = vsel %vm3545, %v3536, %v3552
    %v3554 = vsel %vm3544, %v3551, %v3553
    %v3555 = vsel %vm3543, %v3533, %v3536
    %v3556 = vsel %vm3546, %v3542, 1326507024
    %v3557 = vsel %vm3545, %v3539, %v3556
    %v3558 = vsel %vm3544, %v3555, %v3557
    %v3559 = vshll.u32 %v3519, 8
    %v3560 = vmul.u32.u64.compose %v3559, %v3558
    %v3561 = vextract.low.u32 %v3560
    %v3562 = vextract.high.u32 %v3560
    %v3563 = vmul.u32.u64.compose %v3559, %v3554
    %v3564 = vextract.low.u32 %v3563
    %v3565 = vextract.high.u32 %v3563
    %v3566 = vmul.u32 %v3559, %v3550
    %v3567 = vadd.s32 %v3562, %v3564
    %vm3568 = vc.u32 %v3562, %v3564
    %v3569 = vadd.s32 %v3565, 1
    %v3570 = vsel %vm3568, %v3569, %v3565
    %v3571 = vadd.s32 %v3566, %v3570
    %v3572 = vadd.s32 %v3571, 536870912
    %v3573 = vshrl.u32 %v3572, 30
    %v3574 = vshll.u32 %v3573, 30
    %v3575 = vsub.s32 %v3571, %v3574
    %vm3576 = vcmp.lt.s32.totalorder %v3575, 0
    %v3577 = vsub.s32 0, %v3575
    %v3578 = vsel %vm3576, %v3577, %v3575
    %v3579 = vclz %v3578
    %v3580 = vsub.s32 %v3579, 2
    %vm3581 = vcmp.gt.s32.totalorder 0, %v3580
    %v3582 = vsel %vm3581, 0, %v3580
    %v3583 = vsub.s32 32, %v3582
    %v3584 = vshll.u32 %v3575, %v3582
    %v3585 = vshrl.u32 %v3567, %v3583
    %v3586 = vor.u32 %v3584, %v3585
    %v3587 = vsub.s32 4294967266, %v3582
    %v3588 = vadd.s32 %v3587, 127
    %v3589 = vshll.u32 %v3588, 23
    %v3590 = vor.u32 4788187, %v3589
    %v3591 = vand.u32 2147483647, %v3590
    %v3593 = vcvt.s32.f32 %v3586
    %v3594 = vmul.f32 %v3593, %v3591
    %v3595 = vxor.u32 %v3594, 2147483648
    %v3596 = vsel %vm3513, %v3595, %v3594
    %v3597 = vsub.s32 4, %v3573
    %v3598 = vsel %vm3513, %v3597, %v3573
    %v3599 = vsel %vm3512, %v698, %v3596
    %v3600 = vsel %vm3512, 0, %v3598
    %v3601 = vcosq.f32.pop %v3599
    %v3602 = vsinq.f32.pop %v3599
    %vm3603 = vweird.f32 %v698
    %v3604 = vadd.s32 %v3600, 3
    %v3605 = vand.u32 %v3604, 3
    %vm3606 = vcmp.lt.s32.totalorder %v3605, 2
    %vm3607 = vcmp.eq.s32.totalorder %v3605, 0
    %v3608 = vxor.u32 %v3602, 2147483648
    %v3609 = vsel %vm3607, %v3601, %v3608
    %vm3610 = vcmp.eq.s32.totalorder %v3605, 2
    %v3611 = vxor.u32 %v3601, 2147483648
    %v3612 = vsel %vm3610, %v3611, %v3602
    %v3613 = vsel %vm3606, %v3609, %v3612
    %v3614 = vsel %vm3603, nan, %v3613
    %v3615 = vand.u32 2147483647, %v699
    %vm3616 = vcmp.le.f32.partialorder %v3615, 0.7853982
    %vm3617 = vcmp.lt.s32.totalorder %v699, 0
    %v3618 = vand.u32 %v699, 2139095040
    %v3619 = vshrl.u32 %v3618, 23
    %v3620 = vsub.s32 %v3619, 127
    %v3621 = vand.u32 2147483647, %v699
    %v3622 = vand.u32 %v3621, 8388607
    %v3623 = vor.u32 %v3622, 8388608
    %v3624 = vsub.s32 0, %v3623
    %v3625 = vadd.s32 %v3620, 1
    %vm3626 = vcmp.gt.s32.totalorder %v3625, 0
    %v3627 = vsel %vm3626, %v3625, 0
    %v3628 = vshrl.u32 %v3627, 5
    %v3629 = vand.u32 %v3627, 31
    %v3630 = vsub.s32 32, %v3629
    %v3631 = vshrl.u32 683565275, %v3630
    %v3632 = vshll.u32 683565275, %v3629
    %v3633 = vshrl.u32 2475754826, %v3630
    %v3634 = vor.u32 %v3632, %v3633
    %v3635 = vshll.u32 2475754826, %v3629
    %v3636 = vshrl.u32 2131351028, %v3630
    %v3637 = vor.u32 %v3635, %v3636
    %v3638 = vshll.u32 2131351028, %v3629
    %v3639 = vshrl.u32 2102212464, %v3630
    %v3640 = vor.u32 %v3638, %v3639
    %v3641 = vshll.u32 2102212464, %v3629
    %v3642 = vshrl.u32 920167782, %v3630
    %v3643 = vor.u32 %v3641, %v3642
    %v3644 = vshll.u32 920167782, %v3629
    %v3645 = vshrl.u32 1326507024, %v3630
    %v3646 = vor.u32 %v3644, %v3645
    %vm3647 = vcmp.lt.s32.totalorder %v3628, 1
    %vm3648 = vcmp.lt.s32.totalorder %v3628, 2
    %vm3649 = vcmp.lt.s32.totalorder %v3628, 3
    %vm3650 = vcmp.lt.s32.totalorder %v3628, 4
    %v3651 = vsel %vm3647, %v3631, %v3634
    %v3652 = vsel %vm3650, %v3640, 2102212464
    %v3653 = vsel %vm3649, %v3637, %v3652
    %v3654 = vsel %vm3648, %v3651, %v3653
    %v3655 = vsel %vm3647, %v3634, %v3637
    %v3656 = vsel %vm3650, %v3643, 920167782
    %v3657 = vsel %vm3649, %v3640, %v3656
    %v3658 = vsel %vm3648, %v3655, %v3657
    %v3659 = vsel %vm3647, %v3637, %v3640
    %v3660 = vsel %vm3650, %v3646, 1326507024
    %v3661 = vsel %vm3649, %v3643, %v3660
    %v3662 = vsel %vm3648, %v3659, %v3661
    %v3663 = vshll.u32 %v3623, 8
    %v3664 = vmul.u32.u64.compose %v3663, %v3662
    %v3665 = vextract.low.u32 %v3664
    %v3666 = vextract.high.u32 %v3664
    %v3667 = vmul.u32.u64.compose %v3663, %v3658
    %v3668 = vextract.low.u32 %v3667
    %v3669 = vextract.high.u32 %v3667
    %v3670 = vmul.u32 %v3663, %v3654
    %v3671 = vadd.s32 %v3666, %v3668
    %vm3672 = vc.u32 %v3666, %v3668
    %v3673 = vadd.s32 %v3669, 1
    %v3674 = vsel %vm3672, %v3673, %v3669
    %v3675 = vadd.s32 %v3670, %v3674
    %v3676 = vadd.s32 %v3675, 536870912
    %v3677 = vshrl.u32 %v3676, 30
    %v3678 = vshll.u32 %v3677, 30
    %v3679 = vsub.s32 %v3675, %v3678
    %vm3680 = vcmp.lt.s32.totalorder %v3679, 0
    %v3681 = vsub.s32 0, %v3679
    %v3682 = vsel %vm3680, %v3681, %v3679
    %v3683 = vclz %v3682
    %v3684 = vsub.s32 %v3683, 2
    %vm3685 = vcmp.gt.s32.totalorder 0, %v3684
    %v3686 = vsel %vm3685, 0, %v3684
    %v3687 = vsub.s32 32, %v3686
    %v3688 = vshll.u32 %v3679, %v3686
    %v3689 = vshrl.u32 %v3671, %v3687
    %v3690 = vor.u32 %v3688, %v3689
    %v3691 = vsub.s32 4294967266, %v3686
    %v3692 = vadd.s32 %v3691, 127
    %v3693 = vshll.u32 %v3692, 23
    %v3694 = vor.u32 4788187, %v3693
    %v3695 = vand.u32 2147483647, %v3694
    %v3697 = vcvt.s32.f32 %v3690
    %v3698 = vmul.f32 %v3697, %v3695
    %v3699 = vxor.u32 %v3698, 2147483648
    %v3700 = vsel %vm3617, %v3699, %v3698
    %v3701 = vsub.s32 4, %v3677
    %v3702 = vsel %vm3617, %v3701, %v3677
    %v3703 = vsel %vm3616, %v699, %v3700
    %v3704 = vsel %vm3616, 0, %v3702
    %v3705 = vcosq.f32.pop %v3703
    %v3706 = vsinq.f32.pop %v3703
    %vm3707 = vweird.f32 %v699
    %v3708 = vadd.s32 %v3704, 3
    %v3709 = vand.u32 %v3708, 3
    %vm3710 = vcmp.lt.s32.totalorder %v3709, 2
    %vm3711 = vcmp.eq.s32.totalorder %v3709, 0
    %v3712 = vxor.u32 %v3706, 2147483648
    %v3713 = vsel %vm3711, %v3705, %v3712
    %vm3714 = vcmp.eq.s32.totalorder %v3709, 2
    %v3715 = vxor.u32 %v3705, 2147483648
    %v3716 = vsel %vm3714, %v3715, %v3706
    %v3717 = vsel %vm3710, %v3713, %v3716
    %v3718 = vsel %vm3707, nan, %v3717
    %v3719 = vand.u32 2147483647, %v700
    %vm3720 = vcmp.le.f32.partialorder %v3719, 0.7853982
    %vm3721 = vcmp.lt.s32.totalorder %v700, 0
    %v3722 = vand.u32 %v700, 2139095040
    %v3723 = vshrl.u32 %v3722, 23
    %v3724 = vsub.s32 %v3723, 127
    %v3725 = vand.u32 2147483647, %v700
    %v3726 = vand.u32 %v3725, 8388607
    %v3727 = vor.u32 %v3726, 8388608
    %v3728 = vsub.s32 0, %v3727
    %v3729 = vadd.s32 %v3724, 1
    %vm3730 = vcmp.gt.s32.totalorder %v3729, 0
    %v3731 = vsel %vm3730, %v3729, 0
    %v3732 = vshrl.u32 %v3731, 5
    %v3733 = vand.u32 %v3731, 31
    %v3734 = vsub.s32 32, %v3733
    %v3735 = vshrl.u32 683565275, %v3734
    %v3736 = vshll.u32 683565275, %v3733
    %v3737 = vshrl.u32 2475754826, %v3734
    %v3738 = vor.u32 %v3736, %v3737
    %v3739 = vshll.u32 2475754826, %v3733
    %v3740 = vshrl.u32 2131351028, %v3734
    %v3741 = vor.u32 %v3739, %v3740
    %v3742 = vshll.u32 2131351028, %v3733
    %v3743 = vshrl.u32 2102212464, %v3734
    %v3744 = vor.u32 %v3742, %v3743
    %v3745 = vshll.u32 2102212464, %v3733
    %v3746 = vshrl.u32 920167782, %v3734
    %v3747 = vor.u32 %v3745, %v3746
    %v3748 = vshll.u32 920167782, %v3733
    %v3749 = vshrl.u32 1326507024, %v3734
    %v3750 = vor.u32 %v3748, %v3749
    %vm3751 = vcmp.lt.s32.totalorder %v3732, 1
    %vm3752 = vcmp.lt.s32.totalorder %v3732, 2
    %vm3753 = vcmp.lt.s32.totalorder %v3732, 3
    %vm3754 = vcmp.lt.s32.totalorder %v3732, 4
    %v3755 = vsel %vm3751, %v3735, %v3738
    %v3756 = vsel %vm3754, %v3744, 2102212464
    %v3757 = vsel %vm3753, %v3741, %v3756
    %v3758 = vsel %vm3752, %v3755, %v3757
    %v3759 = vsel %vm3751, %v3738, %v3741
    %v3760 = vsel %vm3754, %v3747, 920167782
    %v3761 = vsel %vm3753, %v3744, %v3760
    %v3762 = vsel %vm3752, %v3759, %v3761
    %v3763 = vsel %vm3751, %v3741, %v3744
    %v3764 = vsel %vm3754, %v3750, 1326507024
    %v3765 = vsel %vm3753, %v3747, %v3764
    %v3766 = vsel %vm3752, %v3763, %v3765
    %v3767 = vshll.u32 %v3727, 8
    %v3768 = vmul.u32.u64.compose %v3767, %v3766
    %v3769 = vextract.low.u32 %v3768
    %v3770 = vextract.high.u32 %v3768
    %v3771 = vmul.u32.u64.compose %v3767, %v3762
    %v3772 = vextract.low.u32 %v3771
    %v3773 = vextract.high.u32 %v3771
    %v3774 = vmul.u32 %v3767, %v3758
    %v3775 = vadd.s32 %v3770, %v3772
    %vm3776 = vc.u32 %v3770, %v3772
    %v3777 = vadd.s32 %v3773, 1
    %v3778 = vsel %vm3776, %v3777, %v3773
    %v3779 = vadd.s32 %v3774, %v3778
    %v3780 = vadd.s32 %v3779, 536870912
    %v3781 = vshrl.u32 %v3780, 30
    %v3782 = vshll.u32 %v3781, 30
    %v3783 = vsub.s32 %v3779, %v3782
    %vm3784 = vcmp.lt.s32.totalorder %v3783, 0
    %v3785 = vsub.s32 0, %v3783
    %v3786 = vsel %vm3784, %v3785, %v3783
    %v3787 = vclz %v3786
    %v3788 = vsub.s32 %v3787, 2
    %vm3789 = vcmp.gt.s32.totalorder 0, %v3788
    %v3790 = vsel %vm3789, 0, %v3788
    %v3791 = vsub.s32 32, %v3790
    %v3792 = vshll.u32 %v3783, %v3790
    %v3793 = vshrl.u32 %v3775, %v3791
    %v3794 = vor.u32 %v3792, %v3793
    %v3795 = vsub.s32 4294967266, %v3790
    %v3796 = vadd.s32 %v3795, 127
    %v3797 = vshll.u32 %v3796, 23
    %v3798 = vor.u32 4788187, %v3797
    %v3799 = vand.u32 2147483647, %v3798
    %v3801 = vcvt.s32.f32 %v3794
    %v3802 = vmul.f32 %v3801, %v3799
    %v3803 = vxor.u32 %v3802, 2147483648
    %v3804 = vsel %vm3721, %v3803, %v3802
    %v3805 = vsub.s32 4, %v3781
    %v3806 = vsel %vm3721, %v3805, %v3781
    %v3807 = vsel %vm3720, %v700, %v3804
    %v3808 = vsel %vm3720, 0, %v3806
    %v3809 = vcosq.f32.pop %v3807
    %v3810 = vsinq.f32.pop %v3807
    %vm3811 = vweird.f32 %v700
    %v3812 = vadd.s32 %v3808, 3
    %v3813 = vand.u32 %v3812, 3
    %vm3814 = vcmp.lt.s32.totalorder %v3813, 2
    %vm3815 = vcmp.eq.s32.totalorder %v3813, 0
    %v3816 = vxor.u32 %v3810, 2147483648
    %v3817 = vsel %vm3815, %v3809, %v3816
    %vm3818 = vcmp.eq.s32.totalorder %v3813, 2
    %v3819 = vxor.u32 %v3809, 2147483648
    %v3820 = vsel %vm3818, %v3819, %v3810
    %v3821 = vsel %vm3814, %v3817, %v3820
    %v3822 = vsel %vm3811, nan, %v3821
    %v3823 = vand.u32 2147483647, %v701
    %vm3824 = vcmp.le.f32.partialorder %v3823, 0.7853982
    %vm3825 = vcmp.lt.s32.totalorder %v701, 0
    %v3826 = vand.u32 %v701, 2139095040
    %v3827 = vshrl.u32 %v3826, 23
    %v3828 = vsub.s32 %v3827, 127
    %v3829 = vand.u32 2147483647, %v701
    %v3830 = vand.u32 %v3829, 8388607
    %v3831 = vor.u32 %v3830, 8388608
    %v3832 = vsub.s32 0, %v3831
    %v3833 = vadd.s32 %v3828, 1
    %vm3834 = vcmp.gt.s32.totalorder %v3833, 0
    %v3835 = vsel %vm3834, %v3833, 0
    %v3836 = vshrl.u32 %v3835, 5
    %v3837 = vand.u32 %v3835, 31
    %v3838 = vsub.s32 32, %v3837
    %v3839 = vshrl.u32 683565275, %v3838
    %v3840 = vshll.u32 683565275, %v3837
    %v3841 = vshrl.u32 2475754826, %v3838
    %v3842 = vor.u32 %v3840, %v3841
    %v3843 = vshll.u32 2475754826, %v3837
    %v3844 = vshrl.u32 2131351028, %v3838
    %v3845 = vor.u32 %v3843, %v3844
    %v3846 = vshll.u32 2131351028, %v3837
    %v3847 = vshrl.u32 2102212464, %v3838
    %v3848 = vor.u32 %v3846, %v3847
    %v3849 = vshll.u32 2102212464, %v3837
    %v3850 = vshrl.u32 920167782, %v3838
    %v3851 = vor.u32 %v3849, %v3850
    %v3852 = vshll.u32 920167782, %v3837
    %v3853 = vshrl.u32 1326507024, %v3838
    %v3854 = vor.u32 %v3852, %v3853
    %vm3855 = vcmp.lt.s32.totalorder %v3836, 1
    %vm3856 = vcmp.lt.s32.totalorder %v3836, 2
    %vm3857 = vcmp.lt.s32.totalorder %v3836, 3
    %vm3858 = vcmp.lt.s32.totalorder %v3836, 4
    %v3859 = vsel %vm3855, %v3839, %v3842
    %v3860 = vsel %vm3858, %v3848, 2102212464
    %v3861 = vsel %vm3857, %v3845, %v3860
    %v3862 = vsel %vm3856, %v3859, %v3861
    %v3863 = vsel %vm3855, %v3842, %v3845
    %v3864 = vsel %vm3858, %v3851, 920167782
    %v3865 = vsel %vm3857, %v3848, %v3864
    %v3866 = vsel %vm3856, %v3863, %v3865
    %v3867 = vsel %vm3855, %v3845, %v3848
    %v3868 = vsel %vm3858, %v3854, 1326507024
    %v3869 = vsel %vm3857, %v3851, %v3868
    %v3870 = vsel %vm3856, %v3867, %v3869
    %v3871 = vshll.u32 %v3831, 8
    %v3872 = vmul.u32.u64.compose %v3871, %v3870
    %v3873 = vextract.low.u32 %v3872
    %v3874 = vextract.high.u32 %v3872
    %v3875 = vmul.u32.u64.compose %v3871, %v3866
    %v3876 = vextract.low.u32 %v3875
    %v3877 = vextract.high.u32 %v3875
    %v3878 = vmul.u32 %v3871, %v3862
    %v3879 = vadd.s32 %v3874, %v3876
    %vm3880 = vc.u32 %v3874, %v3876
    %v3881 = vadd.s32 %v3877, 1
    %v3882 = vsel %vm3880, %v3881, %v3877
    %v3883 = vadd.s32 %v3878, %v3882
    %v3884 = vadd.s32 %v3883, 536870912
    %v3885 = vshrl.u32 %v3884, 30
    %v3886 = vshll.u32 %v3885, 30
    %v3887 = vsub.s32 %v3883, %v3886
    %vm3888 = vcmp.lt.s32.totalorder %v3887, 0
    %v3889 = vsub.s32 0, %v3887
    %v3890 = vsel %vm3888, %v3889, %v3887
    %v3891 = vclz %v3890
    %v3892 = vsub.s32 %v3891, 2
    %vm3893 = vcmp.gt.s32.totalorder 0, %v3892
    %v3894 = vsel %vm3893, 0, %v3892
    %v3895 = vsub.s32 32, %v3894
    %v3896 = vshll.u32 %v3887, %v3894
    %v3897 = vshrl.u32 %v3879, %v3895
    %v3898 = vor.u32 %v3896, %v3897
    %v3899 = vsub.s32 4294967266, %v3894
    %v3900 = vadd.s32 %v3899, 127
    %v3901 = vshll.u32 %v3900, 23
    %v3902 = vor.u32 4788187, %v3901
    %v3903 = vand.u32 2147483647, %v3902
    %v3905 = vcvt.s32.f32 %v3898
    %v3906 = vmul.f32 %v3905, %v3903
    %v3907 = vxor.u32 %v3906, 2147483648
    %v3908 = vsel %vm3825, %v3907, %v3906
    %v3909 = vsub.s32 4, %v3885
    %v3910 = vsel %vm3825, %v3909, %v3885
    %v3911 = vsel %vm3824, %v701, %v3908
    %v3912 = vsel %vm3824, 0, %v3910
    %v3913 = vcosq.f32.pop %v3911
    %v3914 = vsinq.f32.pop %v3911
    %vm3915 = vweird.f32 %v701
    %v3916 = vadd.s32 %v3912, 3
    %v3917 = vand.u32 %v3916, 3
    %vm3918 = vcmp.lt.s32.totalorder %v3917, 2
    %vm3919 = vcmp.eq.s32.totalorder %v3917, 0
    %v3920 = vxor.u32 %v3914, 2147483648
    %v3921 = vsel %vm3919, %v3913, %v3920
    %vm3922 = vcmp.eq.s32.totalorder %v3917, 2
    %v3923 = vxor.u32 %v3913, 2147483648
    %v3924 = vsel %vm3922, %v3923, %v3914
    %v3925 = vsel %vm3918, %v3921, %v3924
    %v3926 = vsel %vm3915, nan, %v3925
    %v3927 = vand.u32 2147483647, %v702
    %vm3928 = vcmp.le.f32.partialorder %v3927, 0.7853982
    %vm3929 = vcmp.lt.s32.totalorder %v702, 0
    %v3930 = vand.u32 %v702, 2139095040
    %v3931 = vshrl.u32 %v3930, 23
    %v3932 = vsub.s32 %v3931, 127
    %v3933 = vand.u32 2147483647, %v702
    %v3934 = vand.u32 %v3933, 8388607
    %v3935 = vor.u32 %v3934, 8388608
    %v3936 = vsub.s32 0, %v3935
    %v3937 = vadd.s32 %v3932, 1
    %vm3938 = vcmp.gt.s32.totalorder %v3937, 0
    %v3939 = vsel %vm3938, %v3937, 0
    %v3940 = vshrl.u32 %v3939, 5
    %v3941 = vand.u32 %v3939, 31
    %v3942 = vsub.s32 32, %v3941
    %v3943 = vshrl.u32 683565275, %v3942
    %v3944 = vshll.u32 683565275, %v3941
    %v3945 = vshrl.u32 2475754826, %v3942
    %v3946 = vor.u32 %v3944, %v3945
    %v3947 = vshll.u32 2475754826, %v3941
    %v3948 = vshrl.u32 2131351028, %v3942
    %v3949 = vor.u32 %v3947, %v3948
    %v3950 = vshll.u32 2131351028, %v3941
    %v3951 = vshrl.u32 2102212464, %v3942
    %v3952 = vor.u32 %v3950, %v3951
    %v3953 = vshll.u32 2102212464, %v3941
    %v3954 = vshrl.u32 920167782, %v3942
    %v3955 = vor.u32 %v3953, %v3954
    %v3956 = vshll.u32 920167782, %v3941
    %v3957 = vshrl.u32 1326507024, %v3942
    %v3958 = vor.u32 %v3956, %v3957
    %vm3959 = vcmp.lt.s32.totalorder %v3940, 1
    %vm3960 = vcmp.lt.s32.totalorder %v3940, 2
    %vm3961 = vcmp.lt.s32.totalorder %v3940, 3
    %vm3962 = vcmp.lt.s32.totalorder %v3940, 4
    %v3963 = vsel %vm3959, %v3943, %v3946
    %v3964 = vsel %vm3962, %v3952, 2102212464
    %v3965 = vsel %vm3961, %v3949, %v3964
    %v3966 = vsel %vm3960, %v3963, %v3965
    %v3967 = vsel %vm3959, %v3946, %v3949
    %v3968 = vsel %vm3962, %v3955, 920167782
    %v3969 = vsel %vm3961, %v3952, %v3968
    %v3970 = vsel %vm3960, %v3967, %v3969
    %v3971 = vsel %vm3959, %v3949, %v3952
    %v3972 = vsel %vm3962, %v3958, 1326507024
    %v3973 = vsel %vm3961, %v3955, %v3972
    %v3974 = vsel %vm3960, %v3971, %v3973
    %v3975 = vshll.u32 %v3935, 8
    %v3976 = vmul.u32.u64.compose %v3975, %v3974
    %v3977 = vextract.low.u32 %v3976
    %v3978 = vextract.high.u32 %v3976
    %v3979 = vmul.u32.u64.compose %v3975, %v3970
    %v3980 = vextract.low.u32 %v3979
    %v3981 = vextract.high.u32 %v3979
    %v3982 = vmul.u32 %v3975, %v3966
    %v3983 = vadd.s32 %v3978, %v3980
    %vm3984 = vc.u32 %v3978, %v3980
    %v3985 = vadd.s32 %v3981, 1
    %v3986 = vsel %vm3984, %v3985, %v3981
    %v3987 = vadd.s32 %v3982, %v3986
    %v3988 = vadd.s32 %v3987, 536870912
    %v3989 = vshrl.u32 %v3988, 30
    %v3990 = vshll.u32 %v3989, 30
    %v3991 = vsub.s32 %v3987, %v3990
    %vm3992 = vcmp.lt.s32.totalorder %v3991, 0
    %v3993 = vsub.s32 0, %v3991
    %v3994 = vsel %vm3992, %v3993, %v3991
    %v3995 = vclz %v3994
    %v3996 = vsub.s32 %v3995, 2
    %vm3997 = vcmp.gt.s32.totalorder 0, %v3996
    %v3998 = vsel %vm3997, 0, %v3996
    %v3999 = vsub.s32 32, %v3998
    %v4000 = vshll.u32 %v3991, %v3998
    %v4001 = vshrl.u32 %v3983, %v3999
    %v4002 = vor.u32 %v4000, %v4001
    %v4003 = vsub.s32 4294967266, %v3998
    %v4004 = vadd.s32 %v4003, 127
    %v4005 = vshll.u32 %v4004, 23
    %v4006 = vor.u32 4788187, %v4005
    %v4007 = vand.u32 2147483647, %v4006
    %v4009 = vcvt.s32.f32 %v4002
    %v4010 = vmul.f32 %v4009, %v4007
    %v4011 = vxor.u32 %v4010, 2147483648
    %v4012 = vsel %vm3929, %v4011, %v4010
    %v4013 = vsub.s32 4, %v3989
    %v4014 = vsel %vm3929, %v4013, %v3989
    %v4015 = vsel %vm3928, %v702, %v4012
    %v4016 = vsel %vm3928, 0, %v4014
    %v4017 = vcosq.f32.pop %v4015
    %v4018 = vsinq.f32.pop %v4015
    %vm4019 = vweird.f32 %v702
    %v4020 = vadd.s32 %v4016, 3
    %v4021 = vand.u32 %v4020, 3
    %vm4022 = vcmp.lt.s32.totalorder %v4021, 2
    %vm4023 = vcmp.eq.s32.totalorder %v4021, 0
    %v4024 = vxor.u32 %v4018, 2147483648
    %v4025 = vsel %vm4023, %v4017, %v4024
    %vm4026 = vcmp.eq.s32.totalorder %v4021, 2
    %v4027 = vxor.u32 %v4017, 2147483648
    %v4028 = vsel %vm4026, %v4027, %v4018
    %v4029 = vsel %vm4022, %v4025, %v4028
    %v4030 = vsel %vm4019, nan, %v4029
    %v4031 = vmul.f32 %v581, %v2470
    %v4032 = vmul.f32 %v588, %v2574
    %v4033 = vmul.f32 %v595, %v2678
    %v4034 = vmul.f32 %v602, %v2782
    %v4035 = vmul.f32 %v609, %v2886
    %v4036 = vmul.f32 %v616, %v2990
    %v4037 = vmul.f32 %v623, %v3094
    %v4038 = vmul.f32 %v630, %v3198
    %v4039 = vmul.f32 %v637, %v3302
    %v4040 = vmul.f32 %v644, %v3406
    %v4041 = vmul.f32 %v651, %v3510
    %v4042 = vmul.f32 %v658, %v3614
    %v4043 = vmul.f32 %v665, %v3718
    %v4044 = vmul.f32 %v672, %v3822
    %v4045 = vmul.f32 %v679, %v3926
    %v4046 = vmul.f32 %v686, %v4030
    %v4047 = vld [vmem:[#allocation4] sm:$0xff]
    %v4048 = vld [vmem:[#allocation4 + $0x8] sm:$0xff]
    %v4049 = vld [vmem:[#allocation4 + $0x10] sm:$0xff]
    %v4050 = vld [vmem:[#allocation4 + $0x18] sm:$0xff]
    %v4051 = vld [vmem:[#allocation4 + $0x20] sm:$0xff]
    %v4052 = vld [vmem:[#allocation4 + $0x28] sm:$0xff]
    %v4053 = vld [vmem:[#allocation4 + $0x30] sm:$0xff]
    %v4054 = vld [vmem:[#allocation4 + $0x38] sm:$0xff]
    %v4055 = vld [vmem:[#allocation4 + $0x40] sm:$0xff]
    %v4056 = vld [vmem:[#allocation4 + $0x48] sm:$0xff]
    %v4057 = vld [vmem:[#allocation4 + $0x50] sm:$0xff]
    %v4058 = vld [vmem:[#allocation4 + $0x58] sm:$0xff]
    %v4059 = vld [vmem:[#allocation4 + $0x60] sm:$0xff]
    %v4060 = vld [vmem:[#allocation4 + $0x68] sm:$0xff]
    %v4061 = vld [vmem:[#allocation4 + $0x70] sm:$0xff]
    %v4062 = vld [vmem:[#allocation4 + $0x78] sm:$0xff]
    %v4063 = vld [vmem:[#allocation4 + $0x80] sm:$0xff]
    %v4064 = vld [vmem:[#allocation4 + $0x88] sm:$0xff]
    %v4065 = vld [vmem:[#allocation4 + $0x90] sm:$0xff]
    %v4066 = vld [vmem:[#allocation4 + $0x98] sm:$0xff]
    %v4067 = vld [vmem:[#allocation4 + $0xa0] sm:$0xff]
    %v4068 = vld [vmem:[#allocation4 + $0xa8] sm:$0xff]
    %v4069 = vld [vmem:[#allocation4 + $0xb0] sm:$0xff]
    %v4070 = vld [vmem:[#allocation4 + $0xb8] sm:$0xff]
    %v4071 = vld [vmem:[#allocation4 + $0xc0] sm:$0xff]
    %v4072 = vld [vmem:[#allocation4 + $0xc8] sm:$0xff]
    %v4073 = vld [vmem:[#allocation4 + $0xd0] sm:$0xff]
    %v4074 = vld [vmem:[#allocation4 + $0xd8] sm:$0xff]
    %v4075 = vld [vmem:[#allocation4 + $0xe0] sm:$0xff]
    %v4076 = vld [vmem:[#allocation4 + $0xe8] sm:$0xff]
    %v4077 = vld [vmem:[#allocation4 + $0xf0] sm:$0xff]
    %v4078 = vld [vmem:[#allocation4 + $0xf8] sm:$0xff]
    %v4079 = vadd.f32 %v4047, 0.0
    %v4080 = vadd.f32 %v4048, 0.0
    %v4081 = vadd.f32 %v4049, 0.0
    %v4082 = vadd.f32 %v4050, 0.0
    %v4083 = vadd.f32 %v4055, 0.0
    %v4084 = vadd.f32 %v4056, 0.0
    %v4085 = vadd.f32 %v4057, 0.0
    %v4086 = vadd.f32 %v4058, 0.0
    %v4087 = vadd.f32 %v4063, 0.0
    %v4088 = vadd.f32 %v4064, 0.0
    %v4089 = vadd.f32 %v4065, 0.0
    %v4090 = vadd.f32 %v4066, 0.0
    %v4091 = vadd.f32 %v4071, 0.0
    %v4092 = vadd.f32 %v4072, 0.0
    %v4093 = vadd.f32 %v4073, 0.0
    %v4094 = vadd.f32 %v4074, 0.0
    %v4095 = vmul.f32 %v2351, 0.1
    %v4096 = vmul.f32 %v2352, 0.1
    %v4097 = vmul.f32 %v2353, 0.1
    %v4098 = vmul.f32 %v2354, 0.1
    %v4099 = vmul.f32 %v2355, 0.1
    %v4100 = vmul.f32 %v2356, 0.1
    %v4101 = vmul.f32 %v2357, 0.1
    %v4102 = vmul.f32 %v2358, 0.1
    %v4103 = vmul.f32 %v2359, 0.1
    %v4104 = vmul.f32 %v2360, 0.1
    %v4105 = vmul.f32 %v2361, 0.1
    %v4106 = vmul.f32 %v2362, 0.1
    %v4107 = vmul.f32 %v2363, 0.1
    %v4108 = vmul.f32 %v2364, 0.1
    %v4109 = vmul.f32 %v2365, 0.1
    %v4110 = vmul.f32 %v2366, 0.1
    %v4111 = vadd.f32 %v4079, %v4095
    %v4112 = vadd.f32 %v4080, %v4096
    %v4113 = vadd.f32 %v4081, %v4097
    %v4114 = vadd.f32 %v4082, %v4098
    %v4115 = vadd.f32 %v4083, %v4099
    %v4116 = vadd.f32 %v4084, %v4100
    %v4117 = vadd.f32 %v4085, %v4101
    %v4118 = vadd.f32 %v4086, %v4102
    %v4119 = vadd.f32 %v4087, %v4103
    %v4120 = vadd.f32 %v4088, %v4104
    %v4121 = vadd.f32 %v4089, %v4105
    %v4122 = vadd.f32 %v4090, %v4106
    %v4123 = vadd.f32 %v4091, %v4107
    %v4124 = vadd.f32 %v4092, %v4108
    %v4125 = vadd.f32 %v4093, %v4109
    %v4126 = vadd.f32 %v4094, %v4110
    %4127 = vst [vmem:[#allocation7] sm:$0xff] %v4111
    %4128 = vst [vmem:[#allocation7 + $0x8] sm:$0xff] %v4112
    %4129 = vst [vmem:[#allocation7 + $0x10] sm:$0xff] %v4113
    %4130 = vst [vmem:[#allocation7 + $0x18] sm:$0xff] %v4114
    %4131 = vst [vmem:[#allocation7 + $0x40] sm:$0xff] %v4115
    %4132 = vst [vmem:[#allocation7 + $0x48] sm:$0xff] %v4116
    %4133 = vst [vmem:[#allocation7 + $0x50] sm:$0xff] %v4117
    %4134 = vst [vmem:[#allocation7 + $0x58] sm:$0xff] %v4118
    %4135 = vst [vmem:[#allocation7 + $0x80] sm:$0xff] %v4119
    %4136 = vst [vmem:[#allocation7 + $0x88] sm:$0xff] %v4120
    %4137 = vst [vmem:[#allocation7 + $0x90] sm:$0xff] %v4121
    %4138 = vst [vmem:[#allocation7 + $0x98] sm:$0xff] %v4122
    %4139 = vst [vmem:[#allocation7 + $0xc0] sm:$0xff] %v4123
    %4140 = vst [vmem:[#allocation7 + $0xc8] sm:$0xff] %v4124
    %4141 = vst [vmem:[#allocation7 + $0xd0] sm:$0xff] %v4125
    %4142 = vst [vmem:[#allocation7 + $0xd8] sm:$0xff] %v4126
    %v4143 = vadd.f32 %v4051, 0.0
    %v4144 = vadd.f32 %v4052, 0.0
    %v4145 = vadd.f32 %v4053, 0.0
    %v4146 = vadd.f32 %v4054, 0.0
    %v4147 = vadd.f32 %v4059, 0.0
    %v4148 = vadd.f32 %v4060, 0.0
    %v4149 = vadd.f32 %v4061, 0.0
    %v4150 = vadd.f32 %v4062, 0.0
    %v4151 = vadd.f32 %v4067, 0.0
    %v4152 = vadd.f32 %v4068, 0.0
    %v4153 = vadd.f32 %v4069, 0.0
    %v4154 = vadd.f32 %v4070, 0.0
    %v4155 = vadd.f32 %v4075, 0.0
    %v4156 = vadd.f32 %v4076, 0.0
    %v4157 = vadd.f32 %v4077, 0.0
    %v4158 = vadd.f32 %v4078, 0.0
    %v4159 = vmul.f32 %v4031, 0.1
    %v4160 = vmul.f32 %v4032, 0.1
    %v4161 = vmul.f32 %v4033, 0.1
    %v4162 = vmul.f32 %v4034, 0.1
    %v4163 = vmul.f32 %v4035, 0.1
    %v4164 = vmul.f32 %v4036, 0.1
    %v4165 = vmul.f32 %v4037, 0.1
    %v4166 = vmul.f32 %v4038, 0.1
    %v4167 = vmul.f32 %v4039, 0.1
    %v4168 = vmul.f32 %v4040, 0.1
    %v4169 = vmul.f32 %v4041, 0.1
    %v4170 = vmul.f32 %v4042, 0.1
    %v4171 = vmul.f32 %v4043, 0.1
    %v4172 = vmul.f32 %v4044, 0.1
    %v4173 = vmul.f32 %v4045, 0.1
    %v4174 = vmul.f32 %v4046, 0.1
    %v4175 = vadd.f32 %v4143, %v4159
    %v4176 = vadd.f32 %v4144, %v4160
    %v4177 = vadd.f32 %v4145, %v4161
    %v4178 = vadd.f32 %v4146, %v4162
    %v4179 = vadd.f32 %v4147, %v4163
    %v4180 = vadd.f32 %v4148, %v4164
    %v4181 = vadd.f32 %v4149, %v4165
    %v4182 = vadd.f32 %v4150, %v4166
    %v4183 = vadd.f32 %v4151, %v4167
    %v4184 = vadd.f32 %v4152, %v4168
    %v4185 = vadd.f32 %v4153, %v4169
    %v4186 = vadd.f32 %v4154, %v4170
    %v4187 = vadd.f32 %v4155, %v4171
    %v4188 = vadd.f32 %v4156, %v4172
    %v4189 = vadd.f32 %v4157, %v4173
    %v4190 = vadd.f32 %v4158, %v4174
    %4191 = vst [vmem:[#allocation7 + $0x20] sm:$0xff] %v4175
    %4192 = vst [vmem:[#allocation7 + $0x28] sm:$0xff] %v4176
    %4193 = vst [vmem:[#allocation7 + $0x30] sm:$0xff] %v4177
    %4194 = vst [vmem:[#allocation7 + $0x38] sm:$0xff] %v4178
    %4195 = vst [vmem:[#allocation7 + $0x60] sm:$0xff] %v4179
    %4196 = vst [vmem:[#allocation7 + $0x68] sm:$0xff] %v4180
    %4197 = vst [vmem:[#allocation7 + $0x70] sm:$0xff] %v4181
    %4198 = vst [vmem:[#allocation7 + $0x78] sm:$0xff] %v4182
    %4199 = vst [vmem:[#allocation7 + $0xa0] sm:$0xff] %v4183
    %4200 = vst [vmem:[#allocation7 + $0xa8] sm:$0xff] %v4184
    %4201 = vst [vmem:[#allocation7 + $0xb0] sm:$0xff] %v4185
    %4202 = vst [vmem:[#allocation7 + $0xb8] sm:$0xff] %v4186
    %4203 = vst [vmem:[#allocation7 + $0xe0] sm:$0xff] %v4187
    %4204 = vst [vmem:[#allocation7 + $0xe8] sm:$0xff] %v4188
    %4205 = vst [vmem:[#allocation7 + $0xf0] sm:$0xff] %v4189
    %4206 = vst [vmem:[#allocation7 + $0xf8] sm:$0xff] %v4190
    // Predicated region
    $region10: #{tpu_custom_call.1} parent=1 // pred_check
      _
    $region11: #{tpu_custom_call.1} parent=1 // pred_check_branch
      %4208 = sbr.rel (0) target = $region13
    $region12: #{tpu_custom_call.1} parent=1 // pred_region
      %s4210 = ssub.s32 4096, 4096
      %4211 = vsyncadd [#allocation6], %s4210
      %s4212 = sshll.u32 [#allocation7], 4
      %s4213 = int_to_ptr.vmem [resolvable:$true] %s4212
      %4218 = dma.vmem_to_hbm [thread:$0]  %s4213, 4096, %s2, [#allocation6], 1024, 1024, 64
    $region13: #{tpu_custom_call.1} parent=1 // pred_fallthru
      _
    // Predicated region
    $region14: #{tpu_custom_call.1} parent=1 // pred_check
      _
    $region15: #{tpu_custom_call.1} parent=1 // pred_check_branch
      %4220 = sbr.rel (0) target = $region17
    $region16: #{tpu_custom_call.1} parent=1 // pred_region
      %4221 = dma.done [#allocation6], 4096
    $region17: #{tpu_custom_call.1} parent=1 // pred_fallthru
      _
    %4222 = vsyncpa [#allocation5], 1
    %4223 = vsyncpa [#allocation6], 1

</llo_original>
